<compile_context>
chip_gen: v6e
topology: v6e:2x2x1
jax: 0.10.0
libtpu: 0.0.40
codegen_flags: <defaults>
</compile_context>

<pallas_src>
import functools

import numpy as np

import jax
import jax.numpy as jnp
from jax.experimental import pallas as pl
from jax.experimental.pallas import tpu as pltpu

RESOLUTION = 16
CHANNELS = [8, 16, 16]
CONV_NECK_LEN = RESOLUTION // 2 ** len(CHANNELS)              # 2
IMAGE_CHANNELS = 1
LATENT_DIM = 2
CONV_NECK_DIM = CHANNELS[-1] * CONV_NECK_LEN * CONV_NECK_LEN  # 64

LRELU_SLOPE = 0.01   # nn.LeakyReLU default
BN_EPS = 1e-5        # nn.BatchNorm2d default
LANES = 128          # slab lane width (all packed matrices are <= 128 wide at N<=8)


# --------------------------------------------------------------------------
# Constant-slab packer: many small 2-D constants -> one (rows, 128) slab,
# addressed inside the kernel by static (row_offset, rows, cols) handles.
# --------------------------------------------------------------------------
class _Slab:
    def __init__(self, align):
        self._align = align
        self._rows = 0
        self._pieces = []

    def add(self, arr):
        arr = np.asarray(arr, np.float32)
        assert arr.ndim == 2 and arr.shape[1] <= LANES, arr.shape
        off = self._rows
        self._pieces.append((off, arr))
        self._rows += ((arr.shape[0] + self._align - 1) // self._align) * self._align
        return (off, int(arr.shape[0]), int(arr.shape[1]))

    def build(self, dtype):
        rows = max(self._align,
                   ((self._rows + self._align - 1) // self._align) * self._align)
        slab = np.zeros((rows, LANES), np.float32)
        for off, arr in self._pieces:
            slab[off:off + arr.shape[0], :arr.shape[1]] = arr
        return jnp.asarray(slab, dtype=dtype)


# --------------------------------------------------------------------------
# One-time parameter packing (numpy, outside the hot path).
# Layout convention everywhere:  X[n*H + h, w*C + c] == act[n, c, h, w].
# Every layer becomes  Y = sum_k (S_k @ X) @ A_k + bias_row  with the three
# S_k pre-stacked vertically (one matmul) and A_k kept per tap.
# --------------------------------------------------------------------------
def _pack_conv(w, b, n, hin, win, stride, pad):
    """nn.Conv2d(k=3). w: (Cout, Cin, 3, 3)."""
    cout, cin = w.shape[0], w.shape[1]
    ho = (hin + 2 * pad - 3) // stride + 1
    wo = (win + 2 * pad - 3) // stride + 1
    S = np.zeros((3, n * ho, n * hin), np.float32)
    A = np.zeros((3, win * cin, wo * cout), np.float32)
    for kh in range(3):
        for nb in range(n):
            for oh in range(ho):
                ih = stride * oh + kh - pad
                if 0 <= ih < hin:                       # out-of-range == zero pad
                    S[kh, nb * ho + oh, nb * hin + ih] = 1.0
        for iw in range(win):
            for ow in range(wo):
                kw = iw - stride * ow + pad
                if 0 <= kw < 3:
                    A[kh, iw * cin:(iw + 1) * cin,
                      ow * cout:(ow + 1) * cout] = w[:, :, kh, kw].T
    brow = np.tile(b, wo)[None, :].astype(np.float32)
    return S, A, brow, ho, wo


def _pack_convt(w, b, n, hin, win):
    """nn.ConvTranspose2d(k=3, s=2, p=1, output_padding=1). w: (Cin, Cout, 3, 3).
    Uses the direct scatter relation oh = 2*ih + kh - 1 / ow = 2*iw + kw - 1."""
    cin, cout = w.shape[0], w.shape[1]
    ho, wo = 2 * hin, 2 * win
    S = np.zeros((3, n * ho, n * hin), np.float32)
    A = np.zeros((3, win * cin, wo * cout), np.float32)
    for kh in range(3):
        for nb in range(n):
            for ih in range(hin):
                oh = 2 * ih + kh - 1
                if 0 <= oh < ho:
                    S[kh, nb * ho + oh, nb * hin + ih] = 1.0
        for iw in range(win):
            for ow in range(wo):
                kw = ow - 2 * iw + 1
                if 0 <= kw < 3:
                    A[kh, iw * cin:(iw + 1) * cin,
                      ow * cout:(ow + 1) * cout] = w[:, :, kh, kw]
    brow = np.tile(b, wo)[None, :].astype(np.float32)
    return S, A, brow, ho, wo


def _bn_consts(gamma, beta, c, wo):
    """Folded BatchNorm constants: channel reducer Et, gamma expander Eg,
    pre-expanded beta row (all in the (N*H, W*C) layout)."""
    E = np.tile(np.eye(c, dtype=np.float32), (1, wo))         # E[c, w*C+c] = 1
    Et = np.ascontiguousarray(E.T)                            # (Wo*C, C)
    Eg = (E * gamma[:, None]).astype(np.float32)              # diag(gamma) @ E
    beta_row = np.tile(beta, wo)[None, :].astype(np.float32)
    return Et, Eg, beta_row


def _pack_fc_latent(wmu, bmu, wvar, bvar, n, h, w, c):
    """fcMu|fcVar merged, consuming the encoder output directly in layout
    form (torch flatten(1) order j = c*H*W + h*W + w folded into M)."""
    k = wmu.shape[0]
    S = np.zeros((h, n, n * h), np.float32)
    M = np.zeros((h, w * c, 2 * k), np.float32)
    for hh in range(h):
        for nb in range(n):
            S[hh, nb, nb * h + hh] = 1.0
        for ww in range(w):
            for cc in range(c):
                j = cc * h * w + hh * w + ww
                M[hh, ww * c + cc, :k] = wmu[:, j]
                M[hh, ww * c + cc, k:] = wvar[:, j]
    bias = np.concatenate([bmu, bvar])[None, :].astype(np.float32)
    return S, M, bias


def _pack_fc_dec(wd, bd, n, h, w, c):
    """fcBeforeDecode + .view(-1, C, H, W) folded straight into the decoder's
    activation layout."""
    k = wd.shape[1]
    U = np.zeros((h, n * h, n), np.float32)
    D = np.zeros((h, k, w * c), np.float32)
    B = np.zeros((n * h, w * c), np.float32)
    for hh in range(h):
        for nb in range(n):
            U[hh, nb * h + hh, nb] = 1.0
        for ww in range(w):
            for cc in range(c):
                j = cc * h * w + hh * w + ww
                D[hh, :, ww * c + cc] = wd[j, :]
                B[hh::h, ww * c + cc] = bd[j]
    return U, D, B


def _add_layer(wsl, fsl, S, A, bias, bn=None, pad_out=None):
    """Place one layer's constants into the slabs; return its static handles."""
    def padc(x):
        x = np.asarray(x, np.float32)
        if pad_out is None or x.shape[1] >= pad_out:
            return x
        out = np.zeros((x.shape[0], pad_out), np.float32)
        out[:, :x.shape[1]] = x
        return out

    K, R, Cs = S.shape
    lay = {
        's': wsl.add(S.reshape(K * R, Cs)),             # vstack_k(S_k)
        'rout': int(R),
        'a': tuple(wsl.add(padc(A[k])) for k in range(K)),
        'bias': fsl.add(padc(bias)),
    }
    if bn is not None:
        Et, Eg, beta_row = bn
        lay['bn'] = (wsl.add(Et), wsl.add(Eg), fsl.add(beta_row))
    return lay


def init_and_pack(key, n_batch):
    """Draw synthetic weights and pack everything into two constant slabs
    (bf16 matmul slab, f32 bias slab) plus a static layout description."""
    def nrm(k, shape, scale=0.1):
        return np.asarray(scale * jax.random.normal(k, shape, jnp.float32))

    keys = iter(jax.random.split(key, 64))
    wsl = _Slab(align=16)    # bf16 slab (16-row alignment = one packed sublane tile)
    fsl = _Slab(align=8)     # f32 slab
    layout = {'enc': [], 'dec': []}

    # ---- encoder: 3 x (Conv2d s=2 p=1 + BN + LeakyReLU) ----
    h = w = RESOLUTION
    last_c = IMAGE_CHANNELS
    for c in CHANNELS:
        wgt = nrm(next(keys), (c, last_c, 3, 3))
        b = nrm(next(keys), (c,))
        gamma = np.ones((c,), np.float32)
        beta = np.zeros((c,), np.float32)
        S, A, brow, h, w = _pack_conv(wgt, b, n_batch, h, w, stride=2, pad=1)
        layout['enc'].append(
            _add_layer(wsl, fsl, S, A, brow, bn=_bn_consts(gamma, beta, c, w)))
        last_c = c

    # ---- latent heads (fcMu | fcVar merged, padded to 128 lanes) ----
    wmu = nrm(next(keys), (LATENT_DIM, CONV_NECK_DIM))
    bmu = nrm(next(keys), (LATENT_DIM,))
    wvar = nrm(next(keys), (LATENT_DIM, CONV_NECK_DIM))
    bvar = nrm(next(keys), (LATENT_DIM,))
    Sl, Ml, bl = _pack_fc_latent(wmu, bmu, wvar, bvar, n_batch,
                                 CONV_NECK_LEN, CONV_NECK_LEN, CHANNELS[-1])
    layout['fc_lat'] = _add_layer(wsl, fsl, Sl, Ml, bl, pad_out=LANES)

    # ---- fcBeforeDecode (+ NCHW view folded into the packing) ----
    wd = nrm(next(keys), (CONV_NECK_DIM, LATENT_DIM))
    bd = nrm(next(keys), (CONV_NECK_DIM,))
    Ud, Dd, Bd = _pack_fc_dec(wd, bd, n_batch,
                              CONV_NECK_LEN, CONV_NECK_LEN, CHANNELS[-1])
    layout['fc_dec'] = _add_layer(wsl, fsl, Ud, Dd, Bd)

    # ---- decoder: 3 x (ConvT s=2 p=1 op=1 + BN + LeakyReLU) ----
    h = w = CONV_NECK_LEN
    last_c = CHANNELS[-1]
    for c in list(CHANNELS[-2::-1]) + [CHANNELS[0]]:     # [16, 8, 8]
        wgt = nrm(next(keys), (last_c, c, 3, 3))         # ConvT weight: (in, out, kH, kW)
        b = nrm(next(keys), (c,))
        gamma = np.ones((c,), np.float32)
        beta = np.zeros((c,), np.float32)
        S, A, brow, h, w = _pack_convt(wgt, b, n_batch, h, w)
        layout['dec'].append(
            _add_layer(wsl, fsl, S, A, brow, bn=_bn_consts(gamma, beta, c, w)))
        last_c = c

    # ---- final Conv2d(8 -> 1, k=3, p=1) + Tanh, output padded to 128 lanes ----
    wgt = nrm(next(keys), (IMAGE_CHANNELS, CHANNELS[0], 3, 3))
    b = nrm(next(keys), (IMAGE_CHANNELS,))
    S, A, brow, h, w = _pack_conv(wgt, b, n_batch, h, w, stride=1, pad=1)
    layout['final'] = _add_layer(wsl, fsl, S, A, brow, pad_out=LANES)

    return wsl.build(jnp.bfloat16), fsl.build(jnp.float32), layout


# --------------------------------------------------------------------------
# The single fused Pallas kernel: whole VAE forward, everything VMEM-resident.
# --------------------------------------------------------------------------
def _vae_kernel(layout, x_ref, eps_ref, w_ref, f_ref, muvar_ref, recon_ref):
    def wload(h):                       # bf16 matmul constants
        off, r, c = h
        return w_ref[off:off + r, :c]

    def fload(h):                       # f32 bias / beta constants
        off, r, c = h
        return f_ref[off:off + r, :c]

    def affine(x, lay):
        """Y = sum_k (S_k @ X) @ A_k + bias, with the S_k pre-stacked so the
        row-selection is ONE matmul; A matmuls accumulate in f32."""
        xb = x.astype(jnp.bfloat16)
        t = jnp.dot(wload(lay['s']), xb,
                    preferred_element_type=jnp.float32).astype(jnp.bfloat16)
        r = lay['rout']
        y = None
        for k, ah in enumerate(lay['a']):
            p = jnp.dot(t[k * r:(k + 1) * r, :], wload(ah),
                        preferred_element_type=jnp.float32)
            y = p if y is None else y + p
        return y + fload(lay['bias'])

    def bn_lrelu(y, lay):
        """BatchNorm2d (training-mode batch stats, biased var) + LeakyReLU,
        computed directly in the (N*H, W*C) layout via expander matmuls."""
        et_h, eg_h, beta_h = lay['bn']
        et = wload(et_h).astype(jnp.float32)
        eg = wload(eg_h).astype(jnp.float32)
        beta_row = fload(beta_h)
        L = y.shape[1]
        C = et.shape[1]
        cnt = float(y.shape[0] * (L // C))               # N*H*W
        colsum = jnp.sum(y, axis=0, keepdims=True)
        sqsum = jnp.sum(y * y, axis=0, keepdims=True)
        mean_c = jnp.dot(colsum, et, preferred_element_type=jnp.float32) / cnt
        msq_c = jnp.dot(sqsum, et, preferred_element_type=jnp.float32) / cnt
        # TODO(synk): one-pass var (E[x^2]-E[x]^2) is cancellation-prone vs.
        # torch's two-pass batch-norm when |mean| >> std; clamped + eps here.
        var_c = jnp.maximum(msq_c - mean_c * mean_c, 0.0)
        inv_c = jax.lax.rsqrt(var_c + BN_EPS)
        scale_row = jnp.dot(inv_c, eg, preferred_element_type=jnp.float32)
        shift_row = beta_row - jnp.dot(mean_c * inv_c, eg,
                                       preferred_element_type=jnp.float32)
        z = y * scale_row + shift_row
        return jnp.maximum(z, LRELU_SLOPE * z)           # LeakyReLU

    x = x_ref[...]

    # ----- encoder -----
    for lay in layout['enc']:
        x = bn_lrelu(affine(x, lay), lay)

    # ----- latent heads: [mu | log_var | 0...] in one 128-lane row per sample -----
    muvar = affine(x, layout['fc_lat'])
    muvar_ref[...] = muvar

    # ----- reparameterize (static lane slices instead of projector matmuls) -----
    # TODO(synk): torch.randn_like uses torch's RNG; eps comes from a JAX key.
    mu = muvar[:, :LATENT_DIM]
    log_var = muvar[:, LATENT_DIM:2 * LATENT_DIM]
    z = eps_ref[...] * jnp.exp(0.5 * log_var) + mu

    # ----- fcBeforeDecode (+ NCHW view folded into the packing) -----
    x = affine(z, layout['fc_dec'])

    # ----- decoder convTs (each with BN + LeakyReLU) -----
    for lay in layout['dec']:
        x = bn_lrelu(affine(x, lay), lay)

    # ----- final conv + tanh (lane-padded to 128 -> full, unmasked store) -----
    recon_ref[...] = jnp.tanh(affine(x, layout['final']))


# --------------------------------------------------------------------------
# Forward pass wrapper: one pallas_call, 4 input DMAs, lane-dense outputs.
# --------------------------------------------------------------------------
def vae_forward(layout, wslab, fslab, x_nchw, eps_key):
    n = x_nchw.shape[0]
    # single entry layout change: NCHW -> (N*H, W*C) layout form
    x0 = jnp.transpose(x_nchw.astype(jnp.float32), (0, 2, 3, 1)).reshape(
        n * RESOLUTION, RESOLUTION * IMAGE_CHANNELS)
    eps = jax.random.normal(eps_key, (n, LATENT_DIM), jnp.float32)

    out_shape = (
        jax.ShapeDtypeStruct((n, LANES), jnp.float32),                 # [mu|log_var|pad]
        jax.ShapeDtypeStruct((n * RESOLUTION, LANES), jnp.float32),    # recon (lane-padded)
    )
    muvar, recon2d = pl.pallas_call(
        functools.partial(_vae_kernel, layout),
        out_shape=out_shape,
        grid=(1,),
        in_specs=[
            pl.BlockSpec(x0.shape, lambda i: (0, 0)),
            pl.BlockSpec(eps.shape, lambda i: (0, 0)),
            pl.BlockSpec(wslab.shape, lambda i: (0, 0)),
            pl.BlockSpec(fslab.shape, lambda i: (0, 0)),
        ],
        out_specs=(
            pl.BlockSpec((n, LANES), lambda i: (0, 0)),
            pl.BlockSpec((n * RESOLUTION, LANES), lambda i: (0, 0)),
        ),
        compiler_params=pltpu.CompilerParams(
            dimension_semantics=("arbitrary",)),
        cost_estimate=pl.CostEstimate(
            flops=8_000_000, transcendentals=5_000, bytes_accessed=700_000),
    )(x0, eps, wslab, fslab)

    mu = muvar[:, :LATENT_DIM]
    log_var = muvar[:, LATENT_DIM:2 * LATENT_DIM]
    # single exit layout change: (N*H, 128)[:, :W*C] -> NCHW
    recon = recon2d[:, :RESOLUTION * IMAGE_CHANNELS].reshape(
        n, RESOLUTION, RESOLUTION, IMAGE_CHANNELS)
    recon = jnp.transpose(recon, (0, 3, 1, 2))
    return recon, mu, log_var


# --------------------------------------------------------------------------
if __name__ == "__main__":
    root = jax.random.PRNGKey(0)
    k_params, k_x, k_eps = jax.random.split(root, 3)

    N_BATCH = 2
    wslab, fslab, layout = init_and_pack(k_params, N_BATCH)
    x = jax.random.normal(
        k_x, (N_BATCH, IMAGE_CHANNELS, RESOLUTION, RESOLUTION), jnp.float32)

    fwd = jax.jit(functools.partial(vae_forward, layout))
    recon, mu, log_var = fwd(wslab, fslab, x, k_eps)
    jax.block_until_ready((recon, mu, log_var))

    assert recon.shape == (N_BATCH, IMAGE_CHANNELS, RESOLUTION, RESOLUTION)
    assert mu.shape == (N_BATCH, LATENT_DIM) and log_var.shape == (N_BATCH, LATENT_DIM)
    assert bool(jnp.all(jnp.isfinite(recon)))
    assert bool(jnp.all(jnp.isfinite(mu))) and bool(jnp.all(jnp.isfinite(log_var)))
    assert bool(jnp.all(jnp.abs(recon) <= 1.0))   # tanh range
    print("KERNEL_OK")
</pallas_src>

<mosaic_0001>
module attributes {stable_mosaic.version = 11 : i64} {
  func.func @_vae_kernel(%arg0: i32, %arg1: memref<32x16xf32, #tpu.memory_space<vmem>>, %arg2: memref<2x2xf32, #tpu.memory_space<vmem>>, %arg3: memref<2304x128xbf16, #tpu.memory_space<vmem>>, %arg4: memref<120x128xf32, #tpu.memory_space<vmem>>, %arg5: memref<2x128xf32, #tpu.memory_space<vmem>>, %arg6: memref<32x128xf32, #tpu.memory_space<vmem>>) attributes {dimension_semantics = [#tpu.dimension_semantics<arbitrary>], iteration_bounds = array<i64: 1>, scalar_prefetch = 0 : i64, scratch_operands = 0 : i64, tpu.core_type = #tpu.core_type<tc>, window_params = [{pipeline_mode = #tpu.pipeline_mode<synchronous>, transform_indices = @transform_0, window_bounds = array<i64: 32, 16>}, {pipeline_mode = #tpu.pipeline_mode<synchronous>, transform_indices = @transform_1, window_bounds = array<i64: 2, 2>}, {pipeline_mode = #tpu.pipeline_mode<synchronous>, transform_indices = @transform_2, window_bounds = array<i64: 2304, 128>}, {pipeline_mode = #tpu.pipeline_mode<synchronous>, transform_indices = @transform_3, window_bounds = array<i64: 120, 128>}, {pipeline_mode = #tpu.pipeline_mode<synchronous>, transform_indices = @transform_4, window_bounds = array<i64: 2, 128>}, {pipeline_mode = #tpu.pipeline_mode<synchronous>, transform_indices = @transform_5, window_bounds = array<i64: 32, 128>}]} {
    %c0 = arith.constant 0 : index
    %c0_0 = arith.constant 0 : index
    %0 = vector.load %arg1[%c0, %c0_0] : memref<32x16xf32, #tpu.memory_space<vmem>>, vector<32x16xf32>
    %1 = arith.truncf %0 : vector<32x16xf32> to vector<32x16xbf16>
    %c0_1 = arith.constant 0 : index
    %c0_2 = arith.constant 0 : index
    %2 = vector.load %arg3[%c0_1, %c0_2] : memref<2304x128xbf16, #tpu.memory_space<vmem>>, vector<48x32xbf16>
    %cst = arith.constant dense<0.000000e+00> : vector<48x16xf32>
    %3 = tpu.matmul %2, %1, %cst {dimension_numbers = #tpu.dot_dimension_numbers<[1], [0], [0], [1], [0, 0, 1, 1], [], []>} : vector<48x32xbf16>, vector<32x16xbf16>, vector<48x16xf32> -> vector<48x16xf32>
    %4 = arith.truncf %3 : vector<48x16xf32> to vector<48x16xbf16>
    %5 = vector.extract_strided_slice %4 {offsets = [0, 0], sizes = [16, 16], strides = [1, 1]} : vector<48x16xbf16> to vector<16x16xbf16>
    %c48 = arith.constant 48 : index
    %c0_3 = arith.constant 0 : index
    %6 = vector.load %arg3[%c48, %c0_3] : memref<2304x128xbf16, #tpu.memory_space<vmem>>, vector<16x64xbf16>
    %cst_4 = arith.constant dense<0.000000e+00> : vector<16x64xf32>
    %7 = tpu.matmul %5, %6, %cst_4 {dimension_numbers = #tpu.dot_dimension_numbers<[1], [0], [0], [1], [0, 0, 1, 1], [], []>} : vector<16x16xbf16>, vector<16x64xbf16>, vector<16x64xf32> -> vector<16x64xf32>
    %8 = vector.extract_strided_slice %4 {offsets = [16, 0], sizes = [16, 16], strides = [1, 1]} : vector<48x16xbf16> to vector<16x16xbf16>
    %c64 = arith.constant 64 : index
    %c0_5 = arith.constant 0 : index
    %9 = vector.load %arg3[%c64, %c0_5] : memref<2304x128xbf16, #tpu.memory_space<vmem>>, vector<16x64xbf16>
    %cst_6 = arith.constant dense<0.000000e+00> : vector<16x64xf32>
    %10 = tpu.matmul %8, %9, %cst_6 {dimension_numbers = #tpu.dot_dimension_numbers<[1], [0], [0], [1], [0, 0, 1, 1], [], []>} : vector<16x16xbf16>, vector<16x64xbf16>, vector<16x64xf32> -> vector<16x64xf32>
    %11 = arith.addf %7, %10 : vector<16x64xf32>
    %12 = vector.extract_strided_slice %4 {offsets = [32, 0], sizes = [16, 16], strides = [1, 1]} : vector<48x16xbf16> to vector<16x16xbf16>
    %c80 = arith.constant 80 : index
    %c0_7 = arith.constant 0 : index
    %13 = vector.load %arg3[%c80, %c0_7] : memref<2304x128xbf16, #tpu.memory_space<vmem>>, vector<16x64xbf16>
    %cst_8 = arith.constant dense<0.000000e+00> : vector<16x64xf32>
    %14 = tpu.matmul %12, %13, %cst_8 {dimension_numbers = #tpu.dot_dimension_numbers<[1], [0], [0], [1], [0, 0, 1, 1], [], []>} : vector<16x16xbf16>, vector<16x64xbf16>, vector<16x64xf32> -> vector<16x64xf32>
    %15 = arith.addf %11, %14 : vector<16x64xf32>
    %c0_9 = arith.constant 0 : index
    %c0_10 = arith.constant 0 : index
    %16 = vector.load %arg4[%c0_9, %c0_10] : memref<120x128xf32, #tpu.memory_space<vmem>>, vector<1x64xf32>
    %17 = vector.broadcast %16 : vector<1x64xf32> to vector<16x64xf32>
    %18 = arith.addf %15, %17 : vector<16x64xf32>
    %c96 = arith.constant 96 : index
    %c0_11 = arith.constant 0 : index
    %19 = vector.load %arg3[%c96, %c0_11] : memref<2304x128xbf16, #tpu.memory_space<vmem>>, vector<64x8xbf16>
    %20 = arith.extf %19 : vector<64x8xbf16> to vector<64x8xf32>
    %c160 = arith.constant 160 : index
    %c0_12 = arith.constant 0 : index
    %21 = vector.load %arg3[%c160, %c0_12] : memref<2304x128xbf16, #tpu.memory_space<vmem>>, vector<8x64xbf16>
    %22 = arith.extf %21 : vector<8x64xbf16> to vector<8x64xf32>
    %c8 = arith.constant 8 : index
    %c0_13 = arith.constant 0 : index
    %23 = vector.load %arg4[%c8, %c0_13] : memref<120x128xf32, #tpu.memory_space<vmem>>, vector<1x64xf32>
    %cst_14 = arith.constant dense<0.000000e+00> : vector<64xf32>
    %24 = vector.multi_reduction <add>, %18, %cst_14 [0] : vector<16x64xf32> to vector<64xf32>
    %25 = vector.shape_cast %24 : vector<64xf32> to vector<1x64xf32>
    %26 = arith.mulf %18, %18 : vector<16x64xf32>
    %cst_15 = arith.constant dense<0.000000e+00> : vector<64xf32>
    %27 = vector.multi_reduction <add>, %26, %cst_15 [0] : vector<16x64xf32> to vector<64xf32>
    %28 = vector.shape_cast %27 : vector<64xf32> to vector<1x64xf32>
    %cst_16 = arith.constant dense<0.000000e+00> : vector<1x8xf32>
    %29 = tpu.matmul %25, %20, %cst_16 {dimension_numbers = #tpu.dot_dimension_numbers<[1], [0], [0], [1], [0, 0, 1, 1], [], []>} : vector<1x64xf32>, vector<64x8xf32>, vector<1x8xf32> -> vector<1x8xf32>
    %cst_17 = arith.constant 1.280000e+02 : f32
    %30 = vector.broadcast %cst_17 : f32 to vector<1x8xf32>
    %31 = arith.divf %29, %30 : vector<1x8xf32>
    %cst_18 = arith.constant dense<0.000000e+00> : vector<1x8xf32>
    %32 = tpu.matmul %28, %20, %cst_18 {dimension_numbers = #tpu.dot_dimension_numbers<[1], [0], [0], [1], [0, 0, 1, 1], [], []>} : vector<1x64xf32>, vector<64x8xf32>, vector<1x8xf32> -> vector<1x8xf32>
    %cst_19 = arith.constant 1.280000e+02 : f32
    %33 = vector.broadcast %cst_19 : f32 to vector<1x8xf32>
    %34 = arith.divf %32, %33 : vector<1x8xf32>
    %35 = arith.mulf %31, %31 : vector<1x8xf32>
    %36 = arith.subf %34, %35 : vector<1x8xf32>
    %cst_20 = arith.constant 0.000000e+00 : f32
    %37 = vector.broadcast %cst_20 : f32 to vector<1x8xf32>
    %38 = arith.maximumf %36, %37 : vector<1x8xf32>
    %cst_21 = arith.constant 9.99999974E-6 : f32
    %39 = vector.broadcast %cst_21 : f32 to vector<1x8xf32>
    %40 = arith.addf %38, %39 : vector<1x8xf32>
    %41 = math.rsqrt %40 : vector<1x8xf32>
    %cst_22 = arith.constant dense<0.000000e+00> : vector<1x64xf32>
    %42 = tpu.matmul %41, %22, %cst_22 {dimension_numbers = #tpu.dot_dimension_numbers<[1], [0], [0], [1], [0, 0, 1, 1], [], []>} : vector<1x8xf32>, vector<8x64xf32>, vector<1x64xf32> -> vector<1x64xf32>
    %43 = arith.mulf %31, %41 : vector<1x8xf32>
    %cst_23 = arith.constant dense<0.000000e+00> : vector<1x64xf32>
    %44 = tpu.matmul %43, %22, %cst_23 {dimension_numbers = #tpu.dot_dimension_numbers<[1], [0], [0], [1], [0, 0, 1, 1], [], []>} : vector<1x8xf32>, vector<8x64xf32>, vector<1x64xf32> -> vector<1x64xf32>
    %45 = arith.subf %23, %44 : vector<1x64xf32>
    %46 = vector.broadcast %42 : vector<1x64xf32> to vector<16x64xf32>
    %47 = arith.mulf %18, %46 : vector<16x64xf32>
    %48 = vector.broadcast %45 : vector<1x64xf32> to vector<16x64xf32>
    %49 = arith.addf %47, %48 : vector<16x64xf32>
    %cst_24 = arith.constant 0.00999999977 : f32
    %50 = vector.broadcast %cst_24 : f32 to vector<16x64xf32>
    %51 = arith.mulf %50, %49 : vector<16x64xf32>
    %52 = arith.maximumf %49, %51 : vector<16x64xf32>
    %53 = arith.truncf %52 : vector<16x64xf32> to vector<16x64xbf16>
    %c176 = arith.constant 176 : index
    %c0_25 = arith.constant 0 : index
    %54 = vector.load %arg3[%c176, %c0_25] : memref<2304x128xbf16, #tpu.memory_space<vmem>>, vector<24x16xbf16>
    %cst_26 = arith.constant dense<0.000000e+00> : vector<24x64xf32>
    %55 = tpu.matmul %54, %53, %cst_26 {dimension_numbers = #tpu.dot_dimension_numbers<[1], [0], [0], [1], [0, 0, 1, 1], [], []>} : vector<24x16xbf16>, vector<16x64xbf16>, vector<24x64xf32> -> vector<24x64xf32>
    %56 = arith.truncf %55 : vector<24x64xf32> to vector<24x64xbf16>
    %57 = vector.extract_strided_slice %56 {offsets = [0, 0], sizes = [8, 64], strides = [1, 1]} : vector<24x64xbf16> to vector<8x64xbf16>
    %c208 = arith.constant 208 : index
    %c0_27 = arith.constant 0 : index
    %58 = vector.load %arg3[%c208, %c0_27] : memref<2304x128xbf16, #tpu.memory_space<vmem>>, vector<64x64xbf16>
    %cst_28 = arith.constant dense<0.000000e+00> : vector<8x64xf32>
    %59 = tpu.matmul %57, %58, %cst_28 {dimension_numbers = #tpu.dot_dimension_numbers<[1], [0], [0], [1], [0, 0, 1, 1], [], []>} : vector<8x64xbf16>, vector<64x64xbf16>, vector<8x64xf32> -> vector<8x64xf32>
    %60 = vector.extract_strided_slice %56 {offsets = [8, 0], sizes = [8, 64], strides = [1, 1]} : vector<24x64xbf16> to vector<8x64xbf16>
    %c272 = arith.constant 272 : index
    %c0_29 = arith.constant 0 : index
    %61 = vector.load %arg3[%c272, %c0_29] : memref<2304x128xbf16, #tpu.memory_space<vmem>>, vector<64x64xbf16>
    %cst_30 = arith.constant dense<0.000000e+00> : vector<8x64xf32>
    %62 = tpu.matmul %60, %61, %cst_30 {dimension_numbers = #tpu.dot_dimension_numbers<[1], [0], [0], [1], [0, 0, 1, 1], [], []>} : vector<8x64xbf16>, vector<64x64xbf16>, vector<8x64xf32> -> vector<8x64xf32>
    %63 = arith.addf %59, %62 : vector<8x64xf32>
    %64 = vector.extract_strided_slice %56 {offsets = [16, 0], sizes = [8, 64], strides = [1, 1]} : vector<24x64xbf16> to vector<8x64xbf16>
    %c336 = arith.constant 336 : index
    %c0_31 = arith.constant 0 : index
    %65 = vector.load %arg3[%c336, %c0_31] : memref<2304x128xbf16, #tpu.memory_space<vmem>>, vector<64x64xbf16>
    %cst_32 = arith.constant dense<0.000000e+00> : vector<8x64xf32>
    %66 = tpu.matmul %64, %65, %cst_32 {dimension_numbers = #tpu.dot_dimension_numbers<[1], [0], [0], [1], [0, 0, 1, 1], [], []>} : vector<8x64xbf16>, vector<64x64xbf16>, vector<8x64xf32> -> vector<8x64xf32>
    %67 = arith.addf %63, %66 : vector<8x64xf32>
    %c16 = arith.constant 16 : index
    %c0_33 = arith.constant 0 : index
    %68 = vector.load %arg4[%c16, %c0_33] : memref<120x128xf32, #tpu.memory_space<vmem>>, vector<1x64xf32>
    %69 = vector.broadcast %68 : vector<1x64xf32> to vector<8x64xf32>
    %70 = arith.addf %67, %69 : vector<8x64xf32>
    %c400 = arith.constant 400 : index
    %c0_34 = arith.constant 0 : index
    %71 = vector.load %arg3[%c400, %c0_34] : memref<2304x128xbf16, #tpu.memory_space<vmem>>, vector<64x16xbf16>
    %72 = arith.extf %71 : vector<64x16xbf16> to vector<64x16xf32>
    %c464 = arith.constant 464 : index
    %c0_35 = arith.constant 0 : index
    %73 = vector.load %arg3[%c464, %c0_35] : memref<2304x128xbf16, #tpu.memory_space<vmem>>, vector<16x64xbf16>
    %74 = arith.extf %73 : vector<16x64xbf16> to vector<16x64xf32>
    %c24 = arith.constant 24 : index
    %c0_36 = arith.constant 0 : index
    %75 = vector.load %arg4[%c24, %c0_36] : memref<120x128xf32, #tpu.memory_space<vmem>>, vector<1x64xf32>
    %cst_37 = arith.constant dense<0.000000e+00> : vector<64xf32>
    %76 = vector.multi_reduction <add>, %70, %cst_37 [0] : vector<8x64xf32> to vector<64xf32>
    %77 = vector.shape_cast %76 : vector<64xf32> to vector<1x64xf32>
    %78 = arith.mulf %70, %70 : vector<8x64xf32>
    %cst_38 = arith.constant dense<0.000000e+00> : vector<64xf32>
    %79 = vector.multi_reduction <add>, %78, %cst_38 [0] : vector<8x64xf32> to vector<64xf32>
    %80 = vector.shape_cast %79 : vector<64xf32> to vector<1x64xf32>
    %cst_39 = arith.constant dense<0.000000e+00> : vector<1x16xf32>
    %81 = tpu.matmul %77, %72, %cst_39 {dimension_numbers = #tpu.dot_dimension_numbers<[1], [0], [0], [1], [0, 0, 1, 1], [], []>} : vector<1x64xf32>, vector<64x16xf32>, vector<1x16xf32> -> vector<1x16xf32>
    %cst_40 = arith.constant 3.200000e+01 : f32
    %82 = vector.broadcast %cst_40 : f32 to vector<1x16xf32>
    %83 = arith.divf %81, %82 : vector<1x16xf32>
    %cst_41 = arith.constant dense<0.000000e+00> : vector<1x16xf32>
    %84 = tpu.matmul %80, %72, %cst_41 {dimension_numbers = #tpu.dot_dimension_numbers<[1], [0], [0], [1], [0, 0, 1, 1], [], []>} : vector<1x64xf32>, vector<64x16xf32>, vector<1x16xf32> -> vector<1x16xf32>
    %cst_42 = arith.constant 3.200000e+01 : f32
    %85 = vector.broadcast %cst_42 : f32 to vector<1x16xf32>
    %86 = arith.divf %84, %85 : vector<1x16xf32>
    %87 = arith.mulf %83, %83 : vector<1x16xf32>
    %88 = arith.subf %86, %87 : vector<1x16xf32>
    %cst_43 = arith.constant 0.000000e+00 : f32
    %89 = vector.broadcast %cst_43 : f32 to vector<1x16xf32>
    %90 = arith.maximumf %88, %89 : vector<1x16xf32>
    %cst_44 = arith.constant 9.99999974E-6 : f32
    %91 = vector.broadcast %cst_44 : f32 to vector<1x16xf32>
    %92 = arith.addf %90, %91 : vector<1x16xf32>
    %93 = math.rsqrt %92 : vector<1x16xf32>
    %cst_45 = arith.constant dense<0.000000e+00> : vector<1x64xf32>
    %94 = tpu.matmul %93, %74, %cst_45 {dimension_numbers = #tpu.dot_dimension_numbers<[1], [0], [0], [1], [0, 0, 1, 1], [], []>} : vector<1x16xf32>, vector<16x64xf32>, vector<1x64xf32> -> vector<1x64xf32>
    %95 = arith.mulf %83, %93 : vector<1x16xf32>
    %cst_46 = arith.constant dense<0.000000e+00> : vector<1x64xf32>
    %96 = tpu.matmul %95, %74, %cst_46 {dimension_numbers = #tpu.dot_dimension_numbers<[1], [0], [0], [1], [0, 0, 1, 1], [], []>} : vector<1x16xf32>, vector<16x64xf32>, vector<1x64xf32> -> vector<1x64xf32>
    %97 = arith.subf %75, %96 : vector<1x64xf32>
    %98 = vector.broadcast %94 : vector<1x64xf32> to vector<8x64xf32>
    %99 = arith.mulf %70, %98 : vector<8x64xf32>
    %100 = vector.broadcast %97 : vector<1x64xf32> to vector<8x64xf32>
    %101 = arith.addf %99, %100 : vector<8x64xf32>
    %cst_47 = arith.constant 0.00999999977 : f32
    %102 = vector.broadcast %cst_47 : f32 to vector<8x64xf32>
    %103 = arith.mulf %102, %101 : vector<8x64xf32>
    %104 = arith.maximumf %101, %103 : vector<8x64xf32>
    %105 = arith.truncf %104 : vector<8x64xf32> to vector<8x64xbf16>
    %c480 = arith.constant 480 : index
    %c0_48 = arith.constant 0 : index
    %106 = vector.load %arg3[%c480, %c0_48] : memref<2304x128xbf16, #tpu.memory_space<vmem>>, vector<12x8xbf16>
    %cst_49 = arith.constant dense<0.000000e+00> : vector<12x64xf32>
    %107 = tpu.matmul %106, %105, %cst_49 {dimension_numbers = #tpu.dot_dimension_numbers<[1], [0], [0], [1], [0, 0, 1, 1], [], []>} : vector<12x8xbf16>, vector<8x64xbf16>, vector<12x64xf32> -> vector<12x64xf32>
    %108 = arith.truncf %107 : vector<12x64xf32> to vector<12x64xbf16>
    %109 = vector.extract_strided_slice %108 {offsets = [0, 0], sizes = [4, 64], strides = [1, 1]} : vector<12x64xbf16> to vector<4x64xbf16>
    %c496 = arith.constant 496 : index
    %c0_50 = arith.constant 0 : index
    %110 = vector.load %arg3[%c496, %c0_50] : memref<2304x128xbf16, #tpu.memory_space<vmem>>, vector<64x32xbf16>
    %cst_51 = arith.constant dense<0.000000e+00> : vector<4x32xf32>
    %111 = tpu.matmul %109, %110, %cst_51 {dimension_numbers = #tpu.dot_dimension_numbers<[1], [0], [0], [1], [0, 0, 1, 1], [], []>} : vector<4x64xbf16>, vector<64x32xbf16>, vector<4x32xf32> -> vector<4x32xf32>
    %112 = vector.extract_strided_slice %108 {offsets = [4, 0], sizes = [4, 64], strides = [1, 1]} : vector<12x64xbf16> to vector<4x64xbf16>
    %c560 = arith.constant 560 : index
    %c0_52 = arith.constant 0 : index
    %113 = vector.load %arg3[%c560, %c0_52] : memref<2304x128xbf16, #tpu.memory_space<vmem>>, vector<64x32xbf16>
    %cst_53 = arith.constant dense<0.000000e+00> : vector<4x32xf32>
    %114 = tpu.matmul %112, %113, %cst_53 {dimension_numbers = #tpu.dot_dimension_numbers<[1], [0], [0], [1], [0, 0, 1, 1], [], []>} : vector<4x64xbf16>, vector<64x32xbf16>, vector<4x32xf32> -> vector<4x32xf32>
    %115 = arith.addf %111, %114 : vector<4x32xf32>
    %116 = vector.extract_strided_slice %108 {offsets = [8, 0], sizes = [4, 64], strides = [1, 1]} : vector<12x64xbf16> to vector<4x64xbf16>
    %c624 = arith.constant 624 : index
    %c0_54 = arith.constant 0 : index
    %117 = vector.load %arg3[%c624, %c0_54] : memref<2304x128xbf16, #tpu.memory_space<vmem>>, vector<64x32xbf16>
    %cst_55 = arith.constant dense<0.000000e+00> : vector<4x32xf32>
    %118 = tpu.matmul %116, %117, %cst_55 {dimension_numbers = #tpu.dot_dimension_numbers<[1], [0], [0], [1], [0, 0, 1, 1], [], []>} : vector<4x64xbf16>, vector<64x32xbf16>, vector<4x32xf32> -> vector<4x32xf32>
    %119 = arith.addf %115, %118 : vector<4x32xf32>
    %c32 = arith.constant 32 : index
    %c0_56 = arith.constant 0 : index
    %120 = vector.load %arg4[%c32, %c0_56] : memref<120x128xf32, #tpu.memory_space<vmem>>, vector<1x32xf32>
    %121 = vector.broadcast %120 : vector<1x32xf32> to vector<4x32xf32>
    %122 = arith.addf %119, %121 : vector<4x32xf32>
    %c688 = arith.constant 688 : index
    %c0_57 = arith.constant 0 : index
    %123 = vector.load %arg3[%c688, %c0_57] : memref<2304x128xbf16, #tpu.memory_space<vmem>>, vector<32x16xbf16>
    %124 = arith.extf %123 : vector<32x16xbf16> to vector<32x16xf32>
    %c720 = arith.constant 720 : index
    %c0_58 = arith.constant 0 : index
    %125 = vector.load %arg3[%c720, %c0_58] : memref<2304x128xbf16, #tpu.memory_space<vmem>>, vector<16x32xbf16>
    %126 = arith.extf %125 : vector<16x32xbf16> to vector<16x32xf32>
    %c40 = arith.constant 40 : index
    %c0_59 = arith.constant 0 : index
    %127 = vector.load %arg4[%c40, %c0_59] : memref<120x128xf32, #tpu.memory_space<vmem>>, vector<1x32xf32>
    %cst_60 = arith.constant dense<0.000000e+00> : vector<32xf32>
    %128 = vector.multi_reduction <add>, %122, %cst_60 [0] : vector<4x32xf32> to vector<32xf32>
    %129 = vector.shape_cast %128 : vector<32xf32> to vector<1x32xf32>
    %130 = arith.mulf %122, %122 : vector<4x32xf32>
    %cst_61 = arith.constant dense<0.000000e+00> : vector<32xf32>
    %131 = vector.multi_reduction <add>, %130, %cst_61 [0] : vector<4x32xf32> to vector<32xf32>
    %132 = vector.shape_cast %131 : vector<32xf32> to vector<1x32xf32>
    %cst_62 = arith.constant dense<0.000000e+00> : vector<1x16xf32>
    %133 = tpu.matmul %129, %124, %cst_62 {dimension_numbers = #tpu.dot_dimension_numbers<[1], [0], [0], [1], [0, 0, 1, 1], [], []>} : vector<1x32xf32>, vector<32x16xf32>, vector<1x16xf32> -> vector<1x16xf32>
    %cst_63 = arith.constant 8.000000e+00 : f32
    %134 = vector.broadcast %cst_63 : f32 to vector<1x16xf32>
    %135 = arith.divf %133, %134 : vector<1x16xf32>
    %cst_64 = arith.constant dense<0.000000e+00> : vector<1x16xf32>
    %136 = tpu.matmul %132, %124, %cst_64 {dimension_numbers = #tpu.dot_dimension_numbers<[1], [0], [0], [1], [0, 0, 1, 1], [], []>} : vector<1x32xf32>, vector<32x16xf32>, vector<1x16xf32> -> vector<1x16xf32>
    %cst_65 = arith.constant 8.000000e+00 : f32
    %137 = vector.broadcast %cst_65 : f32 to vector<1x16xf32>
    %138 = arith.divf %136, %137 : vector<1x16xf32>
    %139 = arith.mulf %135, %135 : vector<1x16xf32>
    %140 = arith.subf %138, %139 : vector<1x16xf32>
    %cst_66 = arith.constant 0.000000e+00 : f32
    %141 = vector.broadcast %cst_66 : f32 to vector<1x16xf32>
    %142 = arith.maximumf %140, %141 : vector<1x16xf32>
    %cst_67 = arith.constant 9.99999974E-6 : f32
    %143 = vector.broadcast %cst_67 : f32 to vector<1x16xf32>
    %144 = arith.addf %142, %143 : vector<1x16xf32>
    %145 = math.rsqrt %144 : vector<1x16xf32>
    %cst_68 = arith.constant dense<0.000000e+00> : vector<1x32xf32>
    %146 = tpu.matmul %145, %126, %cst_68 {dimension_numbers = #tpu.dot_dimension_numbers<[1], [0], [0], [1], [0, 0, 1, 1], [], []>} : vector<1x16xf32>, vector<16x32xf32>, vector<1x32xf32> -> vector<1x32xf32>
    %147 = arith.mulf %135, %145 : vector<1x16xf32>
    %cst_69 = arith.constant dense<0.000000e+00> : vector<1x32xf32>
    %148 = tpu.matmul %147, %126, %cst_69 {dimension_numbers = #tpu.dot_dimension_numbers<[1], [0], [0], [1], [0, 0, 1, 1], [], []>} : vector<1x16xf32>, vector<16x32xf32>, vector<1x32xf32> -> vector<1x32xf32>
    %149 = arith.subf %127, %148 : vector<1x32xf32>
    %150 = vector.broadcast %146 : vector<1x32xf32> to vector<4x32xf32>
    %151 = arith.mulf %122, %150 : vector<4x32xf32>
    %152 = vector.broadcast %149 : vector<1x32xf32> to vector<4x32xf32>
    %153 = arith.addf %151, %152 : vector<4x32xf32>
    %cst_70 = arith.constant 0.00999999977 : f32
    %154 = vector.broadcast %cst_70 : f32 to vector<4x32xf32>
    %155 = arith.mulf %154, %153 : vector<4x32xf32>
    %156 = arith.maximumf %153, %155 : vector<4x32xf32>
    %157 = arith.truncf %156 : vector<4x32xf32> to vector<4x32xbf16>
    %c736 = arith.constant 736 : index
    %c0_71 = arith.constant 0 : index
    %158 = vector.load %arg3[%c736, %c0_71] : memref<2304x128xbf16, #tpu.memory_space<vmem>>, vector<4x4xbf16>
    %cst_72 = arith.constant dense<0.000000e+00> : vector<4x32xf32>
    %159 = tpu.matmul %158, %157, %cst_72 {dimension_numbers = #tpu.dot_dimension_numbers<[1], [0], [0], [1], [0, 0, 1, 1], [], []>} : vector<4x4xbf16>, vector<4x32xbf16>, vector<4x32xf32> -> vector<4x32xf32>
    %160 = arith.truncf %159 : vector<4x32xf32> to vector<4x32xbf16>
    %161 = vector.extract_strided_slice %160 {offsets = [0, 0], sizes = [2, 32], strides = [1, 1]} : vector<4x32xbf16> to vector<2x32xbf16>
    %c752 = arith.constant 752 : index
    %c0_73 = arith.constant 0 : index
    %162 = vector.load %arg3[%c752, %c0_73] : memref<2304x128xbf16, #tpu.memory_space<vmem>>, vector<32x128xbf16>
    %cst_74 = arith.constant dense<0.000000e+00> : vector<2x128xf32>
    %163 = tpu.matmul %161, %162, %cst_74 {dimension_numbers = #tpu.dot_dimension_numbers<[1], [0], [0], [1], [0, 0, 1, 1], [], []>} : vector<2x32xbf16>, vector<32x128xbf16>, vector<2x128xf32> -> vector<2x128xf32>
    %164 = vector.extract_strided_slice %160 {offsets = [2, 0], sizes = [2, 32], strides = [1, 1]} : vector<4x32xbf16> to vector<2x32xbf16>
    %c784 = arith.constant 784 : index
    %c0_75 = arith.constant 0 : index
    %165 = vector.load %arg3[%c784, %c0_75] : memref<2304x128xbf16, #tpu.memory_space<vmem>>, vector<32x128xbf16>
    %cst_76 = arith.constant dense<0.000000e+00> : vector<2x128xf32>
    %166 = tpu.matmul %164, %165, %cst_76 {dimension_numbers = #tpu.dot_dimension_numbers<[1], [0], [0], [1], [0, 0, 1, 1], [], []>} : vector<2x32xbf16>, vector<32x128xbf16>, vector<2x128xf32> -> vector<2x128xf32>
    %167 = arith.addf %163, %166 : vector<2x128xf32>
    %c48_77 = arith.constant 48 : index
    %c0_78 = arith.constant 0 : index
    %168 = vector.load %arg4[%c48_77, %c0_78] : memref<120x128xf32, #tpu.memory_space<vmem>>, vector<1x128xf32>
    %169 = vector.broadcast %168 : vector<1x128xf32> to vector<2x128xf32>
    %170 = arith.addf %167, %169 : vector<2x128xf32>
    %c0_79 = arith.constant 0 : index
    %c0_80 = arith.constant 0 : index
    %171 = vector.load %arg5[%c0_79, %c0_80] : memref<2x128xf32, #tpu.memory_space<vmem>>, vector<2x128xf32>
    tpu.vector_store %arg5[%c0_79, %c0_80], %170 {strides = array<i32>} : memref<2x128xf32, #tpu.memory_space<vmem>>, vector<2x128xf32>,
    %172 = vector.extract_strided_slice %170 {offsets = [0, 0], sizes = [2, 2], strides = [1, 1]} : vector<2x128xf32> to vector<2x2xf32>
    %173 = vector.extract_strided_slice %170 {offsets = [0, 2], sizes = [2, 2], strides = [1, 1]} : vector<2x128xf32> to vector<2x2xf32>
    %c0_81 = arith.constant 0 : index
    %c0_82 = arith.constant 0 : index
    %174 = vector.load %arg2[%c0_81, %c0_82] : memref<2x2xf32, #tpu.memory_space<vmem>>, vector<2x2xf32>
    %cst_83 = arith.constant 5.000000e-01 : f32
    %175 = vector.broadcast %cst_83 : f32 to vector<2x2xf32>
    %176 = arith.mulf %175, %173 : vector<2x2xf32>
    %177 = math.exp %176 : vector<2x2xf32>
    %178 = arith.mulf %174, %177 : vector<2x2xf32>
    %179 = arith.addf %178, %172 : vector<2x2xf32>
    %180 = arith.truncf %179 : vector<2x2xf32> to vector<2x2xbf16>
    %c816 = arith.constant 816 : index
    %c0_84 = arith.constant 0 : index
    %181 = vector.load %arg3[%c816, %c0_84] : memref<2304x128xbf16, #tpu.memory_space<vmem>>, vector<8x2xbf16>
    %cst_85 = arith.constant dense<0.000000e+00> : vector<8x2xf32>
    %182 = tpu.matmul %181, %180, %cst_85 {dimension_numbers = #tpu.dot_dimension_numbers<[1], [0], [0], [1], [0, 0, 1, 1], [], []>} : vector<8x2xbf16>, vector<2x2xbf16>, vector<8x2xf32> -> vector<8x2xf32>
    %183 = arith.truncf %182 : vector<8x2xf32> to vector<8x2xbf16>
    %184 = vector.extract_strided_slice %183 {offsets = [0, 0], sizes = [4, 2], strides = [1, 1]} : vector<8x2xbf16> to vector<4x2xbf16>
    %c832 = arith.constant 832 : index
    %c0_86 = arith.constant 0 : index
    %185 = vector.load %arg3[%c832, %c0_86] : memref<2304x128xbf16, #tpu.memory_space<vmem>>, vector<2x32xbf16>
    %cst_87 = arith.constant dense<0.000000e+00> : vector<4x32xf32>
    %186 = tpu.matmul %184, %185, %cst_87 {dimension_numbers = #tpu.dot_dimension_numbers<[1], [0], [0], [1], [0, 0, 1, 1], [], []>} : vector<4x2xbf16>, vector<2x32xbf16>, vector<4x32xf32> -> vector<4x32xf32>
    %187 = vector.extract_strided_slice %183 {offsets = [4, 0], sizes = [4, 2], strides = [1, 1]} : vector<8x2xbf16> to vector<4x2xbf16>
    %c848 = arith.constant 848 : index
    %c0_88 = arith.constant 0 : index
    %188 = vector.load %arg3[%c848, %c0_88] : memref<2304x128xbf16, #tpu.memory_space<vmem>>, vector<2x32xbf16>
    %cst_89 = arith.constant dense<0.000000e+00> : vector<4x32xf32>
    %189 = tpu.matmul %187, %188, %cst_89 {dimension_numbers = #tpu.dot_dimension_numbers<[1], [0], [0], [1], [0, 0, 1, 1], [], []>} : vector<4x2xbf16>, vector<2x32xbf16>, vector<4x32xf32> -> vector<4x32xf32>
    %190 = arith.addf %186, %189 : vector<4x32xf32>
    %c56 = arith.constant 56 : index
    %c0_90 = arith.constant 0 : index
    %191 = vector.load %arg4[%c56, %c0_90] : memref<120x128xf32, #tpu.memory_space<vmem>>, vector<4x32xf32>
    %192 = arith.addf %190, %191 : vector<4x32xf32>
    %193 = arith.truncf %192 : vector<4x32xf32> to vector<4x32xbf16>
    %c864 = arith.constant 864 : index
    %c0_91 = arith.constant 0 : index
    %194 = vector.load %arg3[%c864, %c0_91] : memref<2304x128xbf16, #tpu.memory_space<vmem>>, vector<24x4xbf16>
    %cst_92 = arith.constant dense<0.000000e+00> : vector<24x32xf32>
    %195 = tpu.matmul %194, %193, %cst_92 {dimension_numbers = #tpu.dot_dimension_numbers<[1], [0], [0], [1], [0, 0, 1, 1], [], []>} : vector<24x4xbf16>, vector<4x32xbf16>, vector<24x32xf32> -> vector<24x32xf32>
    %196 = arith.truncf %195 : vector<24x32xf32> to vector<24x32xbf16>
    %197 = vector.extract_strided_slice %196 {offsets = [0, 0], sizes = [8, 32], strides = [1, 1]} : vector<24x32xbf16> to vector<8x32xbf16>
    %c896 = arith.constant 896 : index
    %c0_93 = arith.constant 0 : index
    %198 = vector.load %arg3[%c896, %c0_93] : memref<2304x128xbf16, #tpu.memory_space<vmem>>, vector<32x64xbf16>
    %cst_94 = arith.constant dense<0.000000e+00> : vector<8x64xf32>
    %199 = tpu.matmul %197, %198, %cst_94 {dimension_numbers = #tpu.dot_dimension_numbers<[1], [0], [0], [1], [0, 0, 1, 1], [], []>} : vector<8x32xbf16>, vector<32x64xbf16>, vector<8x64xf32> -> vector<8x64xf32>
    %200 = vector.extract_strided_slice %196 {offsets = [8, 0], sizes = [8, 32], strides = [1, 1]} : vector<24x32xbf16> to vector<8x32xbf16>
    %c928 = arith.constant 928 : index
    %c0_95 = arith.constant 0 : index
    %201 = vector.load %arg3[%c928, %c0_95] : memref<2304x128xbf16, #tpu.memory_space<vmem>>, vector<32x64xbf16>
    %cst_96 = arith.constant dense<0.000000e+00> : vector<8x64xf32>
    %202 = tpu.matmul %200, %201, %cst_96 {dimension_numbers = #tpu.dot_dimension_numbers<[1], [0], [0], [1], [0, 0, 1, 1], [], []>} : vector<8x32xbf16>, vector<32x64xbf16>, vector<8x64xf32> -> vector<8x64xf32>
    %203 = arith.addf %199, %202 : vector<8x64xf32>
    %204 = vector.extract_strided_slice %196 {offsets = [16, 0], sizes = [8, 32], strides = [1, 1]} : vector<24x32xbf16> to vector<8x32xbf16>
    %c960 = arith.constant 960 : index
    %c0_97 = arith.constant 0 : index
    %205 = vector.load %arg3[%c960, %c0_97] : memref<2304x128xbf16, #tpu.memory_space<vmem>>, vector<32x64xbf16>
    %cst_98 = arith.constant dense<0.000000e+00> : vector<8x64xf32>
    %206 = tpu.matmul %204, %205, %cst_98 {dimension_numbers = #tpu.dot_dimension_numbers<[1], [0], [0], [1], [0, 0, 1, 1], [], []>} : vector<8x32xbf16>, vector<32x64xbf16>, vector<8x64xf32> -> vector<8x64xf32>
    %207 = arith.addf %203, %206 : vector<8x64xf32>
    %c64_99 = arith.constant 64 : index
    %c0_100 = arith.constant 0 : index
    %208 = vector.load %arg4[%c64_99, %c0_100] : memref<120x128xf32, #tpu.memory_space<vmem>>, vector<1x64xf32>
    %209 = vector.broadcast %208 : vector<1x64xf32> to vector<8x64xf32>
    %210 = arith.addf %207, %209 : vector<8x64xf32>
    %c992 = arith.constant 992 : index
    %c0_101 = arith.constant 0 : index
    %211 = vector.load %arg3[%c992, %c0_101] : memref<2304x128xbf16, #tpu.memory_space<vmem>>, vector<64x16xbf16>
    %212 = arith.extf %211 : vector<64x16xbf16> to vector<64x16xf32>
    %c1056 = arith.constant 1056 : index
    %c0_102 = arith.constant 0 : index
    %213 = vector.load %arg3[%c1056, %c0_102] : memref<2304x128xbf16, #tpu.memory_space<vmem>>, vector<16x64xbf16>
    %214 = arith.extf %213 : vector<16x64xbf16> to vector<16x64xf32>
    %c72 = arith.constant 72 : index
    %c0_103 = arith.constant 0 : index
    %215 = vector.load %arg4[%c72, %c0_103] : memref<120x128xf32, #tpu.memory_space<vmem>>, vector<1x64xf32>
    %cst_104 = arith.constant dense<0.000000e+00> : vector<64xf32>
    %216 = vector.multi_reduction <add>, %210, %cst_104 [0] : vector<8x64xf32> to vector<64xf32>
    %217 = vector.shape_cast %216 : vector<64xf32> to vector<1x64xf32>
    %218 = arith.mulf %210, %210 : vector<8x64xf32>
    %cst_105 = arith.constant dense<0.000000e+00> : vector<64xf32>
    %219 = vector.multi_reduction <add>, %218, %cst_105 [0] : vector<8x64xf32> to vector<64xf32>
    %220 = vector.shape_cast %219 : vector<64xf32> to vector<1x64xf32>
    %cst_106 = arith.constant dense<0.000000e+00> : vector<1x16xf32>
    %221 = tpu.matmul %217, %212, %cst_106 {dimension_numbers = #tpu.dot_dimension_numbers<[1], [0], [0], [1], [0, 0, 1, 1], [], []>} : vector<1x64xf32>, vector<64x16xf32>, vector<1x16xf32> -> vector<1x16xf32>
    %cst_107 = arith.constant 3.200000e+01 : f32
    %222 = vector.broadcast %cst_107 : f32 to vector<1x16xf32>
    %223 = arith.divf %221, %222 : vector<1x16xf32>
    %cst_108 = arith.constant dense<0.000000e+00> : vector<1x16xf32>
    %224 = tpu.matmul %220, %212, %cst_108 {dimension_numbers = #tpu.dot_dimension_numbers<[1], [0], [0], [1], [0, 0, 1, 1], [], []>} : vector<1x64xf32>, vector<64x16xf32>, vector<1x16xf32> -> vector<1x16xf32>
    %cst_109 = arith.constant 3.200000e+01 : f32
    %225 = vector.broadcast %cst_109 : f32 to vector<1x16xf32>
    %226 = arith.divf %224, %225 : vector<1x16xf32>
    %227 = arith.mulf %223, %223 : vector<1x16xf32>
    %228 = arith.subf %226, %227 : vector<1x16xf32>
    %cst_110 = arith.constant 0.000000e+00 : f32
    %229 = vector.broadcast %cst_110 : f32 to vector<1x16xf32>
    %230 = arith.maximumf %228, %229 : vector<1x16xf32>
    %cst_111 = arith.constant 9.99999974E-6 : f32
    %231 = vector.broadcast %cst_111 : f32 to vector<1x16xf32>
    %232 = arith.addf %230, %231 : vector<1x16xf32>
    %233 = math.rsqrt %232 : vector<1x16xf32>
    %cst_112 = arith.constant dense<0.000000e+00> : vector<1x64xf32>
    %234 = tpu.matmul %233, %214, %cst_112 {dimension_numbers = #tpu.dot_dimension_numbers<[1], [0], [0], [1], [0, 0, 1, 1], [], []>} : vector<1x16xf32>, vector<16x64xf32>, vector<1x64xf32> -> vector<1x64xf32>
    %235 = arith.mulf %223, %233 : vector<1x16xf32>
    %cst_113 = arith.constant dense<0.000000e+00> : vector<1x64xf32>
    %236 = tpu.matmul %235, %214, %cst_113 {dimension_numbers = #tpu.dot_dimension_numbers<[1], [0], [0], [1], [0, 0, 1, 1], [], []>} : vector<1x16xf32>, vector<16x64xf32>, vector<1x64xf32> -> vector<1x64xf32>
    %237 = arith.subf %215, %236 : vector<1x64xf32>
    %238 = vector.broadcast %234 : vector<1x64xf32> to vector<8x64xf32>
    %239 = arith.mulf %210, %238 : vector<8x64xf32>
    %240 = vector.broadcast %237 : vector<1x64xf32> to vector<8x64xf32>
    %241 = arith.addf %239, %240 : vector<8x64xf32>
    %cst_114 = arith.constant 0.00999999977 : f32
    %242 = vector.broadcast %cst_114 : f32 to vector<8x64xf32>
    %243 = arith.mulf %242, %241 : vector<8x64xf32>
    %244 = arith.maximumf %241, %243 : vector<8x64xf32>
    %245 = arith.truncf %244 : vector<8x64xf32> to vector<8x64xbf16>
    %c1072 = arith.constant 1072 : index
    %c0_115 = arith.constant 0 : index
    %246 = vector.load %arg3[%c1072, %c0_115] : memref<2304x128xbf16, #tpu.memory_space<vmem>>, vector<48x8xbf16>
    %cst_116 = arith.constant dense<0.000000e+00> : vector<48x64xf32>
    %247 = tpu.matmul %246, %245, %cst_116 {dimension_numbers = #tpu.dot_dimension_numbers<[1], [0], [0], [1], [0, 0, 1, 1], [], []>} : vector<48x8xbf16>, vector<8x64xbf16>, vector<48x64xf32> -> vector<48x64xf32>
    %248 = arith.truncf %247 : vector<48x64xf32> to vector<48x64xbf16>
    %249 = vector.extract_strided_slice %248 {offsets = [0, 0], sizes = [16, 64], strides = [1, 1]} : vector<48x64xbf16> to vector<16x64xbf16>
    %c1120 = arith.constant 1120 : index
    %c0_117 = arith.constant 0 : index
    %250 = vector.load %arg3[%c1120, %c0_117] : memref<2304x128xbf16, #tpu.memory_space<vmem>>, vector<64x64xbf16>
    %cst_118 = arith.constant dense<0.000000e+00> : vector<16x64xf32>
    %251 = tpu.matmul %249, %250, %cst_118 {dimension_numbers = #tpu.dot_dimension_numbers<[1], [0], [0], [1], [0, 0, 1, 1], [], []>} : vector<16x64xbf16>, vector<64x64xbf16>, vector<16x64xf32> -> vector<16x64xf32>
    %252 = vector.extract_strided_slice %248 {offsets = [16, 0], sizes = [16, 64], strides = [1, 1]} : vector<48x64xbf16> to vector<16x64xbf16>
    %c1184 = arith.constant 1184 : index
    %c0_119 = arith.constant 0 : index
    %253 = vector.load %arg3[%c1184, %c0_119] : memref<2304x128xbf16, #tpu.memory_space<vmem>>, vector<64x64xbf16>
    %cst_120 = arith.constant dense<0.000000e+00> : vector<16x64xf32>
    %254 = tpu.matmul %252, %253, %cst_120 {dimension_numbers = #tpu.dot_dimension_numbers<[1], [0], [0], [1], [0, 0, 1, 1], [], []>} : vector<16x64xbf16>, vector<64x64xbf16>, vector<16x64xf32> -> vector<16x64xf32>
    %255 = arith.addf %251, %254 : vector<16x64xf32>
    %256 = vector.extract_strided_slice %248 {offsets = [32, 0], sizes = [16, 64], strides = [1, 1]} : vector<48x64xbf16> to vector<16x64xbf16>
    %c1248 = arith.constant 1248 : index
    %c0_121 = arith.constant 0 : index
    %257 = vector.load %arg3[%c1248, %c0_121] : memref<2304x128xbf16, #tpu.memory_space<vmem>>, vector<64x64xbf16>
    %cst_122 = arith.constant dense<0.000000e+00> : vector<16x64xf32>
    %258 = tpu.matmul %256, %257, %cst_122 {dimension_numbers = #tpu.dot_dimension_numbers<[1], [0], [0], [1], [0, 0, 1, 1], [], []>} : vector<16x64xbf16>, vector<64x64xbf16>, vector<16x64xf32> -> vector<16x64xf32>
    %259 = arith.addf %255, %258 : vector<16x64xf32>
    %c80_123 = arith.constant 80 : index
    %c0_124 = arith.constant 0 : index
    %260 = vector.load %arg4[%c80_123, %c0_124] : memref<120x128xf32, #tpu.memory_space<vmem>>, vector<1x64xf32>
    %261 = vector.broadcast %260 : vector<1x64xf32> to vector<16x64xf32>
    %262 = arith.addf %259, %261 : vector<16x64xf32>
    %c1312 = arith.constant 1312 : index
    %c0_125 = arith.constant 0 : index
    %263 = vector.load %arg3[%c1312, %c0_125] : memref<2304x128xbf16, #tpu.memory_space<vmem>>, vector<64x8xbf16>
    %264 = arith.extf %263 : vector<64x8xbf16> to vector<64x8xf32>
    %c1376 = arith.constant 1376 : index
    %c0_126 = arith.constant 0 : index
    %265 = vector.load %arg3[%c1376, %c0_126] : memref<2304x128xbf16, #tpu.memory_space<vmem>>, vector<8x64xbf16>
    %266 = arith.extf %265 : vector<8x64xbf16> to vector<8x64xf32>
    %c88 = arith.constant 88 : index
    %c0_127 = arith.constant 0 : index
    %267 = vector.load %arg4[%c88, %c0_127] : memref<120x128xf32, #tpu.memory_space<vmem>>, vector<1x64xf32>
    %cst_128 = arith.constant dense<0.000000e+00> : vector<64xf32>
    %268 = vector.multi_reduction <add>, %262, %cst_128 [0] : vector<16x64xf32> to vector<64xf32>
    %269 = vector.shape_cast %268 : vector<64xf32> to vector<1x64xf32>
    %270 = arith.mulf %262, %262 : vector<16x64xf32>
    %cst_129 = arith.constant dense<0.000000e+00> : vector<64xf32>
    %271 = vector.multi_reduction <add>, %270, %cst_129 [0] : vector<16x64xf32> to vector<64xf32>
    %272 = vector.shape_cast %271 : vector<64xf32> to vector<1x64xf32>
    %cst_130 = arith.constant dense<0.000000e+00> : vector<1x8xf32>
    %273 = tpu.matmul %269, %264, %cst_130 {dimension_numbers = #tpu.dot_dimension_numbers<[1], [0], [0], [1], [0, 0, 1, 1], [], []>} : vector<1x64xf32>, vector<64x8xf32>, vector<1x8xf32> -> vector<1x8xf32>
    %cst_131 = arith.constant 1.280000e+02 : f32
    %274 = vector.broadcast %cst_131 : f32 to vector<1x8xf32>
    %275 = arith.divf %273, %274 : vector<1x8xf32>
    %cst_132 = arith.constant dense<0.000000e+00> : vector<1x8xf32>
    %276 = tpu.matmul %272, %264, %cst_132 {dimension_numbers = #tpu.dot_dimension_numbers<[1], [0], [0], [1], [0, 0, 1, 1], [], []>} : vector<1x64xf32>, vector<64x8xf32>, vector<1x8xf32> -> vector<1x8xf32>
    %cst_133 = arith.constant 1.280000e+02 : f32
    %277 = vector.broadcast %cst_133 : f32 to vector<1x8xf32>
    %278 = arith.divf %276, %277 : vector<1x8xf32>
    %279 = arith.mulf %275, %275 : vector<1x8xf32>
    %280 = arith.subf %278, %279 : vector<1x8xf32>
    %cst_134 = arith.constant 0.000000e+00 : f32
    %281 = vector.broadcast %cst_134 : f32 to vector<1x8xf32>
    %282 = arith.maximumf %280, %281 : vector<1x8xf32>
    %cst_135 = arith.constant 9.99999974E-6 : f32
    %283 = vector.broadcast %cst_135 : f32 to vector<1x8xf32>
    %284 = arith.addf %282, %283 : vector<1x8xf32>
    %285 = math.rsqrt %284 : vector<1x8xf32>
    %cst_136 = arith.constant dense<0.000000e+00> : vector<1x64xf32>
    %286 = tpu.matmul %285, %266, %cst_136 {dimension_numbers = #tpu.dot_dimension_numbers<[1], [0], [0], [1], [0, 0, 1, 1], [], []>} : vector<1x8xf32>, vector<8x64xf32>, vector<1x64xf32> -> vector<1x64xf32>
    %287 = arith.mulf %275, %285 : vector<1x8xf32>
    %cst_137 = arith.constant dense<0.000000e+00> : vector<1x64xf32>
    %288 = tpu.matmul %287, %266, %cst_137 {dimension_numbers = #tpu.dot_dimension_numbers<[1], [0], [0], [1], [0, 0, 1, 1], [], []>} : vector<1x8xf32>, vector<8x64xf32>, vector<1x64xf32> -> vector<1x64xf32>
    %289 = arith.subf %267, %288 : vector<1x64xf32>
    %290 = vector.broadcast %286 : vector<1x64xf32> to vector<16x64xf32>
    %291 = arith.mulf %262, %290 : vector<16x64xf32>
    %292 = vector.broadcast %289 : vector<1x64xf32> to vector<16x64xf32>
    %293 = arith.addf %291, %292 : vector<16x64xf32>
    %cst_138 = arith.constant 0.00999999977 : f32
    %294 = vector.broadcast %cst_138 : f32 to vector<16x64xf32>
    %295 = arith.mulf %294, %293 : vector<16x64xf32>
    %296 = arith.maximumf %293, %295 : vector<16x64xf32>
    %297 = arith.truncf %296 : vector<16x64xf32> to vector<16x64xbf16>
    %c1392 = arith.constant 1392 : index
    %c0_139 = arith.constant 0 : index
    %298 = vector.load %arg3[%c1392, %c0_139] : memref<2304x128xbf16, #tpu.memory_space<vmem>>, vector<96x16xbf16>
    %cst_140 = arith.constant dense<0.000000e+00> : vector<96x64xf32>
    %299 = tpu.matmul %298, %297, %cst_140 {dimension_numbers = #tpu.dot_dimension_numbers<[1], [0], [0], [1], [0, 0, 1, 1], [], []>} : vector<96x16xbf16>, vector<16x64xbf16>, vector<96x64xf32> -> vector<96x64xf32>
    %300 = arith.truncf %299 : vector<96x64xf32> to vector<96x64xbf16>
    %301 = vector.extract_strided_slice %300 {offsets = [0, 0], sizes = [32, 64], strides = [1, 1]} : vector<96x64xbf16> to vector<32x64xbf16>
    %c1488 = arith.constant 1488 : index
    %c0_141 = arith.constant 0 : index
    %302 = vector.load %arg3[%c1488, %c0_141] : memref<2304x128xbf16, #tpu.memory_space<vmem>>, vector<64x128xbf16>
    %cst_142 = arith.constant dense<0.000000e+00> : vector<32x128xf32>
    %303 = tpu.matmul %301, %302, %cst_142 {dimension_numbers = #tpu.dot_dimension_numbers<[1], [0], [0], [1], [0, 0, 1, 1], [], []>} : vector<32x64xbf16>, vector<64x128xbf16>, vector<32x128xf32> -> vector<32x128xf32>
    %304 = vector.extract_strided_slice %300 {offsets = [32, 0], sizes = [32, 64], strides = [1, 1]} : vector<96x64xbf16> to vector<32x64xbf16>
    %c1552 = arith.constant 1552 : index
    %c0_143 = arith.constant 0 : index
    %305 = vector.load %arg3[%c1552, %c0_143] : memref<2304x128xbf16, #tpu.memory_space<vmem>>, vector<64x128xbf16>
    %cst_144 = arith.constant dense<0.000000e+00> : vector<32x128xf32>
    %306 = tpu.matmul %304, %305, %cst_144 {dimension_numbers = #tpu.dot_dimension_numbers<[1], [0], [0], [1], [0, 0, 1, 1], [], []>} : vector<32x64xbf16>, vector<64x128xbf16>, vector<32x128xf32> -> vector<32x128xf32>
    %307 = arith.addf %303, %306 : vector<32x128xf32>
    %308 = vector.extract_strided_slice %300 {offsets = [64, 0], sizes = [32, 64], strides = [1, 1]} : vector<96x64xbf16> to vector<32x64xbf16>
    %c1616 = arith.constant 1616 : index
    %c0_145 = arith.constant 0 : index
    %309 = vector.load %arg3[%c1616, %c0_145] : memref<2304x128xbf16, #tpu.memory_space<vmem>>, vector<64x128xbf16>
    %cst_146 = arith.constant dense<0.000000e+00> : vector<32x128xf32>
    %310 = tpu.matmul %308, %309, %cst_146 {dimension_numbers = #tpu.dot_dimension_numbers<[1], [0], [0], [1], [0, 0, 1, 1], [], []>} : vector<32x64xbf16>, vector<64x128xbf16>, vector<32x128xf32> -> vector<32x128xf32>
    %311 = arith.addf %307, %310 : vector<32x128xf32>
    %c96_147 = arith.constant 96 : index
    %c0_148 = arith.constant 0 : index
    %312 = vector.load %arg4[%c96_147, %c0_148] : memref<120x128xf32, #tpu.memory_space<vmem>>, vector<1x128xf32>
    %313 = vector.broadcast %312 : vector<1x128xf32> to vector<32x128xf32>
    %314 = arith.addf %311, %313 : vector<32x128xf32>
    %c1680 = arith.constant 1680 : index
    %c0_149 = arith.constant 0 : index
    %315 = vector.load %arg3[%c1680, %c0_149] : memref<2304x128xbf16, #tpu.memory_space<vmem>>, vector<128x8xbf16>
    %316 = arith.extf %315 : vector<128x8xbf16> to vector<128x8xf32>
    %c1808 = arith.constant 1808 : index
    %c0_150 = arith.constant 0 : index
    %317 = vector.load %arg3[%c1808, %c0_150] : memref<2304x128xbf16, #tpu.memory_space<vmem>>, vector<8x128xbf16>
    %318 = arith.extf %317 : vector<8x128xbf16> to vector<8x128xf32>
    %c104 = arith.constant 104 : index
    %c0_151 = arith.constant 0 : index
    %319 = vector.load %arg4[%c104, %c0_151] : memref<120x128xf32, #tpu.memory_space<vmem>>, vector<1x128xf32>
    %cst_152 = arith.constant dense<0.000000e+00> : vector<128xf32>
    %320 = vector.multi_reduction <add>, %314, %cst_152 [0] : vector<32x128xf32> to vector<128xf32>
    %321 = vector.shape_cast %320 : vector<128xf32> to vector<1x128xf32>
    %322 = arith.mulf %314, %314 : vector<32x128xf32>
    %cst_153 = arith.constant dense<0.000000e+00> : vector<128xf32>
    %323 = vector.multi_reduction <add>, %322, %cst_153 [0] : vector<32x128xf32> to vector<128xf32>
    %324 = vector.shape_cast %323 : vector<128xf32> to vector<1x128xf32>
    %cst_154 = arith.constant dense<0.000000e+00> : vector<1x8xf32>
    %325 = tpu.matmul %321, %316, %cst_154 {dimension_numbers = #tpu.dot_dimension_numbers<[1], [0], [0], [1], [0, 0, 1, 1], [], []>} : vector<1x128xf32>, vector<128x8xf32>, vector<1x8xf32> -> vector<1x8xf32>
    %cst_155 = arith.constant 5.120000e+02 : f32
    %326 = vector.broadcast %cst_155 : f32 to vector<1x8xf32>
    %327 = arith.divf %325, %326 : vector<1x8xf32>
    %cst_156 = arith.constant dense<0.000000e+00> : vector<1x8xf32>
    %328 = tpu.matmul %324, %316, %cst_156 {dimension_numbers = #tpu.dot_dimension_numbers<[1], [0], [0], [1], [0, 0, 1, 1], [], []>} : vector<1x128xf32>, vector<128x8xf32>, vector<1x8xf32> -> vector<1x8xf32>
    %cst_157 = arith.constant 5.120000e+02 : f32
    %329 = vector.broadcast %cst_157 : f32 to vector<1x8xf32>
    %330 = arith.divf %328, %329 : vector<1x8xf32>
    %331 = arith.mulf %327, %327 : vector<1x8xf32>
    %332 = arith.subf %330, %331 : vector<1x8xf32>
    %cst_158 = arith.constant 0.000000e+00 : f32
    %333 = vector.broadcast %cst_158 : f32 to vector<1x8xf32>
    %334 = arith.maximumf %332, %333 : vector<1x8xf32>
    %cst_159 = arith.constant 9.99999974E-6 : f32
    %335 = vector.broadcast %cst_159 : f32 to vector<1x8xf32>
    %336 = arith.addf %334, %335 : vector<1x8xf32>
    %337 = math.rsqrt %336 : vector<1x8xf32>
    %cst_160 = arith.constant dense<0.000000e+00> : vector<1x128xf32>
    %338 = tpu.matmul %337, %318, %cst_160 {dimension_numbers = #tpu.dot_dimension_numbers<[1], [0], [0], [1], [0, 0, 1, 1], [], []>} : vector<1x8xf32>, vector<8x128xf32>, vector<1x128xf32> -> vector<1x128xf32>
    %339 = arith.mulf %327, %337 : vector<1x8xf32>
    %cst_161 = arith.constant dense<0.000000e+00> : vector<1x128xf32>
    %340 = tpu.matmul %339, %318, %cst_161 {dimension_numbers = #tpu.dot_dimension_numbers<[1], [0], [0], [1], [0, 0, 1, 1], [], []>} : vector<1x8xf32>, vector<8x128xf32>, vector<1x128xf32> -> vector<1x128xf32>
    %341 = arith.subf %319, %340 : vector<1x128xf32>
    %342 = vector.broadcast %338 : vector<1x128xf32> to vector<32x128xf32>
    %343 = arith.mulf %314, %342 : vector<32x128xf32>
    %344 = vector.broadcast %341 : vector<1x128xf32> to vector<32x128xf32>
    %345 = arith.addf %343, %344 : vector<32x128xf32>
    %cst_162 = arith.constant 0.00999999977 : f32
    %346 = vector.broadcast %cst_162 : f32 to vector<32x128xf32>
    %347 = arith.mulf %346, %345 : vector<32x128xf32>
    %348 = arith.maximumf %345, %347 : vector<32x128xf32>
    %349 = arith.truncf %348 : vector<32x128xf32> to vector<32x128xbf16>
    %c1824 = arith.constant 1824 : index
    %c0_163 = arith.constant 0 : index
    %350 = vector.load %arg3[%c1824, %c0_163] : memref<2304x128xbf16, #tpu.memory_space<vmem>>, vector<96x32xbf16>
    %cst_164 = arith.constant dense<0.000000e+00> : vector<96x128xf32>
    %351 = tpu.matmul %350, %349, %cst_164 {dimension_numbers = #tpu.dot_dimension_numbers<[1], [0], [0], [1], [0, 0, 1, 1], [], []>} : vector<96x32xbf16>, vector<32x128xbf16>, vector<96x128xf32> -> vector<96x128xf32>
    %352 = arith.truncf %351 : vector<96x128xf32> to vector<96x128xbf16>
    %353 = vector.extract_strided_slice %352 {offsets = [0, 0], sizes = [32, 128], strides = [1, 1]} : vector<96x128xbf16> to vector<32x128xbf16>
    %c1920 = arith.constant 1920 : index
    %c0_165 = arith.constant 0 : index
    %354 = vector.load %arg3[%c1920, %c0_165] : memref<2304x128xbf16, #tpu.memory_space<vmem>>, vector<128x128xbf16>
    %cst_166 = arith.constant dense<0.000000e+00> : vector<32x128xf32>
    %355 = tpu.matmul %353, %354, %cst_166 {dimension_numbers = #tpu.dot_dimension_numbers<[1], [0], [0], [1], [0, 0, 1, 1], [], []>} : vector<32x128xbf16>, vector<128x128xbf16>, vector<32x128xf32> -> vector<32x128xf32>
    %356 = vector.extract_strided_slice %352 {offsets = [32, 0], sizes = [32, 128], strides = [1, 1]} : vector<96x128xbf16> to vector<32x128xbf16>
    %c2048 = arith.constant 2048 : index
    %c0_167 = arith.constant 0 : index
    %357 = vector.load %arg3[%c2048, %c0_167] : memref<2304x128xbf16, #tpu.memory_space<vmem>>, vector<128x128xbf16>
    %cst_168 = arith.constant dense<0.000000e+00> : vector<32x128xf32>
    %358 = tpu.matmul %356, %357, %cst_168 {dimension_numbers = #tpu.dot_dimension_numbers<[1], [0], [0], [1], [0, 0, 1, 1], [], []>} : vector<32x128xbf16>, vector<128x128xbf16>, vector<32x128xf32> -> vector<32x128xf32>
    %359 = arith.addf %355, %358 : vector<32x128xf32>
    %360 = vector.extract_strided_slice %352 {offsets = [64, 0], sizes = [32, 128], strides = [1, 1]} : vector<96x128xbf16> to vector<32x128xbf16>
    %c2176 = arith.constant 2176 : index
    %c0_169 = arith.constant 0 : index
    %361 = vector.load %arg3[%c2176, %c0_169] : memref<2304x128xbf16, #tpu.memory_space<vmem>>, vector<128x128xbf16>
    %cst_170 = arith.constant dense<0.000000e+00> : vector<32x128xf32>
    %362 = tpu.matmul %360, %361, %cst_170 {dimension_numbers = #tpu.dot_dimension_numbers<[1], [0], [0], [1], [0, 0, 1, 1], [], []>} : vector<32x128xbf16>, vector<128x128xbf16>, vector<32x128xf32> -> vector<32x128xf32>
    %363 = arith.addf %359, %362 : vector<32x128xf32>
    %c112 = arith.constant 112 : index
    %c0_171 = arith.constant 0 : index
    %364 = vector.load %arg4[%c112, %c0_171] : memref<120x128xf32, #tpu.memory_space<vmem>>, vector<1x128xf32>
    %365 = vector.broadcast %364 : vector<1x128xf32> to vector<32x128xf32>
    %366 = arith.addf %363, %365 : vector<32x128xf32>
    %367 = math.tanh %366 : vector<32x128xf32>
    %c0_172 = arith.constant 0 : index
    %c0_173 = arith.constant 0 : index
    %368 = vector.load %arg6[%c0_172, %c0_173] : memref<32x128xf32, #tpu.memory_space<vmem>>, vector<32x128xf32>
    tpu.vector_store %arg6[%c0_172, %c0_173], %367 {strides = array<i32>} : memref<32x128xf32, #tpu.memory_space<vmem>>, vector<32x128xf32>,
    return
  }
  func.func @transform_0(%arg0: i32) -> (i32, i32) {
    %c0_i32 = arith.constant 0 : i32
    %c0_i32_0 = arith.constant 0 : i32
    %c0_i32_1 = arith.constant 0 : i32
    return %c0_i32, %c0_i32_0 : i32, i32
  }
  func.func @transform_1(%arg0: i32) -> (i32, i32) {
    %c0_i32 = arith.constant 0 : i32
    %c0_i32_0 = arith.constant 0 : i32
    %c0_i32_1 = arith.constant 0 : i32
    return %c0_i32, %c0_i32_0 : i32, i32
  }
  func.func @transform_2(%arg0: i32) -> (i32, i32) {
    %c0_i32 = arith.constant 0 : i32
    %c0_i32_0 = arith.constant 0 : i32
    %c0_i32_1 = arith.constant 0 : i32
    return %c0_i32, %c0_i32_0 : i32, i32
  }
  func.func @transform_3(%arg0: i32) -> (i32, i32) {
    %c0_i32 = arith.constant 0 : i32
    %c0_i32_0 = arith.constant 0 : i32
    %c0_i32_1 = arith.constant 0 : i32
    return %c0_i32, %c0_i32_0 : i32, i32
  }
  func.func @transform_4(%arg0: i32) -> (i32, i32) {
    %c0_i32 = arith.constant 0 : i32
    %c0_i32_0 = arith.constant 0 : i32
    %c0_i32_1 = arith.constant 0 : i32
    return %c0_i32, %c0_i32_0 : i32, i32
  }
  func.func @transform_5(%arg0: i32) -> (i32, i32) {
    %c0_i32 = arith.constant 0 : i32
    %c0_i32_0 = arith.constant 0 : i32
    %c0_i32_1 = arith.constant 0 : i32
    return %c0_i32, %c0_i32_0 : i32, i32
  }
}

</mosaic_0001>

<llo_original>
// kernel: vae_forward.1
$region0: #{vae_forward.1}
  #allocation0 [shape = 'u32[]', space=smem, size = 0x4, offset = 0x4, fixed_abs, tag = 'smem constant byte address 0x4 - core index']
  #allocation1 [shape = 'u32[144,128]{1,0:T(1,128)}', space=vmem, size = 0x12000, scoped, tag = 'internal scratch']
  %s0 = inlined_call_operand.vmem [shape: f32[32,16], index: 0, kind: input, shape index: {}]
  %s1 = inlined_call_operand.vmem [shape: f32[2,2], index: 1, kind: input, shape index: {}]
  %s2 = inlined_call_operand.hbm [shape: bf16[2304,128], index: 2, kind: input, shape index: {}]
  %s3 = inlined_call_operand.hbm [shape: f32[120,128], index: 3, kind: input, shape index: {}]
  %s4 = inlined_call_operand.vmem [shape: f32[2,128], index: 4, kind: output, shape index: {0}]
  %s5 = inlined_call_operand.hbm [shape: f32[32,128], index: 5, kind: output, shape index: {1}]
  %6 = xla_tuple %s4, %s5
  %s7 = sld [smem:[#allocation0]]
  $region42: #{vae_forward.1} parent=0
    _
  %s9 = ssub.s32 1, %s7
  %s10 = scalar_select 0, %s9, %s7
  $region1: #{vae_forward.1} parent=0
    #allocation2 [shape = 'u8[589824]{0}', space=vmem, size = 0x90000, scoped, tag = 'input window, operand 2, single buffered']
    #allocation3 [shape = 's32[1]{0}', space=sflag, size = 0x4, scoped, tag = 'scoped memory for vae_forward.1']
    #allocation4 [shape = 's32[1]{0}', space=sflag, size = 0x4, scoped, tag = 'scoped memory for vae_forward.1']
    #allocation5 [shape = 'u8[61440]{0}', space=vmem, size = 0xf000, scoped, tag = 'input window, operand 3, single buffered']
    #allocation6 [shape = 's32[1]{0}', space=sflag, size = 0x4, scoped, tag = 'scoped memory for vae_forward.1']
    #allocation7 [shape = 'u8[16384]{0}', space=vmem, size = 0x4000, scoped, tag = 'output window, operand 1, single buffered']
    %11 = vsyncpa [#allocation3], 0
    %12 = vsyncpa [#allocation6], 0
    %13 = vsyncpa [#allocation4], 0
    // Predicated region
    $region2: #{vae_forward.1} parent=1 // pred_check
      _
    $region3: #{vae_forward.1} parent=1 // pred_check_branch
      %15 = sbr.rel (0) target = $region5
    $region4: #{vae_forward.1} parent=1 // pred_region
      _
    $region5: #{vae_forward.1} parent=1 // pred_fallthru
      _
    // Predicated region
    $region6: #{vae_forward.1} parent=1 // pred_check
      _
    $region7: #{vae_forward.1} parent=1 // pred_check_branch
      %17 = sbr.rel (0) target = $region9
    $region8: #{vae_forward.1} parent=1 // pred_region
      _
    $region9: #{vae_forward.1} parent=1 // pred_fallthru
      _
    // Predicated region
    $region10: #{vae_forward.1} parent=1 // pred_check
      _
    $region11: #{vae_forward.1} parent=1 // pred_check_branch
      %19 = sbr.rel (0) target = $region13
    $region12: #{vae_forward.1} parent=1 // pred_region
      %s21 = ssub.s32 18432, 18432
      %22 = vsyncadd [#allocation3], %s21
      %s23 = sshll.u32 [#allocation2], 4
      %s24 = int_to_ptr.vmem [resolvable:$true] %s23
      %29 = dma.hbm_to_vmem [thread:$0]  %s2, 18432, %s24, [#allocation3], 64, 64, 4
    $region13: #{vae_forward.1} parent=1 // pred_fallthru
      _
    // Predicated region
    $region14: #{vae_forward.1} parent=1 // pred_check
      _
    $region15: #{vae_forward.1} parent=1 // pred_check_branch
      %31 = sbr.rel (0) target = $region17
    $region16: #{vae_forward.1} parent=1 // pred_region
      %s33 = ssub.s32 1920, 1920
      %34 = vsyncadd [#allocation6], %s33
      %s35 = sshll.u32 [#allocation5], 4
      %s36 = int_to_ptr.vmem [resolvable:$true] %s35
      %41 = dma.hbm_to_vmem [thread:$0]  %s3, 1920, %s36, [#allocation6], 128, 128, 8
    $region17: #{vae_forward.1} parent=1 // pred_fallthru
      _
    // Predicated region
    $region18: #{vae_forward.1} parent=1 // pred_check
      _
    $region19: #{vae_forward.1} parent=1 // pred_check_branch
      %43 = sbr.rel (0) target = $region21
    $region20: #{vae_forward.1} parent=1 // pred_region
      %44 = dma.done [#allocation3], 18432
    $region21: #{vae_forward.1} parent=1 // pred_fallthru
      _
    // Predicated region
    $region22: #{vae_forward.1} parent=1 // pred_check
      _
    $region23: #{vae_forward.1} parent=1 // pred_check_branch
      %46 = sbr.rel (0) target = $region25
    $region24: #{vae_forward.1} parent=1 // pred_region
      %47 = dma.done [#allocation6], 1920
    $region25: #{vae_forward.1} parent=1 // pred_fallthru
      _
    %v49 = vld [vmem:[%s0] sm:$0xff]
    %v50 = vld [vmem:[%s0 + $0x8] sm:$0xff]
    %v51 = vld [vmem:[%s0 + $0x10] sm:$0xff]
    %v52 = vld [vmem:[%s0 + $0x18] sm:$0xff]
    %v53 = vpack.c.bf16 %v50, %v49
    %v54 = vpack.c.bf16 %v52, %v51
    %v55 = vld [vmem:[#allocation2] sm:$0xf]
    %v56 = vld [vmem:[#allocation2 + $0x4] sm:$0xf]
    %v57 = vld [vmem:[#allocation2 + $0x8] sm:$0xf]
    %v58 = vld [vmem:[#allocation2 + $0xc] sm:$0xf]
    %v59 = vld [vmem:[#allocation2 + $0x10] sm:$0xf]
    %v60 = vld [vmem:[#allocation2 + $0x14] sm:$0xf]
    %v67 = vunpack.c.l.b16 %v55
    %v68 = vunpack.c.l.b16 %v56
    %v69 = vunpack.c.l.b16 %v57
    %v70 = vunpack.c.l.b16 %v58
    %v71 = vunpack.c.l.b16 %v59
    %v72 = vunpack.c.l.b16 %v60
    %v73 = vpack.c.b16 %v68, %v67
    %v74 = vpack.c.b16 %v70, %v69
    %v75 = vpack.c.b16 %v72, %v71
    %vm76 = vcmask 261120
    %v78 = vsel %vm76, %v73, 0
    %v81 = vsel %vm76, %v74, 0
    %v84 = vsel %vm76, %v75, 0
    %86 = vmatprep.subr.bf16.mxu0 0
    %87 = vmatpush1.bf16.msra.mxu0 0
    %88 = vmatprep.subr.bf16.mxu0 0
    %89 = vmatpush1.bf16.msra.mxu0 0
    %90 = vmatprep.subr.bf16.mxu0 0
    %91 = vmatpush1.bf16.msra.mxu0 0
    %92 = vmatprep.subr.bf16.mxu0 0
    %93 = vmatpush1.bf16.msra.mxu0 0
    %94 = vmatprep.subr.bf16.mxu0 0
    %95 = vmatpush1.bf16.msra.mxu0 0
    %96 = vmatprep.subr.bf16.mxu0 0
    %97 = vmatpush1.bf16.msra.mxu0 0
    %98 = vmatprep.subr.bf16.mxu0 0
    %99 = vmatpush1.bf16.msra.mxu0 %v54
    %100 = vmatprep.subr.bf16.mxu0 0
    %101 = vmatpush1.bf16.msra.mxu0 %v53
    %102 = vmatprep.subr.bf16.mxu0 0
    %103 = vmatpush2.bf16.msra.mxu0 0
    %104 = vmatprep.subr.bf16.mxu0 0
    %105 = vmatpush2.bf16.msra.mxu0 0
    %106 = vmatprep.subr.bf16.mxu0 0
    %107 = vmatpush2.bf16.msra.mxu0 0
    %108 = vmatprep.subr.bf16.mxu0 0
    %109 = vmatpush2.bf16.msra.mxu0 0
    %110 = vmatprep.subr.bf16.mxu0 0
    %111 = vmatpush2.bf16.msra.mxu0 0
    %112 = vmatprep.subr.bf16.mxu0 0
    %113 = vmatpush2.bf16.msra.mxu0 0
    %114 = vmatprep.subr.bf16.mxu0 0
    %115 = vmatpush2.bf16.msra.mxu0 0
    %116 = vmatprep.subr.bf16.mxu0 0
    %117 = vmatpush2.bf16.msra.mxu0 0
    %118 = vmatprep.mubr.bf16.mxu0 0
    %119 = vmatmul.mubr.bf16.gmra.mxu0 %v78
    %v120 = vpop.f32.mrf.mxu0
    %v121 = vadd.f32 0.0, %v120
    %v122 = vpop.f32.mrf.mxu0
    %v123 = vpop.f32.mrf.mxu0
    %v124 = vadd.f32 0.0, %v123
    %v125 = vpop.f32.mrf.mxu0
    %126 = vmatprep.mubr.bf16.mxu0 0
    %127 = vmatmul.mubr.bf16.gmra.mxu0 %v81
    %v128 = vpop.f32.mrf.mxu0
    %v129 = vadd.f32 0.0, %v128
    %v130 = vpop.f32.mrf.mxu0
    %v131 = vpop.f32.mrf.mxu0
    %v132 = vadd.f32 0.0, %v131
    %v133 = vpop.f32.mrf.mxu0
    %134 = vmatprep.mubr.bf16.mxu0 0
    %135 = vmatmul.mubr.bf16.gmra.mxu0 %v84
    %v136 = vpop.f32.mrf.mxu0
    %v137 = vadd.f32 0.0, %v136
    %v138 = vpop.f32.mrf.mxu0
    %v139 = vpop.f32.mrf.mxu0
    %v140 = vadd.f32 0.0, %v139
    %v141 = vpop.f32.mrf.mxu0
    %142 = vdwg.mxu0
    %v143 = vpack.c.bf16 %v124, %v121
    %v144 = vpack.c.bf16 %v132, %v129
    %v145 = vpack.c.bf16 %v140, %v137
    %v146 = vld [vmem:[#allocation2 + $0x18] sm:$0xf]
    %v147 = vld [vmem:[#allocation2 + $0x1c] sm:$0xf]
    %v148 = vld [vmem:[#allocation2 + $0x20] sm:$0xf]
    %v149 = vld [vmem:[#allocation2 + $0x24] sm:$0xf]
    %v152 = vunpack.c.l.b16 %v148
    %v153 = vunpack.c.l.b16 %v149
    %v154 = vpack.c.b16 %v153, %v152
    %vm156 = vcmask 130048
    %v158 = vsel %vm156, %v144, 0
    %160 = vmatprep.subr.bf16.mxu0 0
    %161 = vmatpush1.bf16.msra.mxu0 0
    %162 = vmatprep.subr.bf16.mxu0 0
    %163 = vmatpush1.bf16.msra.mxu0 0
    %164 = vmatprep.subr.bf16.mxu0 0
    %165 = vmatpush1.bf16.msra.mxu0 0
    %166 = vmatprep.subr.bf16.mxu0 0
    %167 = vmatpush1.bf16.msra.mxu0 0
    %168 = vmatprep.subr.bf16.mxu0 0
    %169 = vmatpush1.bf16.msra.mxu0 0
    %170 = vmatprep.subr.bf16.mxu0 0
    %171 = vmatpush1.bf16.msra.mxu0 0
    %172 = vmatprep.subr.bf16.mxu0 0
    %173 = vmatpush1.bf16.msra.mxu0 0
    %174 = vmatprep.subr.bf16.mxu0 0
    %175 = vmatpush1.bf16.msra.mxu0 %v154
    %176 = vmatprep.subr.bf16.mxu0 0
    %177 = vmatpush2.bf16.msra.mxu0 0
    %178 = vmatprep.subr.bf16.mxu0 0
    %179 = vmatpush2.bf16.msra.mxu0 0
    %180 = vmatprep.subr.bf16.mxu0 0
    %181 = vmatpush2.bf16.msra.mxu0 0
    %182 = vmatprep.subr.bf16.mxu0 0
    %183 = vmatpush2.bf16.msra.mxu0 0
    %184 = vmatprep.subr.bf16.mxu0 0
    %185 = vmatpush2.bf16.msra.mxu0 0
    %186 = vmatprep.subr.bf16.mxu0 0
    %187 = vmatpush2.bf16.msra.mxu0 0
    %188 = vmatprep.subr.bf16.mxu0 0
    %189 = vmatpush2.bf16.msra.mxu0 0
    %190 = vmatprep.subr.bf16.mxu0 0
    %191 = vmatpush2.bf16.msra.mxu0 0
    %192 = vmatprep.mubr.bf16.mxu0 0
    %193 = vmatmul.mubr.bf16.gmra.mxu0 %v158
    %v194 = vpop.f32.mrf.mxu0
    %v195 = vadd.f32 0.0, %v194
    %v196 = vpop.f32.mrf.mxu0
    %v197 = vpop.f32.mrf.mxu0
    %v198 = vadd.f32 0.0, %v197
    %v199 = vpop.f32.mrf.mxu0
    %200 = vdwg.mxu0
    %v203 = vunpack.c.l.b16 %v146
    %v204 = vunpack.c.l.b16 %v147
    %v205 = vpack.c.b16 %v204, %v203
    %v208 = vsel %vm156, %v143, 0
    %210 = vmatprep.subr.bf16.mxu0 0
    %211 = vmatpush1.bf16.msra.mxu0 0
    %212 = vmatprep.subr.bf16.mxu0 0
    %213 = vmatpush1.bf16.msra.mxu0 0
    %214 = vmatprep.subr.bf16.mxu0 0
    %215 = vmatpush1.bf16.msra.mxu0 0
    %216 = vmatprep.subr.bf16.mxu0 0
    %217 = vmatpush1.bf16.msra.mxu0 0
    %218 = vmatprep.subr.bf16.mxu0 0
    %219 = vmatpush1.bf16.msra.mxu0 0
    %220 = vmatprep.subr.bf16.mxu0 0
    %221 = vmatpush1.bf16.msra.mxu0 0
    %222 = vmatprep.subr.bf16.mxu0 0
    %223 = vmatpush1.bf16.msra.mxu0 0
    %224 = vmatprep.subr.bf16.mxu0 0
    %225 = vmatpush1.bf16.msra.mxu0 %v205
    %226 = vmatprep.subr.bf16.mxu0 0
    %227 = vmatpush2.bf16.msra.mxu0 0
    %228 = vmatprep.subr.bf16.mxu0 0
    %229 = vmatpush2.bf16.msra.mxu0 0
    %230 = vmatprep.subr.bf16.mxu0 0
    %231 = vmatpush2.bf16.msra.mxu0 0
    %232 = vmatprep.subr.bf16.mxu0 0
    %233 = vmatpush2.bf16.msra.mxu0 0
    %234 = vmatprep.subr.bf16.mxu0 0
    %235 = vmatpush2.bf16.msra.mxu0 0
    %236 = vmatprep.subr.bf16.mxu0 0
    %237 = vmatpush2.bf16.msra.mxu0 0
    %238 = vmatprep.subr.bf16.mxu0 0
    %239 = vmatpush2.bf16.msra.mxu0 0
    %240 = vmatprep.subr.bf16.mxu0 0
    %241 = vmatpush2.bf16.msra.mxu0 0
    %242 = vmatprep.mubr.bf16.mxu0 0
    %243 = vmatmul.mubr.bf16.gmra.mxu0 %v208
    %v244 = vpop.f32.mrf.mxu0
    %v245 = vadd.f32 %v195, %v244
    %v246 = vpop.f32.mrf.mxu0
    %v247 = vpop.f32.mrf.mxu0
    %v248 = vadd.f32 %v198, %v247
    %v249 = vpop.f32.mrf.mxu0
    %250 = vdwg.mxu0
    %v251 = vld [vmem:[#allocation2 + $0x28] sm:$0xf]
    %v252 = vld [vmem:[#allocation2 + $0x2c] sm:$0xf]
    %v255 = vunpack.c.l.b16 %v251
    %v256 = vunpack.c.l.b16 %v252
    %v257 = vpack.c.b16 %v256, %v255
    %v260 = vsel %vm156, %v145, 0
    %262 = vmatprep.subr.bf16.mxu0 0
    %263 = vmatpush1.bf16.msra.mxu0 0
    %264 = vmatprep.subr.bf16.mxu0 0
    %265 = vmatpush1.bf16.msra.mxu0 0
    %266 = vmatprep.subr.bf16.mxu0 0
    %267 = vmatpush1.bf16.msra.mxu0 0
    %268 = vmatprep.subr.bf16.mxu0 0
    %269 = vmatpush1.bf16.msra.mxu0 0
    %270 = vmatprep.subr.bf16.mxu0 0
    %271 = vmatpush1.bf16.msra.mxu0 0
    %272 = vmatprep.subr.bf16.mxu0 0
    %273 = vmatpush1.bf16.msra.mxu0 0
    %274 = vmatprep.subr.bf16.mxu0 0
    %275 = vmatpush1.bf16.msra.mxu0 0
    %276 = vmatprep.subr.bf16.mxu0 0
    %277 = vmatpush1.bf16.msra.mxu0 %v257
    %278 = vmatprep.subr.bf16.mxu0 0
    %279 = vmatpush2.bf16.msra.mxu0 0
    %280 = vmatprep.subr.bf16.mxu0 0
    %281 = vmatpush2.bf16.msra.mxu0 0
    %282 = vmatprep.subr.bf16.mxu0 0
    %283 = vmatpush2.bf16.msra.mxu0 0
    %284 = vmatprep.subr.bf16.mxu0 0
    %285 = vmatpush2.bf16.msra.mxu0 0
    %286 = vmatprep.subr.bf16.mxu0 0
    %287 = vmatpush2.bf16.msra.mxu0 0
    %288 = vmatprep.subr.bf16.mxu0 0
    %289 = vmatpush2.bf16.msra.mxu0 0
    %290 = vmatprep.subr.bf16.mxu0 0
    %291 = vmatpush2.bf16.msra.mxu0 0
    %292 = vmatprep.subr.bf16.mxu0 0
    %293 = vmatpush2.bf16.msra.mxu0 0
    %294 = vmatprep.mubr.bf16.mxu0 0
    %295 = vmatmul.mubr.bf16.gmra.mxu0 %v260
    %v296 = vpop.f32.mrf.mxu0
    %v297 = vadd.f32 0.0, %v296
    %v298 = vpop.f32.mrf.mxu0
    %v299 = vpop.f32.mrf.mxu0
    %v300 = vadd.f32 0.0, %v299
    %v301 = vpop.f32.mrf.mxu0
    %302 = vdwg.mxu0
    %v303 = vadd.f32 %v245, %v297
    %v304 = vadd.f32 %v248, %v300
    %v305 = vld [vmem:[#allocation5] sm:$0x1]
    %v306 = vlaneseq
    %v307 = vshrl.u32 %v306, 7
    %v308 = vsub.s32 0, %v307
    %v309 = vrot.slane %v305, %v308
    %v310 = vadd.f32 %v303, %v309
    %v311 = vadd.f32 %v304, %v309
    %v312 = vld [vmem:[#allocation2 + $0x30] sm:$0xf]
    %v313 = vld [vmem:[#allocation2 + $0x34] sm:$0xf]
    %v314 = vld [vmem:[#allocation2 + $0x38] sm:$0xf]
    %v315 = vld [vmem:[#allocation2 + $0x3c] sm:$0xf]
    %v316 = vld [vmem:[#allocation2 + $0x40] sm:$0xf]
    %v317 = vld [vmem:[#allocation2 + $0x44] sm:$0xf]
    %v318 = vld [vmem:[#allocation2 + $0x48] sm:$0xf]
    %v319 = vld [vmem:[#allocation2 + $0x4c] sm:$0xf]
    %v320 = vunpack.c.l.bf16 %v312
    %v321 = vunpack.c.l.bf16 %v313
    %v322 = vunpack.c.l.bf16 %v314
    %v323 = vunpack.c.l.bf16 %v315
    %v324 = vunpack.c.l.bf16 %v316
    %v325 = vunpack.c.l.bf16 %v317
    %v326 = vunpack.c.l.bf16 %v318
    %v327 = vunpack.c.l.bf16 %v319
    %v328 = vld [vmem:[#allocation2 + $0x50] sm:$0xf]
    %v329 = vunpack.c.l.bf16 %v328
    %v330 = vld [vmem:[#allocation5 + $0x8] sm:$0x1]
    %vm331 = vcmask 523264
    %v332 = vsel %vm331, %v310, 0.0
    %v333 = vsel %vm331, %v311, 0.0
    %v334 = vadd.f32 %v332, %v333
    %v335 = vrot.slane %v334, 4
    %v336 = vadd.f32 %v334, %v335
    %v337 = vrot.slane %v336, 2
    %v338 = vadd.f32 %v336, %v337
    %v339 = vrot.slane %v338, 1
    %v340 = vadd.f32 %v338, %v339
    %v341 = vmul.f32 %v310, %v310
    %v342 = vmul.f32 %v311, %v311
    %v343 = vsel %vm331, %v341, 0.0
    %v344 = vsel %vm331, %v342, 0.0
    %v345 = vadd.f32 %v343, %v344
    %v346 = vrot.slane %v345, 4
    %v347 = vadd.f32 %v345, %v346
    %v348 = vrot.slane %v347, 2
    %v349 = vadd.f32 %v347, %v348
    %v350 = vrot.slane %v349, 1
    %v351 = vadd.f32 %v349, %v350
    %v353 = vsel %vm331, %v340, 0
    %355 = vmatprep.subr.mxu0 0.0
    %356 = vmatpush1.msra.mxu0 0.0
    %357 = vmatprep.subr.mxu0 0.0
    %358 = vmatpush1.msra.mxu0 0.0
    %359 = vmatprep.subr.mxu0 0.0
    %360 = vmatpush1.msra.mxu0 0.0
    %361 = vmatprep.subr.mxu0 0.0
    %362 = vmatpush1.msra.mxu0 0.0
    %363 = vmatprep.subr.mxu0 0.0
    %364 = vmatpush1.msra.mxu0 0.0
    %365 = vmatprep.subr.mxu0 0.0
    %366 = vmatpush1.msra.mxu0 0.0
    %367 = vmatprep.subr.mxu0 0.0
    %368 = vmatpush1.msra.mxu0 0.0
    %369 = vmatprep.subr.mxu0 0.0
    %370 = vmatpush1.msra.mxu0 0.0
    %371 = vmatprep.subr.mxu0 0.0
    %372 = vmatpush1.msra.mxu0 %v327
    %373 = vmatprep.subr.mxu0 0.0
    %374 = vmatpush1.msra.mxu0 %v326
    %375 = vmatprep.subr.mxu0 0.0
    %376 = vmatpush1.msra.mxu0 %v325
    %377 = vmatprep.subr.mxu0 0.0
    %378 = vmatpush1.msra.mxu0 %v324
    %379 = vmatprep.subr.mxu0 0.0
    %380 = vmatpush1.msra.mxu0 %v323
    %381 = vmatprep.subr.mxu0 0.0
    %382 = vmatpush1.msra.mxu0 %v322
    %383 = vmatprep.subr.mxu0 0.0
    %384 = vmatpush1.msra.mxu0 %v321
    %385 = vmatprep.subr.mxu0 0.0
    %386 = vmatpush1.msra.mxu0 %v320
    %387 = vmatprep.subr.mxu0 0.0
    %388 = vmatpush2.msra.mxu0 0.0
    %389 = vmatprep.subr.mxu0 0.0
    %390 = vmatpush2.msra.mxu0 0.0
    %391 = vmatprep.subr.mxu0 0.0
    %392 = vmatpush2.msra.mxu0 0.0
    %393 = vmatprep.subr.mxu0 0.0
    %394 = vmatpush2.msra.mxu0 0.0
    %395 = vmatprep.subr.mxu0 0.0
    %396 = vmatpush2.msra.mxu0 0.0
    %397 = vmatprep.subr.mxu0 0.0
    %398 = vmatpush2.msra.mxu0 0.0
    %399 = vmatprep.subr.mxu0 0.0
    %400 = vmatpush2.msra.mxu0 0.0
    %401 = vmatprep.subr.mxu0 0.0
    %402 = vmatpush2.msra.mxu0 0.0
    %403 = vmatprep.subr.mxu0 0.0
    %404 = vmatpush2.msra.mxu0 0.0
    %405 = vmatprep.subr.mxu0 0.0
    %406 = vmatpush2.msra.mxu0 0.0
    %407 = vmatprep.subr.mxu0 0.0
    %408 = vmatpush2.msra.mxu0 0.0
    %409 = vmatprep.subr.mxu0 0.0
    %410 = vmatpush2.msra.mxu0 0.0
    %411 = vmatprep.subr.mxu0 0.0
    %412 = vmatpush2.msra.mxu0 0.0
    %413 = vmatprep.subr.mxu0 0.0
    %414 = vmatpush2.msra.mxu0 0.0
    %415 = vmatprep.subr.mxu0 0.0
    %416 = vmatpush2.msra.mxu0 0.0
    %417 = vmatprep.subr.mxu0 0.0
    %418 = vmatpush2.msra.mxu0 0.0
    %419 = vmatprep.mubr.f32.mxu0 0.0
    %420 = vmatmul.mubr.f32.gmra.mxu0 %v353
    %v421 = vpop.f32.mrf.mxu0
    %v422 = vadd.f32 0.0, %v421
    %v423 = vpop.f32.mrf.mxu0
    %424 = vdwg.mxu0
    %v425 = vrcp.pop 128.0
    %v426 = vmul.f32 %v422, %v425
    %v428 = vsel %vm331, %v351, 0
    %430 = vmatprep.subr.mxu0 0.0
    %431 = vmatpush1.msra.mxu0 0.0
    %432 = vmatprep.subr.mxu0 0.0
    %433 = vmatpush1.msra.mxu0 0.0
    %434 = vmatprep.subr.mxu0 0.0
    %435 = vmatpush1.msra.mxu0 0.0
    %436 = vmatprep.subr.mxu0 0.0
    %437 = vmatpush1.msra.mxu0 0.0
    %438 = vmatprep.subr.mxu0 0.0
    %439 = vmatpush1.msra.mxu0 0.0
    %440 = vmatprep.subr.mxu0 0.0
    %441 = vmatpush1.msra.mxu0 0.0
    %442 = vmatprep.subr.mxu0 0.0
    %443 = vmatpush1.msra.mxu0 0.0
    %444 = vmatprep.subr.mxu0 0.0
    %445 = vmatpush1.msra.mxu0 0.0
    %446 = vmatprep.subr.mxu0 0.0
    %447 = vmatpush1.msra.mxu0 %v327
    %448 = vmatprep.subr.mxu0 0.0
    %449 = vmatpush1.msra.mxu0 %v326
    %450 = vmatprep.subr.mxu0 0.0
    %451 = vmatpush1.msra.mxu0 %v325
    %452 = vmatprep.subr.mxu0 0.0
    %453 = vmatpush1.msra.mxu0 %v324
    %454 = vmatprep.subr.mxu0 0.0
    %455 = vmatpush1.msra.mxu0 %v323
    %456 = vmatprep.subr.mxu0 0.0
    %457 = vmatpush1.msra.mxu0 %v322
    %458 = vmatprep.subr.mxu0 0.0
    %459 = vmatpush1.msra.mxu0 %v321
    %460 = vmatprep.subr.mxu0 0.0
    %461 = vmatpush1.msra.mxu0 %v320
    %462 = vmatprep.subr.mxu0 0.0
    %463 = vmatpush2.msra.mxu0 0.0
    %464 = vmatprep.subr.mxu0 0.0
    %465 = vmatpush2.msra.mxu0 0.0
    %466 = vmatprep.subr.mxu0 0.0
    %467 = vmatpush2.msra.mxu0 0.0
    %468 = vmatprep.subr.mxu0 0.0
    %469 = vmatpush2.msra.mxu0 0.0
    %470 = vmatprep.subr.mxu0 0.0
    %471 = vmatpush2.msra.mxu0 0.0
    %472 = vmatprep.subr.mxu0 0.0
    %473 = vmatpush2.msra.mxu0 0.0
    %474 = vmatprep.subr.mxu0 0.0
    %475 = vmatpush2.msra.mxu0 0.0
    %476 = vmatprep.subr.mxu0 0.0
    %477 = vmatpush2.msra.mxu0 0.0
    %478 = vmatprep.subr.mxu0 0.0
    %479 = vmatpush2.msra.mxu0 0.0
    %480 = vmatprep.subr.mxu0 0.0
    %481 = vmatpush2.msra.mxu0 0.0
    %482 = vmatprep.subr.mxu0 0.0
    %483 = vmatpush2.msra.mxu0 0.0
    %484 = vmatprep.subr.mxu0 0.0
    %485 = vmatpush2.msra.mxu0 0.0
    %486 = vmatprep.subr.mxu0 0.0
    %487 = vmatpush2.msra.mxu0 0.0
    %488 = vmatprep.subr.mxu0 0.0
    %489 = vmatpush2.msra.mxu0 0.0
    %490 = vmatprep.subr.mxu0 0.0
    %491 = vmatpush2.msra.mxu0 0.0
    %492 = vmatprep.subr.mxu0 0.0
    %493 = vmatpush2.msra.mxu0 0.0
    %494 = vmatprep.mubr.f32.mxu0 0.0
    %495 = vmatmul.mubr.f32.gmra.mxu0 %v428
    %v496 = vpop.f32.mrf.mxu0
    %v497 = vadd.f32 0.0, %v496
    %v498 = vpop.f32.mrf.mxu0
    %499 = vdwg.mxu0
    %v500 = vmul.f32 %v497, %v425
    %v501 = vmul.f32 %v426, %v426
    %v502 = vsub.f32 %v500, %v501
    %v503 = vmax.f32 %v502, 0.0
    %v504 = vadd.f32 %v503, 1e-05
    %v505 = vrsqrt.pop %v504
    %vm506 = vcmask 64512
    %v508 = vsel %vm506, %v505, 0
    %510 = vmatprep.subr.mxu0 0.0
    %511 = vmatpush1.msra.mxu0 0.0
    %512 = vmatprep.subr.mxu0 0.0
    %513 = vmatpush1.msra.mxu0 0.0
    %514 = vmatprep.subr.mxu0 0.0
    %515 = vmatpush1.msra.mxu0 0.0
    %516 = vmatprep.subr.mxu0 0.0
    %517 = vmatpush1.msra.mxu0 0.0
    %518 = vmatprep.subr.mxu0 0.0
    %519 = vmatpush1.msra.mxu0 0.0
    %520 = vmatprep.subr.mxu0 0.0
    %521 = vmatpush1.msra.mxu0 0.0
    %522 = vmatprep.subr.mxu0 0.0
    %523 = vmatpush1.msra.mxu0 0.0
    %524 = vmatprep.subr.mxu0 0.0
    %525 = vmatpush1.msra.mxu0 0.0
    %526 = vmatprep.subr.mxu0 0.0
    %527 = vmatpush1.msra.mxu0 0.0
    %528 = vmatprep.subr.mxu0 0.0
    %529 = vmatpush1.msra.mxu0 0.0
    %530 = vmatprep.subr.mxu0 0.0
    %531 = vmatpush1.msra.mxu0 0.0
    %532 = vmatprep.subr.mxu0 0.0
    %533 = vmatpush1.msra.mxu0 0.0
    %534 = vmatprep.subr.mxu0 0.0
    %535 = vmatpush1.msra.mxu0 0.0
    %536 = vmatprep.subr.mxu0 0.0
    %537 = vmatpush1.msra.mxu0 0.0
    %538 = vmatprep.subr.mxu0 0.0
    %539 = vmatpush1.msra.mxu0 0.0
    %540 = vmatprep.subr.mxu0 0.0
    %541 = vmatpush1.msra.mxu0 %v329
    %542 = vmatprep.subr.mxu0 0.0
    %543 = vmatpush2.msra.mxu0 0.0
    %544 = vmatprep.subr.mxu0 0.0
    %545 = vmatpush2.msra.mxu0 0.0
    %546 = vmatprep.subr.mxu0 0.0
    %547 = vmatpush2.msra.mxu0 0.0
    %548 = vmatprep.subr.mxu0 0.0
    %549 = vmatpush2.msra.mxu0 0.0
    %550 = vmatprep.subr.mxu0 0.0
    %551 = vmatpush2.msra.mxu0 0.0
    %552 = vmatprep.subr.mxu0 0.0
    %553 = vmatpush2.msra.mxu0 0.0
    %554 = vmatprep.subr.mxu0 0.0
    %555 = vmatpush2.msra.mxu0 0.0
    %556 = vmatprep.subr.mxu0 0.0
    %557 = vmatpush2.msra.mxu0 0.0
    %558 = vmatprep.subr.mxu0 0.0
    %559 = vmatpush2.msra.mxu0 0.0
    %560 = vmatprep.subr.mxu0 0.0
    %561 = vmatpush2.msra.mxu0 0.0
    %562 = vmatprep.subr.mxu0 0.0
    %563 = vmatpush2.msra.mxu0 0.0
    %564 = vmatprep.subr.mxu0 0.0
    %565 = vmatpush2.msra.mxu0 0.0
    %566 = vmatprep.subr.mxu0 0.0
    %567 = vmatpush2.msra.mxu0 0.0
    %568 = vmatprep.subr.mxu0 0.0
    %569 = vmatpush2.msra.mxu0 0.0
    %570 = vmatprep.subr.mxu0 0.0
    %571 = vmatpush2.msra.mxu0 0.0
    %572 = vmatprep.subr.mxu0 0.0
    %573 = vmatpush2.msra.mxu0 0.0
    %574 = vmatprep.mubr.f32.mxu0 0.0
    %575 = vmatmul.mubr.f32.gmra.mxu0 %v508
    %v576 = vpop.f32.mrf.mxu0
    %v577 = vadd.f32 0.0, %v576
    %v578 = vpop.f32.mrf.mxu0
    %579 = vdwg.mxu0
    %v580 = vmul.f32 %v426, %v505
    %v582 = vsel %vm506, %v580, 0
    %584 = vmatprep.subr.mxu0 0.0
    %585 = vmatpush1.msra.mxu0 0.0
    %586 = vmatprep.subr.mxu0 0.0
    %587 = vmatpush1.msra.mxu0 0.0
    %588 = vmatprep.subr.mxu0 0.0
    %589 = vmatpush1.msra.mxu0 0.0
    %590 = vmatprep.subr.mxu0 0.0
    %591 = vmatpush1.msra.mxu0 0.0
    %592 = vmatprep.subr.mxu0 0.0
    %593 = vmatpush1.msra.mxu0 0.0
    %594 = vmatprep.subr.mxu0 0.0
    %595 = vmatpush1.msra.mxu0 0.0
    %596 = vmatprep.subr.mxu0 0.0
    %597 = vmatpush1.msra.mxu0 0.0
    %598 = vmatprep.subr.mxu0 0.0
    %599 = vmatpush1.msra.mxu0 0.0
    %600 = vmatprep.subr.mxu0 0.0
    %601 = vmatpush1.msra.mxu0 0.0
    %602 = vmatprep.subr.mxu0 0.0
    %603 = vmatpush1.msra.mxu0 0.0
    %604 = vmatprep.subr.mxu0 0.0
    %605 = vmatpush1.msra.mxu0 0.0
    %606 = vmatprep.subr.mxu0 0.0
    %607 = vmatpush1.msra.mxu0 0.0
    %608 = vmatprep.subr.mxu0 0.0
    %609 = vmatpush1.msra.mxu0 0.0
    %610 = vmatprep.subr.mxu0 0.0
    %611 = vmatpush1.msra.mxu0 0.0
    %612 = vmatprep.subr.mxu0 0.0
    %613 = vmatpush1.msra.mxu0 0.0
    %614 = vmatprep.subr.mxu0 0.0
    %615 = vmatpush1.msra.mxu0 %v329
    %616 = vmatprep.subr.mxu0 0.0
    %617 = vmatpush2.msra.mxu0 0.0
    %618 = vmatprep.subr.mxu0 0.0
    %619 = vmatpush2.msra.mxu0 0.0
    %620 = vmatprep.subr.mxu0 0.0
    %621 = vmatpush2.msra.mxu0 0.0
    %622 = vmatprep.subr.mxu0 0.0
    %623 = vmatpush2.msra.mxu0 0.0
    %624 = vmatprep.subr.mxu0 0.0
    %625 = vmatpush2.msra.mxu0 0.0
    %626 = vmatprep.subr.mxu0 0.0
    %627 = vmatpush2.msra.mxu0 0.0
    %628 = vmatprep.subr.mxu0 0.0
    %629 = vmatpush2.msra.mxu0 0.0
    %630 = vmatprep.subr.mxu0 0.0
    %631 = vmatpush2.msra.mxu0 0.0
    %632 = vmatprep.subr.mxu0 0.0
    %633 = vmatpush2.msra.mxu0 0.0
    %634 = vmatprep.subr.mxu0 0.0
    %635 = vmatpush2.msra.mxu0 0.0
    %636 = vmatprep.subr.mxu0 0.0
    %637 = vmatpush2.msra.mxu0 0.0
    %638 = vmatprep.subr.mxu0 0.0
    %639 = vmatpush2.msra.mxu0 0.0
    %640 = vmatprep.subr.mxu0 0.0
    %641 = vmatpush2.msra.mxu0 0.0
    %642 = vmatprep.subr.mxu0 0.0
    %643 = vmatpush2.msra.mxu0 0.0
    %644 = vmatprep.subr.mxu0 0.0
    %645 = vmatpush2.msra.mxu0 0.0
    %646 = vmatprep.subr.mxu0 0.0
    %647 = vmatpush2.msra.mxu0 0.0
    %648 = vmatprep.mubr.f32.mxu0 0.0
    %649 = vmatmul.mubr.f32.gmra.mxu0 %v582
    %v650 = vpop.f32.mrf.mxu0
    %v651 = vadd.f32 0.0, %v650
    %v652 = vpop.f32.mrf.mxu0
    %653 = vdwg.mxu0
    %v654 = vsub.f32 %v330, %v651
    %v655 = vlaneseq
    %v656 = vshrl.u32 %v655, 7
    %v657 = vsub.s32 0, %v656
    %v658 = vrot.slane %v577, %v657
    %v659 = vmul.f32 %v310, %v658
    %v660 = vmul.f32 %v311, %v658
    %v661 = vlaneseq
    %v662 = vshrl.u32 %v661, 7
    %v663 = vsub.s32 0, %v662
    %v664 = vrot.slane %v654, %v663
    %v665 = vadd.f32 %v659, %v664
    %v666 = vadd.f32 %v660, %v664
    %v667 = vmul.f32 %v665, 0.01
    %v668 = vmul.f32 %v666, 0.01
    %v669 = vmax.f32 %v665, %v667
    %v670 = vmax.f32 %v666, %v668
    %v671 = vpack.c.bf16 %v670, %v669
    %v672 = vld [vmem:[#allocation2 + $0x58] sm:$0xf]
    %v673 = vld [vmem:[#allocation2 + $0x5c] sm:$0xf]
    %v674 = vld [vmem:[#allocation2 + $0x60] sm:$0xf]
    %v678 = vunpack.c.l.b16 %v672
    %v679 = vunpack.c.l.b16 %v673
    %v680 = vunpack.c.l.b16 %v674
    %v681 = vpack.c.b16 %v679, %v678
    %v682 = vpack.c.b16 %v680, %v680
    %v684 = vsel %vm156, %v681, 0
    %v687 = vsel %vm156, %v682, 0
    %689 = vmatprep.subr.bf16.mxu0 0
    %690 = vmatpush1.bf16.msra.mxu0 0
    %691 = vmatprep.subr.bf16.mxu0 0
    %692 = vmatpush1.bf16.msra.mxu0 0
    %693 = vmatprep.subr.bf16.mxu0 0
    %694 = vmatpush1.bf16.msra.mxu0 0
    %695 = vmatprep.subr.bf16.mxu0 0
    %696 = vmatpush1.bf16.msra.mxu0 0
    %697 = vmatprep.subr.bf16.mxu0 0
    %698 = vmatpush1.bf16.msra.mxu0 0
    %699 = vmatprep.subr.bf16.mxu0 0
    %700 = vmatpush1.bf16.msra.mxu0 0
    %701 = vmatprep.subr.bf16.mxu0 0
    %702 = vmatpush1.bf16.msra.mxu0 0
    %703 = vmatprep.subr.bf16.mxu0 0
    %704 = vmatpush1.bf16.msra.mxu0 %v671
    %705 = vmatprep.subr.bf16.mxu0 0
    %706 = vmatpush2.bf16.msra.mxu0 0
    %707 = vmatprep.subr.bf16.mxu0 0
    %708 = vmatpush2.bf16.msra.mxu0 0
    %709 = vmatprep.subr.bf16.mxu0 0
    %710 = vmatpush2.bf16.msra.mxu0 0
    %711 = vmatprep.subr.bf16.mxu0 0
    %712 = vmatpush2.bf16.msra.mxu0 0
    %713 = vmatprep.subr.bf16.mxu0 0
    %714 = vmatpush2.bf16.msra.mxu0 0
    %715 = vmatprep.subr.bf16.mxu0 0
    %716 = vmatpush2.bf16.msra.mxu0 0
    %717 = vmatprep.subr.bf16.mxu0 0
    %718 = vmatpush2.bf16.msra.mxu0 0
    %719 = vmatprep.subr.bf16.mxu0 0
    %720 = vmatpush2.bf16.msra.mxu0 0
    %721 = vmatprep.mubr.bf16.mxu0 0
    %722 = vmatmul.mubr.bf16.gmra.mxu0 %v684
    %v723 = vpop.f32.mrf.mxu0
    %v724 = vadd.f32 0.0, %v723
    %v725 = vpop.f32.mrf.mxu0
    %v726 = vpop.f32.mrf.mxu0
    %v727 = vadd.f32 0.0, %v726
    %v728 = vpop.f32.mrf.mxu0
    %729 = vmatprep.mubr.bf16.mxu0 0
    %730 = vmatmul.mubr.bf16.gmra.mxu0 %v687
    %v731 = vpop.f32.mrf.mxu0
    %v732 = vadd.f32 0.0, %v731
    %v733 = vpop.f32.mrf.mxu0
    %v734 = vpop.f32.mrf.mxu0
    %v735 = vpop.f32.mrf.mxu0
    %736 = vdwg.mxu0
    %v737 = vpack.c.bf16 %v727, %v724
    %v738 = vpack.c.bf16 %v732, %v732
    %v739 = vld [vmem:[#allocation2 + $0x68] sm:$0xf]
    %v740 = vld [vmem:[#allocation2 + $0x6c] sm:$0xf]
    %v741 = vld [vmem:[#allocation2 + $0x70] sm:$0xf]
    %v742 = vld [vmem:[#allocation2 + $0x74] sm:$0xf]
    %v743 = vld [vmem:[#allocation2 + $0x78] sm:$0xf]
    %v744 = vld [vmem:[#allocation2 + $0x7c] sm:$0xf]
    %v745 = vld [vmem:[#allocation2 + $0x80] sm:$0xf]
    %v746 = vld [vmem:[#allocation2 + $0x84] sm:$0xf]
    %v747 = vld [vmem:[#allocation2 + $0x88] sm:$0xf]
    %v748 = vld [vmem:[#allocation2 + $0x8c] sm:$0xf]
    %v749 = vld [vmem:[#allocation2 + $0x90] sm:$0xf]
    %v750 = vld [vmem:[#allocation2 + $0x94] sm:$0xf]
    %v751 = vld [vmem:[#allocation2 + $0x98] sm:$0xf]
    %v752 = vld [vmem:[#allocation2 + $0x9c] sm:$0xf]
    %v753 = vld [vmem:[#allocation2 + $0xa0] sm:$0xf]
    %v754 = vld [vmem:[#allocation2 + $0xa4] sm:$0xf]
    %v756 = vrot.slane %v737, 4
    %v765 = vunpack.c.l.b16 %v747
    %v766 = vunpack.c.l.b16 %v748
    %v767 = vunpack.c.l.b16 %v749
    %v768 = vunpack.c.l.b16 %v750
    %v769 = vunpack.c.l.b16 %v751
    %v770 = vunpack.c.l.b16 %v752
    %v771 = vunpack.c.l.b16 %v753
    %v772 = vunpack.c.l.b16 %v754
    %v773 = vpack.c.b16 %v766, %v765
    %v774 = vpack.c.b16 %v768, %v767
    %v775 = vpack.c.b16 %v770, %v769
    %v776 = vpack.c.b16 %v772, %v771
    %v782 = vsel %vm331, %v756, 0
    %784 = vmatprep.subr.bf16.mxu0 0
    %785 = vmatpush1.bf16.msra.mxu0 0
    %786 = vmatprep.subr.bf16.mxu0 0
    %787 = vmatpush1.bf16.msra.mxu0 0
    %788 = vmatprep.subr.bf16.mxu0 0
    %789 = vmatpush1.bf16.msra.mxu0 0
    %790 = vmatprep.subr.bf16.mxu0 0
    %791 = vmatpush1.bf16.msra.mxu0 0
    %792 = vmatprep.subr.bf16.mxu0 0
    %793 = vmatpush1.bf16.msra.mxu0 %v776
    %794 = vmatprep.subr.bf16.mxu0 0
    %795 = vmatpush1.bf16.msra.mxu0 %v775
    %796 = vmatprep.subr.bf16.mxu0 0
    %797 = vmatpush1.bf16.msra.mxu0 %v774
    %798 = vmatprep.subr.bf16.mxu0 0
    %799 = vmatpush1.bf16.msra.mxu0 %v773
    %800 = vmatprep.subr.bf16.mxu0 0
    %801 = vmatpush2.bf16.msra.mxu0 0
    %802 = vmatprep.subr.bf16.mxu0 0
    %803 = vmatpush2.bf16.msra.mxu0 0
    %804 = vmatprep.subr.bf16.mxu0 0
    %805 = vmatpush2.bf16.msra.mxu0 0
    %806 = vmatprep.subr.bf16.mxu0 0
    %807 = vmatpush2.bf16.msra.mxu0 0
    %808 = vmatprep.subr.bf16.mxu0 0
    %809 = vmatpush2.bf16.msra.mxu0 0
    %810 = vmatprep.subr.bf16.mxu0 0
    %811 = vmatpush2.bf16.msra.mxu0 0
    %812 = vmatprep.subr.bf16.mxu0 0
    %813 = vmatpush2.bf16.msra.mxu0 0
    %814 = vmatprep.subr.bf16.mxu0 0
    %815 = vmatpush2.bf16.msra.mxu0 0
    %816 = vmatprep.mubr.bf16.mxu0 0
    %817 = vmatmul.mubr.bf16.gmra.mxu0 %v782
    %v818 = vpop.f32.mrf.mxu0
    %v819 = vadd.f32 0.0, %v818
    %v820 = vpop.f32.mrf.mxu0
    %v821 = vpop.f32.mrf.mxu0
    %v822 = vpop.f32.mrf.mxu0
    %823 = vdwg.mxu0
    %v832 = vunpack.c.l.b16 %v739
    %v833 = vunpack.c.l.b16 %v740
    %v834 = vunpack.c.l.b16 %v741
    %v835 = vunpack.c.l.b16 %v742
    %v836 = vunpack.c.l.b16 %v743
    %v837 = vunpack.c.l.b16 %v744
    %v838 = vunpack.c.l.b16 %v745
    %v839 = vunpack.c.l.b16 %v746
    %v840 = vpack.c.b16 %v833, %v832
    %v841 = vpack.c.b16 %v835, %v834
    %v842 = vpack.c.b16 %v837, %v836
    %v843 = vpack.c.b16 %v839, %v838
    %v849 = vsel %vm331, %v737, 0
    %851 = vmatprep.subr.bf16.mxu0 0
    %852 = vmatpush1.bf16.msra.mxu0 0
    %853 = vmatprep.subr.bf16.mxu0 0
    %854 = vmatpush1.bf16.msra.mxu0 0
    %855 = vmatprep.subr.bf16.mxu0 0
    %856 = vmatpush1.bf16.msra.mxu0 0
    %857 = vmatprep.subr.bf16.mxu0 0
    %858 = vmatpush1.bf16.msra.mxu0 0
    %859 = vmatprep.subr.bf16.mxu0 0
    %860 = vmatpush1.bf16.msra.mxu0 %v843
    %861 = vmatprep.subr.bf16.mxu0 0
    %862 = vmatpush1.bf16.msra.mxu0 %v842
    %863 = vmatprep.subr.bf16.mxu0 0
    %864 = vmatpush1.bf16.msra.mxu0 %v841
    %865 = vmatprep.subr.bf16.mxu0 0
    %866 = vmatpush1.bf16.msra.mxu0 %v840
    %867 = vmatprep.subr.bf16.mxu0 0
    %868 = vmatpush2.bf16.msra.mxu0 0
    %869 = vmatprep.subr.bf16.mxu0 0
    %870 = vmatpush2.bf16.msra.mxu0 0
    %871 = vmatprep.subr.bf16.mxu0 0
    %872 = vmatpush2.bf16.msra.mxu0 0
    %873 = vmatprep.subr.bf16.mxu0 0
    %874 = vmatpush2.bf16.msra.mxu0 0
    %875 = vmatprep.subr.bf16.mxu0 0
    %876 = vmatpush2.bf16.msra.mxu0 0
    %877 = vmatprep.subr.bf16.mxu0 0
    %878 = vmatpush2.bf16.msra.mxu0 0
    %879 = vmatprep.subr.bf16.mxu0 0
    %880 = vmatpush2.bf16.msra.mxu0 0
    %881 = vmatprep.subr.bf16.mxu0 0
    %882 = vmatpush2.bf16.msra.mxu0 0
    %883 = vmatprep.mubr.bf16.mxu0 0
    %884 = vmatmul.mubr.bf16.gmra.mxu0 %v849
    %v885 = vpop.f32.mrf.mxu0
    %v886 = vadd.f32 %v819, %v885
    %v887 = vpop.f32.mrf.mxu0
    %v888 = vpop.f32.mrf.mxu0
    %v889 = vpop.f32.mrf.mxu0
    %890 = vdwg.mxu0
    %v891 = vld [vmem:[#allocation2 + $0xa8] sm:$0xf]
    %v892 = vld [vmem:[#allocation2 + $0xac] sm:$0xf]
    %v893 = vld [vmem:[#allocation2 + $0xb0] sm:$0xf]
    %v894 = vld [vmem:[#allocation2 + $0xb4] sm:$0xf]
    %v895 = vld [vmem:[#allocation2 + $0xb8] sm:$0xf]
    %v896 = vld [vmem:[#allocation2 + $0xbc] sm:$0xf]
    %v897 = vld [vmem:[#allocation2 + $0xc0] sm:$0xf]
    %v898 = vld [vmem:[#allocation2 + $0xc4] sm:$0xf]
    %v907 = vunpack.c.l.b16 %v891
    %v908 = vunpack.c.l.b16 %v892
    %v909 = vunpack.c.l.b16 %v893
    %v910 = vunpack.c.l.b16 %v894
    %v911 = vunpack.c.l.b16 %v895
    %v912 = vunpack.c.l.b16 %v896
    %v913 = vunpack.c.l.b16 %v897
    %v914 = vunpack.c.l.b16 %v898
    %v915 = vpack.c.b16 %v908, %v907
    %v916 = vpack.c.b16 %v910, %v909
    %v917 = vpack.c.b16 %v912, %v911
    %v918 = vpack.c.b16 %v914, %v913
    %v924 = vsel %vm331, %v738, 0
    %926 = vmatprep.subr.bf16.mxu0 0
    %927 = vmatpush1.bf16.msra.mxu0 0
    %928 = vmatprep.subr.bf16.mxu0 0
    %929 = vmatpush1.bf16.msra.mxu0 0
    %930 = vmatprep.subr.bf16.mxu0 0
    %931 = vmatpush1.bf16.msra.mxu0 0
    %932 = vmatprep.subr.bf16.mxu0 0
    %933 = vmatpush1.bf16.msra.mxu0 0
    %934 = vmatprep.subr.bf16.mxu0 0
    %935 = vmatpush1.bf16.msra.mxu0 %v918
    %936 = vmatprep.subr.bf16.mxu0 0
    %937 = vmatpush1.bf16.msra.mxu0 %v917
    %938 = vmatprep.subr.bf16.mxu0 0
    %939 = vmatpush1.bf16.msra.mxu0 %v916
    %940 = vmatprep.subr.bf16.mxu0 0
    %941 = vmatpush1.bf16.msra.mxu0 %v915
    %942 = vmatprep.subr.bf16.mxu0 0
    %943 = vmatpush2.bf16.msra.mxu0 0
    %944 = vmatprep.subr.bf16.mxu0 0
    %945 = vmatpush2.bf16.msra.mxu0 0
    %946 = vmatprep.subr.bf16.mxu0 0
    %947 = vmatpush2.bf16.msra.mxu0 0
    %948 = vmatprep.subr.bf16.mxu0 0
    %949 = vmatpush2.bf16.msra.mxu0 0
    %950 = vmatprep.subr.bf16.mxu0 0
    %951 = vmatpush2.bf16.msra.mxu0 0
    %952 = vmatprep.subr.bf16.mxu0 0
    %953 = vmatpush2.bf16.msra.mxu0 0
    %954 = vmatprep.subr.bf16.mxu0 0
    %955 = vmatpush2.bf16.msra.mxu0 0
    %956 = vmatprep.subr.bf16.mxu0 0
    %957 = vmatpush2.bf16.msra.mxu0 0
    %958 = vmatprep.mubr.bf16.mxu0 0
    %959 = vmatmul.mubr.bf16.gmra.mxu0 %v924
    %v960 = vpop.f32.mrf.mxu0
    %v961 = vadd.f32 0.0, %v960
    %v962 = vpop.f32.mrf.mxu0
    %v963 = vpop.f32.mrf.mxu0
    %v964 = vpop.f32.mrf.mxu0
    %965 = vdwg.mxu0
    %v966 = vadd.f32 %v886, %v961
    %v967 = vld [vmem:[#allocation5 + $0x10] sm:$0x1]
    %v968 = vlaneseq
    %v969 = vshrl.u32 %v968, 7
    %v970 = vsub.s32 0, %v969
    %v971 = vrot.slane %v967, %v970
    %v972 = vadd.f32 %v966, %v971
    %v973 = vld [vmem:[#allocation2 + $0xc8] sm:$0xf]
    %v974 = vld [vmem:[#allocation2 + $0xcc] sm:$0xf]
    %v975 = vld [vmem:[#allocation2 + $0xd0] sm:$0xf]
    %v976 = vld [vmem:[#allocation2 + $0xd4] sm:$0xf]
    %v977 = vld [vmem:[#allocation2 + $0xd8] sm:$0xf]
    %v978 = vld [vmem:[#allocation2 + $0xdc] sm:$0xf]
    %v979 = vld [vmem:[#allocation2 + $0xe0] sm:$0xf]
    %v980 = vld [vmem:[#allocation2 + $0xe4] sm:$0xf]
    %v981 = vunpack.c.l.bf16 %v973
    %v982 = vunpack.c.l.bf16 %v974
    %v983 = vunpack.c.l.bf16 %v975
    %v984 = vunpack.c.l.bf16 %v976
    %v985 = vunpack.c.l.bf16 %v977
    %v986 = vunpack.c.l.bf16 %v978
    %v987 = vunpack.c.l.bf16 %v979
    %v988 = vunpack.c.l.bf16 %v980
    %v989 = vld [vmem:[#allocation2 + $0xe8] sm:$0xf]
    %v990 = vld [vmem:[#allocation2 + $0xec] sm:$0xf]
    %v991 = vunpack.c.l.bf16 %v989
    %v992 = vunpack.c.l.bf16 %v990
    %v993 = vld [vmem:[#allocation5 + $0x18] sm:$0x1]
    %v994 = vsel %vm331, %v972, 0.0
    %v995 = vrot.slane %v994, 4
    %v996 = vadd.f32 %v994, %v995
    %v997 = vrot.slane %v996, 2
    %v998 = vadd.f32 %v996, %v997
    %v999 = vrot.slane %v998, 1
    %v1000 = vadd.f32 %v998, %v999
    %v1001 = vmul.f32 %v972, %v972
    %v1002 = vsel %vm331, %v1001, 0.0
    %v1003 = vrot.slane %v1002, 4
    %v1004 = vadd.f32 %v1002, %v1003
    %v1005 = vrot.slane %v1004, 2
    %v1006 = vadd.f32 %v1004, %v1005
    %v1007 = vrot.slane %v1006, 1
    %v1008 = vadd.f32 %v1006, %v1007
    %v1010 = vsel %vm331, %v1000, 0
    %1012 = vmatprep.subr.mxu0 0.0
    %1013 = vmatpush1.msra.mxu0 0.0
    %1014 = vmatprep.subr.mxu0 0.0
    %1015 = vmatpush1.msra.mxu0 0.0
    %1016 = vmatprep.subr.mxu0 0.0
    %1017 = vmatpush1.msra.mxu0 0.0
    %1018 = vmatprep.subr.mxu0 0.0
    %1019 = vmatpush1.msra.mxu0 0.0
    %1020 = vmatprep.subr.mxu0 0.0
    %1021 = vmatpush1.msra.mxu0 0.0
    %1022 = vmatprep.subr.mxu0 0.0
    %1023 = vmatpush1.msra.mxu0 0.0
    %1024 = vmatprep.subr.mxu0 0.0
    %1025 = vmatpush1.msra.mxu0 0.0
    %1026 = vmatprep.subr.mxu0 0.0
    %1027 = vmatpush1.msra.mxu0 0.0
    %1028 = vmatprep.subr.mxu0 0.0
    %1029 = vmatpush1.msra.mxu0 %v988
    %1030 = vmatprep.subr.mxu0 0.0
    %1031 = vmatpush1.msra.mxu0 %v987
    %1032 = vmatprep.subr.mxu0 0.0
    %1033 = vmatpush1.msra.mxu0 %v986
    %1034 = vmatprep.subr.mxu0 0.0
    %1035 = vmatpush1.msra.mxu0 %v985
    %1036 = vmatprep.subr.mxu0 0.0
    %1037 = vmatpush1.msra.mxu0 %v984
    %1038 = vmatprep.subr.mxu0 0.0
    %1039 = vmatpush1.msra.mxu0 %v983
    %1040 = vmatprep.subr.mxu0 0.0
    %1041 = vmatpush1.msra.mxu0 %v982
    %1042 = vmatprep.subr.mxu0 0.0
    %1043 = vmatpush1.msra.mxu0 %v981
    %1044 = vmatprep.subr.mxu0 0.0
    %1045 = vmatpush2.msra.mxu0 0.0
    %1046 = vmatprep.subr.mxu0 0.0
    %1047 = vmatpush2.msra.mxu0 0.0
    %1048 = vmatprep.subr.mxu0 0.0
    %1049 = vmatpush2.msra.mxu0 0.0
    %1050 = vmatprep.subr.mxu0 0.0
    %1051 = vmatpush2.msra.mxu0 0.0
    %1052 = vmatprep.subr.mxu0 0.0
    %1053 = vmatpush2.msra.mxu0 0.0
    %1054 = vmatprep.subr.mxu0 0.0
    %1055 = vmatpush2.msra.mxu0 0.0
    %1056 = vmatprep.subr.mxu0 0.0
    %1057 = vmatpush2.msra.mxu0 0.0
    %1058 = vmatprep.subr.mxu0 0.0
    %1059 = vmatpush2.msra.mxu0 0.0
    %1060 = vmatprep.subr.mxu0 0.0
    %1061 = vmatpush2.msra.mxu0 0.0
    %1062 = vmatprep.subr.mxu0 0.0
    %1063 = vmatpush2.msra.mxu0 0.0
    %1064 = vmatprep.subr.mxu0 0.0
    %1065 = vmatpush2.msra.mxu0 0.0
    %1066 = vmatprep.subr.mxu0 0.0
    %1067 = vmatpush2.msra.mxu0 0.0
    %1068 = vmatprep.subr.mxu0 0.0
    %1069 = vmatpush2.msra.mxu0 0.0
    %1070 = vmatprep.subr.mxu0 0.0
    %1071 = vmatpush2.msra.mxu0 0.0
    %1072 = vmatprep.subr.mxu0 0.0
    %1073 = vmatpush2.msra.mxu0 0.0
    %1074 = vmatprep.subr.mxu0 0.0
    %1075 = vmatpush2.msra.mxu0 0.0
    %1076 = vmatprep.mubr.f32.mxu0 0.0
    %1077 = vmatmul.mubr.f32.gmra.mxu0 %v1010
    %v1078 = vpop.f32.mrf.mxu0
    %v1079 = vadd.f32 0.0, %v1078
    %v1080 = vpop.f32.mrf.mxu0
    %1081 = vdwg.mxu0
    %v1082 = vrcp.pop 32.0
    %v1083 = vmul.f32 %v1079, %v1082
    %v1085 = vsel %vm331, %v1008, 0
    %1087 = vmatprep.subr.mxu0 0.0
    %1088 = vmatpush1.msra.mxu0 0.0
    %1089 = vmatprep.subr.mxu0 0.0
    %1090 = vmatpush1.msra.mxu0 0.0
    %1091 = vmatprep.subr.mxu0 0.0
    %1092 = vmatpush1.msra.mxu0 0.0
    %1093 = vmatprep.subr.mxu0 0.0
    %1094 = vmatpush1.msra.mxu0 0.0
    %1095 = vmatprep.subr.mxu0 0.0
    %1096 = vmatpush1.msra.mxu0 0.0
    %1097 = vmatprep.subr.mxu0 0.0
    %1098 = vmatpush1.msra.mxu0 0.0
    %1099 = vmatprep.subr.mxu0 0.0
    %1100 = vmatpush1.msra.mxu0 0.0
    %1101 = vmatprep.subr.mxu0 0.0
    %1102 = vmatpush1.msra.mxu0 0.0
    %1103 = vmatprep.subr.mxu0 0.0
    %1104 = vmatpush1.msra.mxu0 %v988
    %1105 = vmatprep.subr.mxu0 0.0
    %1106 = vmatpush1.msra.mxu0 %v987
    %1107 = vmatprep.subr.mxu0 0.0
    %1108 = vmatpush1.msra.mxu0 %v986
    %1109 = vmatprep.subr.mxu0 0.0
    %1110 = vmatpush1.msra.mxu0 %v985
    %1111 = vmatprep.subr.mxu0 0.0
    %1112 = vmatpush1.msra.mxu0 %v984
    %1113 = vmatprep.subr.mxu0 0.0
    %1114 = vmatpush1.msra.mxu0 %v983
    %1115 = vmatprep.subr.mxu0 0.0
    %1116 = vmatpush1.msra.mxu0 %v982
    %1117 = vmatprep.subr.mxu0 0.0
    %1118 = vmatpush1.msra.mxu0 %v981
    %1119 = vmatprep.subr.mxu0 0.0
    %1120 = vmatpush2.msra.mxu0 0.0
    %1121 = vmatprep.subr.mxu0 0.0
    %1122 = vmatpush2.msra.mxu0 0.0
    %1123 = vmatprep.subr.mxu0 0.0
    %1124 = vmatpush2.msra.mxu0 0.0
    %1125 = vmatprep.subr.mxu0 0.0
    %1126 = vmatpush2.msra.mxu0 0.0
    %1127 = vmatprep.subr.mxu0 0.0
    %1128 = vmatpush2.msra.mxu0 0.0
    %1129 = vmatprep.subr.mxu0 0.0
    %1130 = vmatpush2.msra.mxu0 0.0
    %1131 = vmatprep.subr.mxu0 0.0
    %1132 = vmatpush2.msra.mxu0 0.0
    %1133 = vmatprep.subr.mxu0 0.0
    %1134 = vmatpush2.msra.mxu0 0.0
    %1135 = vmatprep.subr.mxu0 0.0
    %1136 = vmatpush2.msra.mxu0 0.0
    %1137 = vmatprep.subr.mxu0 0.0
    %1138 = vmatpush2.msra.mxu0 0.0
    %1139 = vmatprep.subr.mxu0 0.0
    %1140 = vmatpush2.msra.mxu0 0.0
    %1141 = vmatprep.subr.mxu0 0.0
    %1142 = vmatpush2.msra.mxu0 0.0
    %1143 = vmatprep.subr.mxu0 0.0
    %1144 = vmatpush2.msra.mxu0 0.0
    %1145 = vmatprep.subr.mxu0 0.0
    %1146 = vmatpush2.msra.mxu0 0.0
    %1147 = vmatprep.subr.mxu0 0.0
    %1148 = vmatpush2.msra.mxu0 0.0
    %1149 = vmatprep.subr.mxu0 0.0
    %1150 = vmatpush2.msra.mxu0 0.0
    %1151 = vmatprep.mubr.f32.mxu0 0.0
    %1152 = vmatmul.mubr.f32.gmra.mxu0 %v1085
    %v1153 = vpop.f32.mrf.mxu0
    %v1154 = vadd.f32 0.0, %v1153
    %v1155 = vpop.f32.mrf.mxu0
    %1156 = vdwg.mxu0
    %v1157 = vmul.f32 %v1154, %v1082
    %v1158 = vmul.f32 %v1083, %v1083
    %v1159 = vsub.f32 %v1157, %v1158
    %v1160 = vmax.f32 %v1159, 0.0
    %v1161 = vadd.f32 %v1160, 1e-05
    %v1162 = vrsqrt.pop %v1161
    %v1164 = vsel %vm156, %v1162, 0
    %1166 = vmatprep.subr.mxu0 0.0
    %1167 = vmatpush1.msra.mxu0 0.0
    %1168 = vmatprep.subr.mxu0 0.0
    %1169 = vmatpush1.msra.mxu0 0.0
    %1170 = vmatprep.subr.mxu0 0.0
    %1171 = vmatpush1.msra.mxu0 0.0
    %1172 = vmatprep.subr.mxu0 0.0
    %1173 = vmatpush1.msra.mxu0 0.0
    %1174 = vmatprep.subr.mxu0 0.0
    %1175 = vmatpush1.msra.mxu0 0.0
    %1176 = vmatprep.subr.mxu0 0.0
    %1177 = vmatpush1.msra.mxu0 0.0
    %1178 = vmatprep.subr.mxu0 0.0
    %1179 = vmatpush1.msra.mxu0 0.0
    %1180 = vmatprep.subr.mxu0 0.0
    %1181 = vmatpush1.msra.mxu0 0.0
    %1182 = vmatprep.subr.mxu0 0.0
    %1183 = vmatpush1.msra.mxu0 0.0
    %1184 = vmatprep.subr.mxu0 0.0
    %1185 = vmatpush1.msra.mxu0 0.0
    %1186 = vmatprep.subr.mxu0 0.0
    %1187 = vmatpush1.msra.mxu0 0.0
    %1188 = vmatprep.subr.mxu0 0.0
    %1189 = vmatpush1.msra.mxu0 0.0
    %1190 = vmatprep.subr.mxu0 0.0
    %1191 = vmatpush1.msra.mxu0 0.0
    %1192 = vmatprep.subr.mxu0 0.0
    %1193 = vmatpush1.msra.mxu0 0.0
    %1194 = vmatprep.subr.mxu0 0.0
    %1195 = vmatpush1.msra.mxu0 %v992
    %1196 = vmatprep.subr.mxu0 0.0
    %1197 = vmatpush1.msra.mxu0 %v991
    %1198 = vmatprep.subr.mxu0 0.0
    %1199 = vmatpush2.msra.mxu0 0.0
    %1200 = vmatprep.subr.mxu0 0.0
    %1201 = vmatpush2.msra.mxu0 0.0
    %1202 = vmatprep.subr.mxu0 0.0
    %1203 = vmatpush2.msra.mxu0 0.0
    %1204 = vmatprep.subr.mxu0 0.0
    %1205 = vmatpush2.msra.mxu0 0.0
    %1206 = vmatprep.subr.mxu0 0.0
    %1207 = vmatpush2.msra.mxu0 0.0
    %1208 = vmatprep.subr.mxu0 0.0
    %1209 = vmatpush2.msra.mxu0 0.0
    %1210 = vmatprep.subr.mxu0 0.0
    %1211 = vmatpush2.msra.mxu0 0.0
    %1212 = vmatprep.subr.mxu0 0.0
    %1213 = vmatpush2.msra.mxu0 0.0
    %1214 = vmatprep.subr.mxu0 0.0
    %1215 = vmatpush2.msra.mxu0 0.0
    %1216 = vmatprep.subr.mxu0 0.0
    %1217 = vmatpush2.msra.mxu0 0.0
    %1218 = vmatprep.subr.mxu0 0.0
    %1219 = vmatpush2.msra.mxu0 0.0
    %1220 = vmatprep.subr.mxu0 0.0
    %1221 = vmatpush2.msra.mxu0 0.0
    %1222 = vmatprep.subr.mxu0 0.0
    %1223 = vmatpush2.msra.mxu0 0.0
    %1224 = vmatprep.subr.mxu0 0.0
    %1225 = vmatpush2.msra.mxu0 0.0
    %1226 = vmatprep.subr.mxu0 0.0
    %1227 = vmatpush2.msra.mxu0 0.0
    %1228 = vmatprep.subr.mxu0 0.0
    %1229 = vmatpush2.msra.mxu0 0.0
    %1230 = vmatprep.mubr.f32.mxu0 0.0
    %1231 = vmatmul.mubr.f32.gmra.mxu0 %v1164
    %v1232 = vpop.f32.mrf.mxu0
    %v1233 = vadd.f32 0.0, %v1232
    %v1234 = vpop.f32.mrf.mxu0
    %1235 = vdwg.mxu0
    %v1236 = vmul.f32 %v1083, %v1162
    %v1238 = vsel %vm156, %v1236, 0
    %1240 = vmatprep.subr.mxu0 0.0
    %1241 = vmatpush1.msra.mxu0 0.0
    %1242 = vmatprep.subr.mxu0 0.0
    %1243 = vmatpush1.msra.mxu0 0.0
    %1244 = vmatprep.subr.mxu0 0.0
    %1245 = vmatpush1.msra.mxu0 0.0
    %1246 = vmatprep.subr.mxu0 0.0
    %1247 = vmatpush1.msra.mxu0 0.0
    %1248 = vmatprep.subr.mxu0 0.0
    %1249 = vmatpush1.msra.mxu0 0.0
    %1250 = vmatprep.subr.mxu0 0.0
    %1251 = vmatpush1.msra.mxu0 0.0
    %1252 = vmatprep.subr.mxu0 0.0
    %1253 = vmatpush1.msra.mxu0 0.0
    %1254 = vmatprep.subr.mxu0 0.0
    %1255 = vmatpush1.msra.mxu0 0.0
    %1256 = vmatprep.subr.mxu0 0.0
    %1257 = vmatpush1.msra.mxu0 0.0
    %1258 = vmatprep.subr.mxu0 0.0
    %1259 = vmatpush1.msra.mxu0 0.0
    %1260 = vmatprep.subr.mxu0 0.0
    %1261 = vmatpush1.msra.mxu0 0.0
    %1262 = vmatprep.subr.mxu0 0.0
    %1263 = vmatpush1.msra.mxu0 0.0
    %1264 = vmatprep.subr.mxu0 0.0
    %1265 = vmatpush1.msra.mxu0 0.0
    %1266 = vmatprep.subr.mxu0 0.0
    %1267 = vmatpush1.msra.mxu0 0.0
    %1268 = vmatprep.subr.mxu0 0.0
    %1269 = vmatpush1.msra.mxu0 %v992
    %1270 = vmatprep.subr.mxu0 0.0
    %1271 = vmatpush1.msra.mxu0 %v991
    %1272 = vmatprep.subr.mxu0 0.0
    %1273 = vmatpush2.msra.mxu0 0.0
    %1274 = vmatprep.subr.mxu0 0.0
    %1275 = vmatpush2.msra.mxu0 0.0
    %1276 = vmatprep.subr.mxu0 0.0
    %1277 = vmatpush2.msra.mxu0 0.0
    %1278 = vmatprep.subr.mxu0 0.0
    %1279 = vmatpush2.msra.mxu0 0.0
    %1280 = vmatprep.subr.mxu0 0.0
    %1281 = vmatpush2.msra.mxu0 0.0
    %1282 = vmatprep.subr.mxu0 0.0
    %1283 = vmatpush2.msra.mxu0 0.0
    %1284 = vmatprep.subr.mxu0 0.0
    %1285 = vmatpush2.msra.mxu0 0.0
    %1286 = vmatprep.subr.mxu0 0.0
    %1287 = vmatpush2.msra.mxu0 0.0
    %1288 = vmatprep.subr.mxu0 0.0
    %1289 = vmatpush2.msra.mxu0 0.0
    %1290 = vmatprep.subr.mxu0 0.0
    %1291 = vmatpush2.msra.mxu0 0.0
    %1292 = vmatprep.subr.mxu0 0.0
    %1293 = vmatpush2.msra.mxu0 0.0
    %1294 = vmatprep.subr.mxu0 0.0
    %1295 = vmatpush2.msra.mxu0 0.0
    %1296 = vmatprep.subr.mxu0 0.0
    %1297 = vmatpush2.msra.mxu0 0.0
    %1298 = vmatprep.subr.mxu0 0.0
    %1299 = vmatpush2.msra.mxu0 0.0
    %1300 = vmatprep.subr.mxu0 0.0
    %1301 = vmatpush2.msra.mxu0 0.0
    %1302 = vmatprep.subr.mxu0 0.0
    %1303 = vmatpush2.msra.mxu0 0.0
    %1304 = vmatprep.mubr.f32.mxu0 0.0
    %1305 = vmatmul.mubr.f32.gmra.mxu0 %v1238
    %v1306 = vpop.f32.mrf.mxu0
    %v1307 = vadd.f32 0.0, %v1306
    %v1308 = vpop.f32.mrf.mxu0
    %1309 = vdwg.mxu0
    %v1310 = vsub.f32 %v993, %v1307
    %v1311 = vlaneseq
    %v1312 = vshrl.u32 %v1311, 7
    %v1313 = vsub.s32 0, %v1312
    %v1314 = vrot.slane %v1233, %v1313
    %v1315 = vmul.f32 %v972, %v1314
    %v1316 = vlaneseq
    %v1317 = vshrl.u32 %v1316, 7
    %v1318 = vsub.s32 0, %v1317
    %v1319 = vrot.slane %v1310, %v1318
    %v1320 = vadd.f32 %v1315, %v1319
    %v1321 = vmul.f32 %v1320, 0.01
    %v1322 = vmax.f32 %v1320, %v1321
    %v1323 = vpack.c.bf16 %v1322, %v1322
    %v1324 = vld [vmem:[#allocation2 + $0xf0] sm:$0xf]
    %v1325 = vld [vmem:[#allocation2 + $0xf4] sm:$0x3]
    %v1328 = vunpack.c.l.b16 %v1324
    %v1329 = vunpack.c.l.b16 %v1325
    %v1330 = vpack.c.b16 %v1329, %v1328
    %v1332 = vsel %vm506, %v1330, 0
    %vm1334 = vcmask 1043456
    %v1336 = vsel %vm1334, %v1323, 0
    %1338 = vmatprep.subr.bf16.mxu0 0
    %1339 = vmatpush1.bf16.msra.mxu0 0
    %1340 = vmatprep.subr.bf16.mxu0 0
    %1341 = vmatpush1.bf16.msra.mxu0 0
    %1342 = vmatprep.subr.bf16.mxu0 0
    %1343 = vmatpush1.bf16.msra.mxu0 0
    %1344 = vmatprep.subr.bf16.mxu0 0
    %1345 = vmatpush1.bf16.msra.mxu0 0
    %1346 = vmatprep.subr.bf16.mxu0 0
    %1347 = vmatpush1.bf16.msra.mxu0 0
    %1348 = vmatprep.subr.bf16.mxu0 0
    %1349 = vmatpush1.bf16.msra.mxu0 0
    %1350 = vmatprep.subr.bf16.mxu0 0
    %1351 = vmatpush1.bf16.msra.mxu0 0
    %1352 = vmatprep.subr.bf16.mxu0 0
    %1353 = vmatpush1.bf16.msra.mxu0 %v1336
    %1354 = vmatprep.subr.bf16.mxu0 0
    %1355 = vmatpush2.bf16.msra.mxu0 0
    %1356 = vmatprep.subr.bf16.mxu0 0
    %1357 = vmatpush2.bf16.msra.mxu0 0
    %1358 = vmatprep.subr.bf16.mxu0 0
    %1359 = vmatpush2.bf16.msra.mxu0 0
    %1360 = vmatprep.subr.bf16.mxu0 0
    %1361 = vmatpush2.bf16.msra.mxu0 0
    %1362 = vmatprep.subr.bf16.mxu0 0
    %1363 = vmatpush2.bf16.msra.mxu0 0
    %1364 = vmatprep.subr.bf16.mxu0 0
    %1365 = vmatpush2.bf16.msra.mxu0 0
    %1366 = vmatprep.subr.bf16.mxu0 0
    %1367 = vmatpush2.bf16.msra.mxu0 0
    %1368 = vmatprep.subr.bf16.mxu0 0
    %1369 = vmatpush2.bf16.msra.mxu0 0
    %1370 = vmatprep.mubr.bf16.mxu0 0
    %1371 = vmatmul.mubr.bf16.gmra.mxu0 %v1332
    %v1372 = vpop.f32.mrf.mxu0
    %v1373 = vadd.f32 0.0, %v1372
    %v1374 = vpop.f32.mrf.mxu0
    %v1375 = vpop.f32.mrf.mxu0
    %v1376 = vadd.f32 0.0, %v1375
    %v1377 = vpop.f32.mrf.mxu0
    %1378 = vdwg.mxu0
    %v1379 = vpack.c.bf16 %v1376, %v1373
    %v1380 = vld [vmem:[#allocation2 + $0xf8] sm:$0xf]
    %v1381 = vld [vmem:[#allocation2 + $0xfc] sm:$0xf]
    %v1382 = vld [vmem:[#allocation2 + $0x100] sm:$0xf]
    %v1383 = vld [vmem:[#allocation2 + $0x104] sm:$0xf]
    %v1384 = vld [vmem:[#allocation2 + $0x108] sm:$0xf]
    %v1385 = vld [vmem:[#allocation2 + $0x10c] sm:$0xf]
    %v1386 = vld [vmem:[#allocation2 + $0x110] sm:$0xf]
    %v1387 = vld [vmem:[#allocation2 + $0x114] sm:$0xf]
    %v1388 = vld [vmem:[#allocation2 + $0x118] sm:$0xf]
    %v1389 = vld [vmem:[#allocation2 + $0x11c] sm:$0xf]
    %v1390 = vld [vmem:[#allocation2 + $0x120] sm:$0xf]
    %v1391 = vld [vmem:[#allocation2 + $0x124] sm:$0xf]
    %v1392 = vld [vmem:[#allocation2 + $0x128] sm:$0xf]
    %v1393 = vld [vmem:[#allocation2 + $0x12c] sm:$0xf]
    %v1394 = vld [vmem:[#allocation2 + $0x130] sm:$0xf]
    %v1395 = vld [vmem:[#allocation2 + $0x134] sm:$0xf]
    %v1397 = vrot.slane %v1379, 2
    %v1406 = vunpack.c.l.b16 %v1388
    %v1407 = vunpack.c.l.b16 %v1389
    %v1408 = vunpack.c.l.b16 %v1390
    %v1409 = vunpack.c.l.b16 %v1391
    %v1410 = vunpack.c.l.b16 %v1392
    %v1411 = vunpack.c.l.b16 %v1393
    %v1412 = vunpack.c.l.b16 %v1394
    %v1413 = vunpack.c.l.b16 %v1395
    %v1414 = vpack.c.b16 %v1407, %v1406
    %v1415 = vpack.c.b16 %v1409, %v1408
    %v1416 = vpack.c.b16 %v1411, %v1410
    %v1417 = vpack.c.b16 %v1413, %v1412
    %v1423 = vsel %vm331, %v1397, 0
    %1425 = vmatprep.subr.bf16.mxu0 0
    %1426 = vmatpush1.bf16.msra.mxu0 0
    %1427 = vmatprep.subr.bf16.mxu0 0
    %1428 = vmatpush1.bf16.msra.mxu0 0
    %1429 = vmatprep.subr.bf16.mxu0 0
    %1430 = vmatpush1.bf16.msra.mxu0 0
    %1431 = vmatprep.subr.bf16.mxu0 0
    %1432 = vmatpush1.bf16.msra.mxu0 0
    %1433 = vmatprep.subr.bf16.mxu0 0
    %1434 = vmatpush1.bf16.msra.mxu0 %v1417
    %1435 = vmatprep.subr.bf16.mxu0 0
    %1436 = vmatpush1.bf16.msra.mxu0 %v1416
    %1437 = vmatprep.subr.bf16.mxu0 0
    %1438 = vmatpush1.bf16.msra.mxu0 %v1415
    %1439 = vmatprep.subr.bf16.mxu0 0
    %1440 = vmatpush1.bf16.msra.mxu0 %v1414
    %1441 = vmatprep.subr.bf16.mxu0 0
    %1442 = vmatpush2.bf16.msra.mxu0 0
    %1443 = vmatprep.subr.bf16.mxu0 0
    %1444 = vmatpush2.bf16.msra.mxu0 0
    %1445 = vmatprep.subr.bf16.mxu0 0
    %1446 = vmatpush2.bf16.msra.mxu0 0
    %1447 = vmatprep.subr.bf16.mxu0 0
    %1448 = vmatpush2.bf16.msra.mxu0 0
    %1449 = vmatprep.subr.bf16.mxu0 0
    %1450 = vmatpush2.bf16.msra.mxu0 0
    %1451 = vmatprep.subr.bf16.mxu0 0
    %1452 = vmatpush2.bf16.msra.mxu0 0
    %1453 = vmatprep.subr.bf16.mxu0 0
    %1454 = vmatpush2.bf16.msra.mxu0 0
    %1455 = vmatprep.subr.bf16.mxu0 0
    %1456 = vmatpush2.bf16.msra.mxu0 0
    %1457 = vmatprep.mubr.bf16.mxu0 0
    %1458 = vmatmul.mubr.bf16.gmra.mxu0 %v1423
    %v1459 = vpop.f32.mrf.mxu0
    %v1460 = vadd.f32 0.0, %v1459
    %v1461 = vpop.f32.mrf.mxu0
    %v1462 = vpop.f32.mrf.mxu0
    %v1463 = vpop.f32.mrf.mxu0
    %1464 = vdwg.mxu0
    %v1473 = vunpack.c.l.b16 %v1380
    %v1474 = vunpack.c.l.b16 %v1381
    %v1475 = vunpack.c.l.b16 %v1382
    %v1476 = vunpack.c.l.b16 %v1383
    %v1477 = vunpack.c.l.b16 %v1384
    %v1478 = vunpack.c.l.b16 %v1385
    %v1479 = vunpack.c.l.b16 %v1386
    %v1480 = vunpack.c.l.b16 %v1387
    %v1481 = vpack.c.b16 %v1474, %v1473
    %v1482 = vpack.c.b16 %v1476, %v1475
    %v1483 = vpack.c.b16 %v1478, %v1477
    %v1484 = vpack.c.b16 %v1480, %v1479
    %v1490 = vsel %vm331, %v1379, 0
    %1492 = vmatprep.subr.bf16.mxu0 0
    %1493 = vmatpush1.bf16.msra.mxu0 0
    %1494 = vmatprep.subr.bf16.mxu0 0
    %1495 = vmatpush1.bf16.msra.mxu0 0
    %1496 = vmatprep.subr.bf16.mxu0 0
    %1497 = vmatpush1.bf16.msra.mxu0 0
    %1498 = vmatprep.subr.bf16.mxu0 0
    %1499 = vmatpush1.bf16.msra.mxu0 0
    %1500 = vmatprep.subr.bf16.mxu0 0
    %1501 = vmatpush1.bf16.msra.mxu0 %v1484
    %1502 = vmatprep.subr.bf16.mxu0 0
    %1503 = vmatpush1.bf16.msra.mxu0 %v1483
    %1504 = vmatprep.subr.bf16.mxu0 0
    %1505 = vmatpush1.bf16.msra.mxu0 %v1482
    %1506 = vmatprep.subr.bf16.mxu0 0
    %1507 = vmatpush1.bf16.msra.mxu0 %v1481
    %1508 = vmatprep.subr.bf16.mxu0 0
    %1509 = vmatpush2.bf16.msra.mxu0 0
    %1510 = vmatprep.subr.bf16.mxu0 0
    %1511 = vmatpush2.bf16.msra.mxu0 0
    %1512 = vmatprep.subr.bf16.mxu0 0
    %1513 = vmatpush2.bf16.msra.mxu0 0
    %1514 = vmatprep.subr.bf16.mxu0 0
    %1515 = vmatpush2.bf16.msra.mxu0 0
    %1516 = vmatprep.subr.bf16.mxu0 0
    %1517 = vmatpush2.bf16.msra.mxu0 0
    %1518 = vmatprep.subr.bf16.mxu0 0
    %1519 = vmatpush2.bf16.msra.mxu0 0
    %1520 = vmatprep.subr.bf16.mxu0 0
    %1521 = vmatpush2.bf16.msra.mxu0 0
    %1522 = vmatprep.subr.bf16.mxu0 0
    %1523 = vmatpush2.bf16.msra.mxu0 0
    %1524 = vmatprep.mubr.bf16.mxu0 0
    %1525 = vmatmul.mubr.bf16.gmra.mxu0 %v1490
    %v1526 = vpop.f32.mrf.mxu0
    %v1527 = vadd.f32 %v1460, %v1526
    %v1528 = vpop.f32.mrf.mxu0
    %v1529 = vpop.f32.mrf.mxu0
    %v1530 = vpop.f32.mrf.mxu0
    %1531 = vdwg.mxu0
    %v1532 = vld [vmem:[#allocation2 + $0x138] sm:$0xf]
    %v1533 = vld [vmem:[#allocation2 + $0x13c] sm:$0xf]
    %v1534 = vld [vmem:[#allocation2 + $0x140] sm:$0xf]
    %v1535 = vld [vmem:[#allocation2 + $0x144] sm:$0xf]
    %v1536 = vld [vmem:[#allocation2 + $0x148] sm:$0xf]
    %v1537 = vld [vmem:[#allocation2 + $0x14c] sm:$0xf]
    %v1538 = vld [vmem:[#allocation2 + $0x150] sm:$0xf]
    %v1539 = vld [vmem:[#allocation2 + $0x154] sm:$0xf]
    %v1540 = vrot.slane %v1379, 4
    %v1549 = vunpack.c.l.b16 %v1532
    %v1550 = vunpack.c.l.b16 %v1533
    %v1551 = vunpack.c.l.b16 %v1534
    %v1552 = vunpack.c.l.b16 %v1535
    %v1553 = vunpack.c.l.b16 %v1536
    %v1554 = vunpack.c.l.b16 %v1537
    %v1555 = vunpack.c.l.b16 %v1538
    %v1556 = vunpack.c.l.b16 %v1539
    %v1557 = vpack.c.b16 %v1550, %v1549
    %v1558 = vpack.c.b16 %v1552, %v1551
    %v1559 = vpack.c.b16 %v1554, %v1553
    %v1560 = vpack.c.b16 %v1556, %v1555
    %v1566 = vsel %vm331, %v1540, 0
    %1568 = vmatprep.subr.bf16.mxu0 0
    %1569 = vmatpush1.bf16.msra.mxu0 0
    %1570 = vmatprep.subr.bf16.mxu0 0
    %1571 = vmatpush1.bf16.msra.mxu0 0
    %1572 = vmatprep.subr.bf16.mxu0 0
    %1573 = vmatpush1.bf16.msra.mxu0 0
    %1574 = vmatprep.subr.bf16.mxu0 0
    %1575 = vmatpush1.bf16.msra.mxu0 0
    %1576 = vmatprep.subr.bf16.mxu0 0
    %1577 = vmatpush1.bf16.msra.mxu0 %v1560
    %1578 = vmatprep.subr.bf16.mxu0 0
    %1579 = vmatpush1.bf16.msra.mxu0 %v1559
    %1580 = vmatprep.subr.bf16.mxu0 0
    %1581 = vmatpush1.bf16.msra.mxu0 %v1558
    %1582 = vmatprep.subr.bf16.mxu0 0
    %1583 = vmatpush1.bf16.msra.mxu0 %v1557
    %1584 = vmatprep.subr.bf16.mxu0 0
    %1585 = vmatpush2.bf16.msra.mxu0 0
    %1586 = vmatprep.subr.bf16.mxu0 0
    %1587 = vmatpush2.bf16.msra.mxu0 0
    %1588 = vmatprep.subr.bf16.mxu0 0
    %1589 = vmatpush2.bf16.msra.mxu0 0
    %1590 = vmatprep.subr.bf16.mxu0 0
    %1591 = vmatpush2.bf16.msra.mxu0 0
    %1592 = vmatprep.subr.bf16.mxu0 0
    %1593 = vmatpush2.bf16.msra.mxu0 0
    %1594 = vmatprep.subr.bf16.mxu0 0
    %1595 = vmatpush2.bf16.msra.mxu0 0
    %1596 = vmatprep.subr.bf16.mxu0 0
    %1597 = vmatpush2.bf16.msra.mxu0 0
    %1598 = vmatprep.subr.bf16.mxu0 0
    %1599 = vmatpush2.bf16.msra.mxu0 0
    %1600 = vmatprep.mubr.bf16.mxu0 0
    %1601 = vmatmul.mubr.bf16.gmra.mxu0 %v1566
    %v1602 = vpop.f32.mrf.mxu0
    %v1603 = vadd.f32 0.0, %v1602
    %v1604 = vpop.f32.mrf.mxu0
    %v1605 = vpop.f32.mrf.mxu0
    %v1606 = vpop.f32.mrf.mxu0
    %1607 = vdwg.mxu0
    %v1608 = vadd.f32 %v1527, %v1603
    %v1609 = vld [vmem:[#allocation5 + $0x20] sm:$0x1]
    %v1610 = vlaneseq
    %v1611 = vshrl.u32 %v1610, 7
    %v1612 = vsub.s32 0, %v1611
    %v1613 = vrot.slane %v1609, %v1612
    %v1614 = vadd.f32 %v1608, %v1613
    %v1615 = vld [vmem:[#allocation2 + $0x158] sm:$0xf]
    %v1616 = vld [vmem:[#allocation2 + $0x15c] sm:$0xf]
    %v1617 = vld [vmem:[#allocation2 + $0x160] sm:$0xf]
    %v1618 = vld [vmem:[#allocation2 + $0x164] sm:$0xf]
    %v1619 = vunpack.c.l.bf16 %v1615
    %v1620 = vunpack.c.l.bf16 %v1616
    %v1621 = vunpack.c.l.bf16 %v1617
    %v1622 = vunpack.c.l.bf16 %v1618
    %v1623 = vld [vmem:[#allocation2 + $0x168] sm:$0xf]
    %v1624 = vld [vmem:[#allocation2 + $0x16c] sm:$0xf]
    %v1625 = vunpack.c.l.bf16 %v1623
    %v1626 = vunpack.c.l.bf16 %v1624
    %v1627 = vld [vmem:[#allocation5 + $0x28] sm:$0x1]
    %vm1628 = vcmask 257024
    %v1629 = vsel %vm1628, %v1614, 0.0
    %v1630 = vrot.slane %v1629, 4
    %v1631 = vadd.f32 %v1629, %v1630
    %v1632 = vrot.slane %v1631, 2
    %v1633 = vadd.f32 %v1631, %v1632
    %v1634 = vrot.slane %v1633, 1
    %v1635 = vadd.f32 %v1633, %v1634
    %v1636 = vmul.f32 %v1614, %v1614
    %v1637 = vsel %vm1628, %v1636, 0.0
    %v1638 = vrot.slane %v1637, 4
    %v1639 = vadd.f32 %v1637, %v1638
    %v1640 = vrot.slane %v1639, 2
    %v1641 = vadd.f32 %v1639, %v1640
    %v1642 = vrot.slane %v1641, 1
    %v1643 = vadd.f32 %v1641, %v1642
    %v1645 = vsel %vm76, %v1635, 0
    %1647 = vmatprep.subr.mxu0 0.0
    %1648 = vmatpush1.msra.mxu0 0.0
    %1649 = vmatprep.subr.mxu0 0.0
    %1650 = vmatpush1.msra.mxu0 0.0
    %1651 = vmatprep.subr.mxu0 0.0
    %1652 = vmatpush1.msra.mxu0 0.0
    %1653 = vmatprep.subr.mxu0 0.0
    %1654 = vmatpush1.msra.mxu0 0.0
    %1655 = vmatprep.subr.mxu0 0.0
    %1656 = vmatpush1.msra.mxu0 0.0
    %1657 = vmatprep.subr.mxu0 0.0
    %1658 = vmatpush1.msra.mxu0 0.0
    %1659 = vmatprep.subr.mxu0 0.0
    %1660 = vmatpush1.msra.mxu0 0.0
    %1661 = vmatprep.subr.mxu0 0.0
    %1662 = vmatpush1.msra.mxu0 0.0
    %1663 = vmatprep.subr.mxu0 0.0
    %1664 = vmatpush1.msra.mxu0 0.0
    %1665 = vmatprep.subr.mxu0 0.0
    %1666 = vmatpush1.msra.mxu0 0.0
    %1667 = vmatprep.subr.mxu0 0.0
    %1668 = vmatpush1.msra.mxu0 0.0
    %1669 = vmatprep.subr.mxu0 0.0
    %1670 = vmatpush1.msra.mxu0 0.0
    %1671 = vmatprep.subr.mxu0 0.0
    %1672 = vmatpush1.msra.mxu0 %v1622
    %1673 = vmatprep.subr.mxu0 0.0
    %1674 = vmatpush1.msra.mxu0 %v1621
    %1675 = vmatprep.subr.mxu0 0.0
    %1676 = vmatpush1.msra.mxu0 %v1620
    %1677 = vmatprep.subr.mxu0 0.0
    %1678 = vmatpush1.msra.mxu0 %v1619
    %1679 = vmatprep.subr.mxu0 0.0
    %1680 = vmatpush2.msra.mxu0 0.0
    %1681 = vmatprep.subr.mxu0 0.0
    %1682 = vmatpush2.msra.mxu0 0.0
    %1683 = vmatprep.subr.mxu0 0.0
    %1684 = vmatpush2.msra.mxu0 0.0
    %1685 = vmatprep.subr.mxu0 0.0
    %1686 = vmatpush2.msra.mxu0 0.0
    %1687 = vmatprep.subr.mxu0 0.0
    %1688 = vmatpush2.msra.mxu0 0.0
    %1689 = vmatprep.subr.mxu0 0.0
    %1690 = vmatpush2.msra.mxu0 0.0
    %1691 = vmatprep.subr.mxu0 0.0
    %1692 = vmatpush2.msra.mxu0 0.0
    %1693 = vmatprep.subr.mxu0 0.0
    %1694 = vmatpush2.msra.mxu0 0.0
    %1695 = vmatprep.subr.mxu0 0.0
    %1696 = vmatpush2.msra.mxu0 0.0
    %1697 = vmatprep.subr.mxu0 0.0
    %1698 = vmatpush2.msra.mxu0 0.0
    %1699 = vmatprep.subr.mxu0 0.0
    %1700 = vmatpush2.msra.mxu0 0.0
    %1701 = vmatprep.subr.mxu0 0.0
    %1702 = vmatpush2.msra.mxu0 0.0
    %1703 = vmatprep.subr.mxu0 0.0
    %1704 = vmatpush2.msra.mxu0 0.0
    %1705 = vmatprep.subr.mxu0 0.0
    %1706 = vmatpush2.msra.mxu0 0.0
    %1707 = vmatprep.subr.mxu0 0.0
    %1708 = vmatpush2.msra.mxu0 0.0
    %1709 = vmatprep.subr.mxu0 0.0
    %1710 = vmatpush2.msra.mxu0 0.0
    %1711 = vmatprep.mubr.f32.mxu0 0.0
    %1712 = vmatmul.mubr.f32.gmra.mxu0 %v1645
    %v1713 = vpop.f32.mrf.mxu0
    %v1714 = vadd.f32 0.0, %v1713
    %v1715 = vpop.f32.mrf.mxu0
    %1716 = vdwg.mxu0
    %v1717 = vrcp.pop 8.0
    %v1718 = vmul.f32 %v1714, %v1717
    %v1720 = vsel %vm76, %v1643, 0
    %1722 = vmatprep.subr.mxu0 0.0
    %1723 = vmatpush1.msra.mxu0 0.0
    %1724 = vmatprep.subr.mxu0 0.0
    %1725 = vmatpush1.msra.mxu0 0.0
    %1726 = vmatprep.subr.mxu0 0.0
    %1727 = vmatpush1.msra.mxu0 0.0
    %1728 = vmatprep.subr.mxu0 0.0
    %1729 = vmatpush1.msra.mxu0 0.0
    %1730 = vmatprep.subr.mxu0 0.0
    %1731 = vmatpush1.msra.mxu0 0.0
    %1732 = vmatprep.subr.mxu0 0.0
    %1733 = vmatpush1.msra.mxu0 0.0
    %1734 = vmatprep.subr.mxu0 0.0
    %1735 = vmatpush1.msra.mxu0 0.0
    %1736 = vmatprep.subr.mxu0 0.0
    %1737 = vmatpush1.msra.mxu0 0.0
    %1738 = vmatprep.subr.mxu0 0.0
    %1739 = vmatpush1.msra.mxu0 0.0
    %1740 = vmatprep.subr.mxu0 0.0
    %1741 = vmatpush1.msra.mxu0 0.0
    %1742 = vmatprep.subr.mxu0 0.0
    %1743 = vmatpush1.msra.mxu0 0.0
    %1744 = vmatprep.subr.mxu0 0.0
    %1745 = vmatpush1.msra.mxu0 0.0
    %1746 = vmatprep.subr.mxu0 0.0
    %1747 = vmatpush1.msra.mxu0 %v1622
    %1748 = vmatprep.subr.mxu0 0.0
    %1749 = vmatpush1.msra.mxu0 %v1621
    %1750 = vmatprep.subr.mxu0 0.0
    %1751 = vmatpush1.msra.mxu0 %v1620
    %1752 = vmatprep.subr.mxu0 0.0
    %1753 = vmatpush1.msra.mxu0 %v1619
    %1754 = vmatprep.subr.mxu0 0.0
    %1755 = vmatpush2.msra.mxu0 0.0
    %1756 = vmatprep.subr.mxu0 0.0
    %1757 = vmatpush2.msra.mxu0 0.0
    %1758 = vmatprep.subr.mxu0 0.0
    %1759 = vmatpush2.msra.mxu0 0.0
    %1760 = vmatprep.subr.mxu0 0.0
    %1761 = vmatpush2.msra.mxu0 0.0
    %1762 = vmatprep.subr.mxu0 0.0
    %1763 = vmatpush2.msra.mxu0 0.0
    %1764 = vmatprep.subr.mxu0 0.0
    %1765 = vmatpush2.msra.mxu0 0.0
    %1766 = vmatprep.subr.mxu0 0.0
    %1767 = vmatpush2.msra.mxu0 0.0
    %1768 = vmatprep.subr.mxu0 0.0
    %1769 = vmatpush2.msra.mxu0 0.0
    %1770 = vmatprep.subr.mxu0 0.0
    %1771 = vmatpush2.msra.mxu0 0.0
    %1772 = vmatprep.subr.mxu0 0.0
    %1773 = vmatpush2.msra.mxu0 0.0
    %1774 = vmatprep.subr.mxu0 0.0
    %1775 = vmatpush2.msra.mxu0 0.0
    %1776 = vmatprep.subr.mxu0 0.0
    %1777 = vmatpush2.msra.mxu0 0.0
    %1778 = vmatprep.subr.mxu0 0.0
    %1779 = vmatpush2.msra.mxu0 0.0
    %1780 = vmatprep.subr.mxu0 0.0
    %1781 = vmatpush2.msra.mxu0 0.0
    %1782 = vmatprep.subr.mxu0 0.0
    %1783 = vmatpush2.msra.mxu0 0.0
    %1784 = vmatprep.subr.mxu0 0.0
    %1785 = vmatpush2.msra.mxu0 0.0
    %1786 = vmatprep.mubr.f32.mxu0 0.0
    %1787 = vmatmul.mubr.f32.gmra.mxu0 %v1720
    %v1788 = vpop.f32.mrf.mxu0
    %v1789 = vadd.f32 0.0, %v1788
    %v1790 = vpop.f32.mrf.mxu0
    %1791 = vdwg.mxu0
    %v1792 = vmul.f32 %v1789, %v1717
    %v1793 = vmul.f32 %v1718, %v1718
    %v1794 = vsub.f32 %v1792, %v1793
    %v1795 = vmax.f32 %v1794, 0.0
    %v1796 = vadd.f32 %v1795, 1e-05
    %v1797 = vrsqrt.pop %v1796
    %v1799 = vsel %vm156, %v1797, 0
    %1801 = vmatprep.subr.mxu0 0.0
    %1802 = vmatpush1.msra.mxu0 0.0
    %1803 = vmatprep.subr.mxu0 0.0
    %1804 = vmatpush1.msra.mxu0 0.0
    %1805 = vmatprep.subr.mxu0 0.0
    %1806 = vmatpush1.msra.mxu0 0.0
    %1807 = vmatprep.subr.mxu0 0.0
    %1808 = vmatpush1.msra.mxu0 0.0
    %1809 = vmatprep.subr.mxu0 0.0
    %1810 = vmatpush1.msra.mxu0 0.0
    %1811 = vmatprep.subr.mxu0 0.0
    %1812 = vmatpush1.msra.mxu0 0.0
    %1813 = vmatprep.subr.mxu0 0.0
    %1814 = vmatpush1.msra.mxu0 0.0
    %1815 = vmatprep.subr.mxu0 0.0
    %1816 = vmatpush1.msra.mxu0 0.0
    %1817 = vmatprep.subr.mxu0 0.0
    %1818 = vmatpush1.msra.mxu0 0.0
    %1819 = vmatprep.subr.mxu0 0.0
    %1820 = vmatpush1.msra.mxu0 0.0
    %1821 = vmatprep.subr.mxu0 0.0
    %1822 = vmatpush1.msra.mxu0 0.0
    %1823 = vmatprep.subr.mxu0 0.0
    %1824 = vmatpush1.msra.mxu0 0.0
    %1825 = vmatprep.subr.mxu0 0.0
    %1826 = vmatpush1.msra.mxu0 0.0
    %1827 = vmatprep.subr.mxu0 0.0
    %1828 = vmatpush1.msra.mxu0 0.0
    %1829 = vmatprep.subr.mxu0 0.0
    %1830 = vmatpush1.msra.mxu0 %v1626
    %1831 = vmatprep.subr.mxu0 0.0
    %1832 = vmatpush1.msra.mxu0 %v1625
    %1833 = vmatprep.subr.mxu0 0.0
    %1834 = vmatpush2.msra.mxu0 0.0
    %1835 = vmatprep.subr.mxu0 0.0
    %1836 = vmatpush2.msra.mxu0 0.0
    %1837 = vmatprep.subr.mxu0 0.0
    %1838 = vmatpush2.msra.mxu0 0.0
    %1839 = vmatprep.subr.mxu0 0.0
    %1840 = vmatpush2.msra.mxu0 0.0
    %1841 = vmatprep.subr.mxu0 0.0
    %1842 = vmatpush2.msra.mxu0 0.0
    %1843 = vmatprep.subr.mxu0 0.0
    %1844 = vmatpush2.msra.mxu0 0.0
    %1845 = vmatprep.subr.mxu0 0.0
    %1846 = vmatpush2.msra.mxu0 0.0
    %1847 = vmatprep.subr.mxu0 0.0
    %1848 = vmatpush2.msra.mxu0 0.0
    %1849 = vmatprep.subr.mxu0 0.0
    %1850 = vmatpush2.msra.mxu0 0.0
    %1851 = vmatprep.subr.mxu0 0.0
    %1852 = vmatpush2.msra.mxu0 0.0
    %1853 = vmatprep.subr.mxu0 0.0
    %1854 = vmatpush2.msra.mxu0 0.0
    %1855 = vmatprep.subr.mxu0 0.0
    %1856 = vmatpush2.msra.mxu0 0.0
    %1857 = vmatprep.subr.mxu0 0.0
    %1858 = vmatpush2.msra.mxu0 0.0
    %1859 = vmatprep.subr.mxu0 0.0
    %1860 = vmatpush2.msra.mxu0 0.0
    %1861 = vmatprep.subr.mxu0 0.0
    %1862 = vmatpush2.msra.mxu0 0.0
    %1863 = vmatprep.subr.mxu0 0.0
    %1864 = vmatpush2.msra.mxu0 0.0
    %1865 = vmatprep.mubr.f32.mxu0 0.0
    %1866 = vmatmul.mubr.f32.gmra.mxu0 %v1799
    %v1867 = vpop.f32.mrf.mxu0
    %v1868 = vadd.f32 0.0, %v1867
    %v1869 = vpop.f32.mrf.mxu0
    %1870 = vdwg.mxu0
    %v1871 = vmul.f32 %v1718, %v1797
    %v1873 = vsel %vm156, %v1871, 0
    %1875 = vmatprep.subr.mxu0 0.0
    %1876 = vmatpush1.msra.mxu0 0.0
    %1877 = vmatprep.subr.mxu0 0.0
    %1878 = vmatpush1.msra.mxu0 0.0
    %1879 = vmatprep.subr.mxu0 0.0
    %1880 = vmatpush1.msra.mxu0 0.0
    %1881 = vmatprep.subr.mxu0 0.0
    %1882 = vmatpush1.msra.mxu0 0.0
    %1883 = vmatprep.subr.mxu0 0.0
    %1884 = vmatpush1.msra.mxu0 0.0
    %1885 = vmatprep.subr.mxu0 0.0
    %1886 = vmatpush1.msra.mxu0 0.0
    %1887 = vmatprep.subr.mxu0 0.0
    %1888 = vmatpush1.msra.mxu0 0.0
    %1889 = vmatprep.subr.mxu0 0.0
    %1890 = vmatpush1.msra.mxu0 0.0
    %1891 = vmatprep.subr.mxu0 0.0
    %1892 = vmatpush1.msra.mxu0 0.0
    %1893 = vmatprep.subr.mxu0 0.0
    %1894 = vmatpush1.msra.mxu0 0.0
    %1895 = vmatprep.subr.mxu0 0.0
    %1896 = vmatpush1.msra.mxu0 0.0
    %1897 = vmatprep.subr.mxu0 0.0
    %1898 = vmatpush1.msra.mxu0 0.0
    %1899 = vmatprep.subr.mxu0 0.0
    %1900 = vmatpush1.msra.mxu0 0.0
    %1901 = vmatprep.subr.mxu0 0.0
    %1902 = vmatpush1.msra.mxu0 0.0
    %1903 = vmatprep.subr.mxu0 0.0
    %1904 = vmatpush1.msra.mxu0 %v1626
    %1905 = vmatprep.subr.mxu0 0.0
    %1906 = vmatpush1.msra.mxu0 %v1625
    %1907 = vmatprep.subr.mxu0 0.0
    %1908 = vmatpush2.msra.mxu0 0.0
    %1909 = vmatprep.subr.mxu0 0.0
    %1910 = vmatpush2.msra.mxu0 0.0
    %1911 = vmatprep.subr.mxu0 0.0
    %1912 = vmatpush2.msra.mxu0 0.0
    %1913 = vmatprep.subr.mxu0 0.0
    %1914 = vmatpush2.msra.mxu0 0.0
    %1915 = vmatprep.subr.mxu0 0.0
    %1916 = vmatpush2.msra.mxu0 0.0
    %1917 = vmatprep.subr.mxu0 0.0
    %1918 = vmatpush2.msra.mxu0 0.0
    %1919 = vmatprep.subr.mxu0 0.0
    %1920 = vmatpush2.msra.mxu0 0.0
    %1921 = vmatprep.subr.mxu0 0.0
    %1922 = vmatpush2.msra.mxu0 0.0
    %1923 = vmatprep.subr.mxu0 0.0
    %1924 = vmatpush2.msra.mxu0 0.0
    %1925 = vmatprep.subr.mxu0 0.0
    %1926 = vmatpush2.msra.mxu0 0.0
    %1927 = vmatprep.subr.mxu0 0.0
    %1928 = vmatpush2.msra.mxu0 0.0
    %1929 = vmatprep.subr.mxu0 0.0
    %1930 = vmatpush2.msra.mxu0 0.0
    %1931 = vmatprep.subr.mxu0 0.0
    %1932 = vmatpush2.msra.mxu0 0.0
    %1933 = vmatprep.subr.mxu0 0.0
    %1934 = vmatpush2.msra.mxu0 0.0
    %1935 = vmatprep.subr.mxu0 0.0
    %1936 = vmatpush2.msra.mxu0 0.0
    %1937 = vmatprep.subr.mxu0 0.0
    %1938 = vmatpush2.msra.mxu0 0.0
    %1939 = vmatprep.mubr.f32.mxu0 0.0
    %1940 = vmatmul.mubr.f32.gmra.mxu0 %v1873
    %v1941 = vpop.f32.mrf.mxu0
    %v1942 = vadd.f32 0.0, %v1941
    %v1943 = vpop.f32.mrf.mxu0
    %1944 = vdwg.mxu0
    %v1945 = vsub.f32 %v1627, %v1942
    %v1946 = vlaneseq
    %v1947 = vshrl.u32 %v1946, 7
    %v1948 = vsub.s32 0, %v1947
    %v1949 = vrot.slane %v1868, %v1948
    %v1950 = vmul.f32 %v1614, %v1949
    %v1951 = vlaneseq
    %v1952 = vshrl.u32 %v1951, 7
    %v1953 = vsub.s32 0, %v1952
    %v1954 = vrot.slane %v1945, %v1953
    %v1955 = vadd.f32 %v1950, %v1954
    %v1956 = vmul.f32 %v1955, 0.01
    %v1957 = vmax.f32 %v1955, %v1956
    %v1958 = vpack.c.bf16 %v1957, %v1957
    %v1959 = vld [vmem:[#allocation2 + $0x170] sm:$0x3]
    %vm1960 = vcmask 31744
    %v1962 = vsel %vm1960, %v1959, 0
    %vm1964 = vcmask 1041408
    %v1966 = vsel %vm1964, %v1958, 0
    %1968 = vmatprep.subr.bf16.mxu0 0
    %1969 = vmatpush1.bf16.msra.mxu0 0
    %1970 = vmatprep.subr.bf16.mxu0 0
    %1971 = vmatpush1.bf16.msra.mxu0 0
    %1972 = vmatprep.subr.bf16.mxu0 0
    %1973 = vmatpush1.bf16.msra.mxu0 0
    %1974 = vmatprep.subr.bf16.mxu0 0
    %1975 = vmatpush1.bf16.msra.mxu0 0
    %1976 = vmatprep.subr.bf16.mxu0 0
    %1977 = vmatpush1.bf16.msra.mxu0 0
    %1978 = vmatprep.subr.bf16.mxu0 0
    %1979 = vmatpush1.bf16.msra.mxu0 0
    %1980 = vmatprep.subr.bf16.mxu0 0
    %1981 = vmatpush1.bf16.msra.mxu0 0
    %1982 = vmatprep.subr.bf16.mxu0 0
    %1983 = vmatpush1.bf16.msra.mxu0 %v1966
    %1984 = vmatprep.subr.bf16.mxu0 0
    %1985 = vmatpush2.bf16.msra.mxu0 0
    %1986 = vmatprep.subr.bf16.mxu0 0
    %1987 = vmatpush2.bf16.msra.mxu0 0
    %1988 = vmatprep.subr.bf16.mxu0 0
    %1989 = vmatpush2.bf16.msra.mxu0 0
    %1990 = vmatprep.subr.bf16.mxu0 0
    %1991 = vmatpush2.bf16.msra.mxu0 0
    %1992 = vmatprep.subr.bf16.mxu0 0
    %1993 = vmatpush2.bf16.msra.mxu0 0
    %1994 = vmatprep.subr.bf16.mxu0 0
    %1995 = vmatpush2.bf16.msra.mxu0 0
    %1996 = vmatprep.subr.bf16.mxu0 0
    %1997 = vmatpush2.bf16.msra.mxu0 0
    %1998 = vmatprep.subr.bf16.mxu0 0
    %1999 = vmatpush2.bf16.msra.mxu0 0
    %2000 = vmatprep.mubr.bf16.mxu0 0
    %2001 = vmatmul.mubr.bf16.gmra.mxu0 %v1962
    %v2002 = vpop.f32.mrf.mxu0
    %v2003 = vadd.f32 0.0, %v2002
    %v2004 = vpop.f32.mrf.mxu0
    %v2005 = vpop.f32.mrf.mxu0
    %v2006 = vpop.f32.mrf.mxu0
    %2007 = vdwg.mxu0
    %v2008 = vpack.c.bf16 %v2003, %v2003
    %v2009 = vld [vmem:[#allocation2 + $0x178] sm:$0xf]
    %v2010 = vld [vmem:[#allocation2 + $0x17c] sm:$0xf]
    %v2011 = vld [vmem:[#allocation2 + $0x180] sm:$0xf]
    %v2012 = vld [vmem:[#allocation2 + $0x184] sm:$0xf]
    %v2013 = vld [vmem:[#allocation2 + $0x188] sm:$0xf]
    %v2014 = vld [vmem:[#allocation2 + $0x18c] sm:$0xf]
    %v2015 = vld [vmem:[#allocation2 + $0x190] sm:$0xf]
    %v2016 = vld [vmem:[#allocation2 + $0x194] sm:$0xf]
    %v2018 = vrot.slane %v2008, 1
    %v2023 = vunpack.c.l.b16 %v2013
    %v2024 = vunpack.c.l.b16 %v2014
    %v2025 = vunpack.c.l.b16 %v2015
    %v2026 = vunpack.c.l.b16 %v2016
    %v2027 = vpack.c.b16 %v2024, %v2023
    %v2028 = vpack.c.b16 %v2026, %v2025
    %v2032 = vsel %vm76, %v2018, 0
    %2034 = vmatprep.subr.bf16.mxu0 0
    %2035 = vmatpush1.bf16.msra.mxu0 0
    %2036 = vmatprep.subr.bf16.mxu0 0
    %2037 = vmatpush1.bf16.msra.mxu0 0
    %2038 = vmatprep.subr.bf16.mxu0 0
    %2039 = vmatpush1.bf16.msra.mxu0 0
    %2040 = vmatprep.subr.bf16.mxu0 0
    %2041 = vmatpush1.bf16.msra.mxu0 0
    %2042 = vmatprep.subr.bf16.mxu0 0
    %2043 = vmatpush1.bf16.msra.mxu0 0
    %2044 = vmatprep.subr.bf16.mxu0 0
    %2045 = vmatpush1.bf16.msra.mxu0 0
    %2046 = vmatprep.subr.bf16.mxu0 0
    %2047 = vmatpush1.bf16.msra.mxu0 %v2028
    %2048 = vmatprep.subr.bf16.mxu0 0
    %2049 = vmatpush1.bf16.msra.mxu0 %v2027
    %2050 = vmatprep.subr.bf16.mxu0 0
    %2051 = vmatpush2.bf16.msra.mxu0 0
    %2052 = vmatprep.subr.bf16.mxu0 0
    %2053 = vmatpush2.bf16.msra.mxu0 0
    %2054 = vmatprep.subr.bf16.mxu0 0
    %2055 = vmatpush2.bf16.msra.mxu0 0
    %2056 = vmatprep.subr.bf16.mxu0 0
    %2057 = vmatpush2.bf16.msra.mxu0 0
    %2058 = vmatprep.subr.bf16.mxu0 0
    %2059 = vmatpush2.bf16.msra.mxu0 0
    %2060 = vmatprep.subr.bf16.mxu0 0
    %2061 = vmatpush2.bf16.msra.mxu0 0
    %2062 = vmatprep.subr.bf16.mxu0 0
    %2063 = vmatpush2.bf16.msra.mxu0 0
    %2064 = vmatprep.subr.bf16.mxu0 0
    %2065 = vmatpush2.bf16.msra.mxu0 0
    %2066 = vmatprep.mubr.bf16.mxu0 0
    %2067 = vmatmul.mubr.bf16.gmra.mxu0 %v2032
    %v2068 = vpop.f32.mrf.mxu0
    %v2069 = vadd.f32 0.0, %v2068
    %v2070 = vpop.f32.mrf.mxu0
    %v2071 = vpop.f32.mrf.mxu0
    %v2072 = vpop.f32.mrf.mxu0
    %2073 = vdwg.mxu0
    %v2078 = vunpack.c.l.b16 %v2009
    %v2079 = vunpack.c.l.b16 %v2010
    %v2080 = vunpack.c.l.b16 %v2011
    %v2081 = vunpack.c.l.b16 %v2012
    %v2082 = vpack.c.b16 %v2079, %v2078
    %v2083 = vpack.c.b16 %v2081, %v2080
    %v2087 = vsel %vm76, %v2008, 0
    %2089 = vmatprep.subr.bf16.mxu0 0
    %2090 = vmatpush1.bf16.msra.mxu0 0
    %2091 = vmatprep.subr.bf16.mxu0 0
    %2092 = vmatpush1.bf16.msra.mxu0 0
    %2093 = vmatprep.subr.bf16.mxu0 0
    %2094 = vmatpush1.bf16.msra.mxu0 0
    %2095 = vmatprep.subr.bf16.mxu0 0
    %2096 = vmatpush1.bf16.msra.mxu0 0
    %2097 = vmatprep.subr.bf16.mxu0 0
    %2098 = vmatpush1.bf16.msra.mxu0 0
    %2099 = vmatprep.subr.bf16.mxu0 0
    %2100 = vmatpush1.bf16.msra.mxu0 0
    %2101 = vmatprep.subr.bf16.mxu0 0
    %2102 = vmatpush1.bf16.msra.mxu0 %v2083
    %2103 = vmatprep.subr.bf16.mxu0 0
    %2104 = vmatpush1.bf16.msra.mxu0 %v2082
    %2105 = vmatprep.subr.bf16.mxu0 0
    %2106 = vmatpush2.bf16.msra.mxu0 0
    %2107 = vmatprep.subr.bf16.mxu0 0
    %2108 = vmatpush2.bf16.msra.mxu0 0
    %2109 = vmatprep.subr.bf16.mxu0 0
    %2110 = vmatpush2.bf16.msra.mxu0 0
    %2111 = vmatprep.subr.bf16.mxu0 0
    %2112 = vmatpush2.bf16.msra.mxu0 0
    %2113 = vmatprep.subr.bf16.mxu0 0
    %2114 = vmatpush2.bf16.msra.mxu0 0
    %2115 = vmatprep.subr.bf16.mxu0 0
    %2116 = vmatpush2.bf16.msra.mxu0 0
    %2117 = vmatprep.subr.bf16.mxu0 0
    %2118 = vmatpush2.bf16.msra.mxu0 0
    %2119 = vmatprep.subr.bf16.mxu0 0
    %2120 = vmatpush2.bf16.msra.mxu0 0
    %2121 = vmatprep.mubr.bf16.mxu0 0
    %2122 = vmatmul.mubr.bf16.gmra.mxu0 %v2087
    %v2123 = vpop.f32.mrf.mxu0
    %v2124 = vadd.f32 %v2069, %v2123
    %v2125 = vpop.f32.mrf.mxu0
    %v2126 = vpop.f32.mrf.mxu0
    %v2127 = vpop.f32.mrf.mxu0
    %2128 = vdwg.mxu0
    %v2129 = vld [vmem:[#allocation5 + $0x30] sm:$0x1]
    %v2130 = vlaneseq
    %v2131 = vshrl.u32 %v2130, 7
    %v2132 = vsub.s32 0, %v2131
    %v2133 = vrot.slane %v2129, %v2132
    %v2134 = vadd.f32 %v2124, %v2133
    %2135 = vst [vmem:[%s4] sm:$0x3] %v2134
    %v2136 = vld [vmem:[%s1] sm:$0x3]
    %v2137 = vmul.f32 %v2134, 0.5
    %v2138 = vmul.f32 %v2137, 1.442695
    %v2139 = vpow.pop %v2138
    %2141 = vrot.lane.b32.xlu0 %v2139, 126
    %v2142 = vpop.permute.xlu0 %2141
    %v2144 = vmul.f32 %v2136, %v2142
    %v2145 = vadd.f32 %v2144, %v2134
    %v2146 = vpack.c.bf16 %v2145, %v2145
    %v2147 = vld [vmem:[#allocation2 + $0x198] sm:$0xf]
    %vm2148 = vcmask 15360
    %v2150 = vsel %vm2148, %v2147, 0
    %vm2152 = vcmask 1040384
    %v2154 = vsel %vm2152, %v2146, 0
    %2156 = vmatprep.subr.bf16.mxu0 0
    %2157 = vmatpush1.bf16.msra.mxu0 0
    %2158 = vmatprep.subr.bf16.mxu0 0
    %2159 = vmatpush1.bf16.msra.mxu0 0
    %2160 = vmatprep.subr.bf16.mxu0 0
    %2161 = vmatpush1.bf16.msra.mxu0 0
    %2162 = vmatprep.subr.bf16.mxu0 0
    %2163 = vmatpush1.bf16.msra.mxu0 0
    %2164 = vmatprep.subr.bf16.mxu0 0
    %2165 = vmatpush1.bf16.msra.mxu0 0
    %2166 = vmatprep.subr.bf16.mxu0 0
    %2167 = vmatpush1.bf16.msra.mxu0 0
    %2168 = vmatprep.subr.bf16.mxu0 0
    %2169 = vmatpush1.bf16.msra.mxu0 0
    %2170 = vmatprep.subr.bf16.mxu0 0
    %2171 = vmatpush1.bf16.msra.mxu0 %v2154
    %2172 = vmatprep.subr.bf16.mxu0 0
    %2173 = vmatpush2.bf16.msra.mxu0 0
    %2174 = vmatprep.subr.bf16.mxu0 0
    %2175 = vmatpush2.bf16.msra.mxu0 0
    %2176 = vmatprep.subr.bf16.mxu0 0
    %2177 = vmatpush2.bf16.msra.mxu0 0
    %2178 = vmatprep.subr.bf16.mxu0 0
    %2179 = vmatpush2.bf16.msra.mxu0 0
    %2180 = vmatprep.subr.bf16.mxu0 0
    %2181 = vmatpush2.bf16.msra.mxu0 0
    %2182 = vmatprep.subr.bf16.mxu0 0
    %2183 = vmatpush2.bf16.msra.mxu0 0
    %2184 = vmatprep.subr.bf16.mxu0 0
    %2185 = vmatpush2.bf16.msra.mxu0 0
    %2186 = vmatprep.subr.bf16.mxu0 0
    %2187 = vmatpush2.bf16.msra.mxu0 0
    %2188 = vmatprep.mubr.bf16.mxu0 0
    %2189 = vmatmul.mubr.bf16.gmra.mxu0 %v2150
    %v2190 = vpop.f32.mrf.mxu0
    %v2191 = vadd.f32 0.0, %v2190
    %v2192 = vpop.f32.mrf.mxu0
    %v2193 = vpop.f32.mrf.mxu0
    %v2194 = vpop.f32.mrf.mxu0
    %2195 = vdwg.mxu0
    %v2196 = vpack.c.bf16 %v2191, %v2191
    %v2197 = vld [vmem:[#allocation2 + $0x1a0] sm:$0x1]
    %v2198 = vld [vmem:[#allocation2 + $0x1a8] sm:$0x1]
    %v2200 = vrot.slane %v2196, 2
    %v2202 = vsel %vm2148, %v2200, 0
    %v2205 = vsel %vm2152, %v2198, 0
    %2207 = vmatprep.subr.bf16.mxu0 0
    %2208 = vmatpush1.bf16.msra.mxu0 0
    %2209 = vmatprep.subr.bf16.mxu0 0
    %2210 = vmatpush1.bf16.msra.mxu0 0
    %2211 = vmatprep.subr.bf16.mxu0 0
    %2212 = vmatpush1.bf16.msra.mxu0 0
    %2213 = vmatprep.subr.bf16.mxu0 0
    %2214 = vmatpush1.bf16.msra.mxu0 0
    %2215 = vmatprep.subr.bf16.mxu0 0
    %2216 = vmatpush1.bf16.msra.mxu0 0
    %2217 = vmatprep.subr.bf16.mxu0 0
    %2218 = vmatpush1.bf16.msra.mxu0 0
    %2219 = vmatprep.subr.bf16.mxu0 0
    %2220 = vmatpush1.bf16.msra.mxu0 0
    %2221 = vmatprep.subr.bf16.mxu0 0
    %2222 = vmatpush1.bf16.msra.mxu0 %v2205
    %2223 = vmatprep.subr.bf16.mxu0 0
    %2224 = vmatpush2.bf16.msra.mxu0 0
    %2225 = vmatprep.subr.bf16.mxu0 0
    %2226 = vmatpush2.bf16.msra.mxu0 0
    %2227 = vmatprep.subr.bf16.mxu0 0
    %2228 = vmatpush2.bf16.msra.mxu0 0
    %2229 = vmatprep.subr.bf16.mxu0 0
    %2230 = vmatpush2.bf16.msra.mxu0 0
    %2231 = vmatprep.subr.bf16.mxu0 0
    %2232 = vmatpush2.bf16.msra.mxu0 0
    %2233 = vmatprep.subr.bf16.mxu0 0
    %2234 = vmatpush2.bf16.msra.mxu0 0
    %2235 = vmatprep.subr.bf16.mxu0 0
    %2236 = vmatpush2.bf16.msra.mxu0 0
    %2237 = vmatprep.subr.bf16.mxu0 0
    %2238 = vmatpush2.bf16.msra.mxu0 0
    %2239 = vmatprep.mubr.bf16.mxu0 0
    %2240 = vmatmul.mubr.bf16.gmra.mxu0 %v2202
    %v2241 = vpop.f32.mrf.mxu0
    %v2242 = vadd.f32 0.0, %v2241
    %v2243 = vpop.f32.mrf.mxu0
    %v2244 = vpop.f32.mrf.mxu0
    %v2245 = vpop.f32.mrf.mxu0
    %2246 = vdwg.mxu0
    %v2248 = vsel %vm2148, %v2196, 0
    %v2251 = vsel %vm2152, %v2197, 0
    %2253 = vmatprep.subr.bf16.mxu0 0
    %2254 = vmatpush1.bf16.msra.mxu0 0
    %2255 = vmatprep.subr.bf16.mxu0 0
    %2256 = vmatpush1.bf16.msra.mxu0 0
    %2257 = vmatprep.subr.bf16.mxu0 0
    %2258 = vmatpush1.bf16.msra.mxu0 0
    %2259 = vmatprep.subr.bf16.mxu0 0
    %2260 = vmatpush1.bf16.msra.mxu0 0
    %2261 = vmatprep.subr.bf16.mxu0 0
    %2262 = vmatpush1.bf16.msra.mxu0 0
    %2263 = vmatprep.subr.bf16.mxu0 0
    %2264 = vmatpush1.bf16.msra.mxu0 0
    %2265 = vmatprep.subr.bf16.mxu0 0
    %2266 = vmatpush1.bf16.msra.mxu0 0
    %2267 = vmatprep.subr.bf16.mxu0 0
    %2268 = vmatpush1.bf16.msra.mxu0 %v2251
    %2269 = vmatprep.subr.bf16.mxu0 0
    %2270 = vmatpush2.bf16.msra.mxu0 0
    %2271 = vmatprep.subr.bf16.mxu0 0
    %2272 = vmatpush2.bf16.msra.mxu0 0
    %2273 = vmatprep.subr.bf16.mxu0 0
    %2274 = vmatpush2.bf16.msra.mxu0 0
    %2275 = vmatprep.subr.bf16.mxu0 0
    %2276 = vmatpush2.bf16.msra.mxu0 0
    %2277 = vmatprep.subr.bf16.mxu0 0
    %2278 = vmatpush2.bf16.msra.mxu0 0
    %2279 = vmatprep.subr.bf16.mxu0 0
    %2280 = vmatpush2.bf16.msra.mxu0 0
    %2281 = vmatprep.subr.bf16.mxu0 0
    %2282 = vmatpush2.bf16.msra.mxu0 0
    %2283 = vmatprep.subr.bf16.mxu0 0
    %2284 = vmatpush2.bf16.msra.mxu0 0
    %2285 = vmatprep.mubr.bf16.mxu0 0
    %2286 = vmatmul.mubr.bf16.gmra.mxu0 %v2248
    %v2287 = vpop.f32.mrf.mxu0
    %v2288 = vadd.f32 %v2242, %v2287
    %v2289 = vpop.f32.mrf.mxu0
    %v2290 = vpop.f32.mrf.mxu0
    %v2291 = vpop.f32.mrf.mxu0
    %2292 = vdwg.mxu0
    %v2293 = vld [vmem:[#allocation5 + $0x38] sm:$0xf]
    %v2294 = vadd.f32 %v2288, %v2293
    %v2295 = vpack.c.bf16 %v2294, %v2294
    %v2296 = vld [vmem:[#allocation2 + $0x1b0] sm:$0xf]
    %v2297 = vld [vmem:[#allocation2 + $0x1b4] sm:$0xf]
    %v2298 = vld [vmem:[#allocation2 + $0x1b8] sm:$0xf]
    %v2302 = vunpack.c.l.b16 %v2296
    %v2303 = vunpack.c.l.b16 %v2297
    %v2304 = vunpack.c.l.b16 %v2298
    %v2305 = vpack.c.b16 %v2303, %v2302
    %v2306 = vpack.c.b16 %v2304, %v2304
    %v2308 = vsel %vm1960, %v2305, 0
    %v2311 = vsel %vm1960, %v2306, 0
    %v2314 = vsel %vm1964, %v2295, 0
    %2316 = vmatprep.subr.bf16.mxu0 0
    %2317 = vmatpush1.bf16.msra.mxu0 0
    %2318 = vmatprep.subr.bf16.mxu0 0
    %2319 = vmatpush1.bf16.msra.mxu0 0
    %2320 = vmatprep.subr.bf16.mxu0 0
    %2321 = vmatpush1.bf16.msra.mxu0 0
    %2322 = vmatprep.subr.bf16.mxu0 0
    %2323 = vmatpush1.bf16.msra.mxu0 0
    %2324 = vmatprep.subr.bf16.mxu0 0
    %2325 = vmatpush1.bf16.msra.mxu0 0
    %2326 = vmatprep.subr.bf16.mxu0 0
    %2327 = vmatpush1.bf16.msra.mxu0 0
    %2328 = vmatprep.subr.bf16.mxu0 0
    %2329 = vmatpush1.bf16.msra.mxu0 0
    %2330 = vmatprep.subr.bf16.mxu0 0
    %2331 = vmatpush1.bf16.msra.mxu0 %v2314
    %2332 = vmatprep.subr.bf16.mxu0 0
    %2333 = vmatpush2.bf16.msra.mxu0 0
    %2334 = vmatprep.subr.bf16.mxu0 0
    %2335 = vmatpush2.bf16.msra.mxu0 0
    %2336 = vmatprep.subr.bf16.mxu0 0
    %2337 = vmatpush2.bf16.msra.mxu0 0
    %2338 = vmatprep.subr.bf16.mxu0 0
    %2339 = vmatpush2.bf16.msra.mxu0 0
    %2340 = vmatprep.subr.bf16.mxu0 0
    %2341 = vmatpush2.bf16.msra.mxu0 0
    %2342 = vmatprep.subr.bf16.mxu0 0
    %2343 = vmatpush2.bf16.msra.mxu0 0
    %2344 = vmatprep.subr.bf16.mxu0 0
    %2345 = vmatpush2.bf16.msra.mxu0 0
    %2346 = vmatprep.subr.bf16.mxu0 0
    %2347 = vmatpush2.bf16.msra.mxu0 0
    %2348 = vmatprep.mubr.bf16.mxu0 0
    %2349 = vmatmul.mubr.bf16.gmra.mxu0 %v2308
    %v2350 = vpop.f32.mrf.mxu0
    %v2351 = vadd.f32 0.0, %v2350
    %v2352 = vpop.f32.mrf.mxu0
    %v2353 = vpop.f32.mrf.mxu0
    %v2354 = vadd.f32 0.0, %v2353
    %v2355 = vpop.f32.mrf.mxu0
    %2356 = vmatprep.mubr.bf16.mxu0 0
    %2357 = vmatmul.mubr.bf16.gmra.mxu0 %v2311
    %v2358 = vpop.f32.mrf.mxu0
    %v2359 = vadd.f32 0.0, %v2358
    %v2360 = vpop.f32.mrf.mxu0
    %v2361 = vpop.f32.mrf.mxu0
    %v2362 = vpop.f32.mrf.mxu0
    %2363 = vdwg.mxu0
    %v2364 = vpack.c.bf16 %v2354, %v2351
    %v2365 = vpack.c.bf16 %v2359, %v2359
    %v2366 = vld [vmem:[#allocation2 + $0x1c0] sm:$0xf]
    %v2367 = vld [vmem:[#allocation2 + $0x1c4] sm:$0xf]
    %v2368 = vld [vmem:[#allocation2 + $0x1c8] sm:$0xf]
    %v2369 = vld [vmem:[#allocation2 + $0x1cc] sm:$0xf]
    %v2370 = vld [vmem:[#allocation2 + $0x1d0] sm:$0xf]
    %v2371 = vld [vmem:[#allocation2 + $0x1d4] sm:$0xf]
    %v2372 = vld [vmem:[#allocation2 + $0x1d8] sm:$0xf]
    %v2373 = vld [vmem:[#allocation2 + $0x1dc] sm:$0xf]
    %v2375 = vrot.slane %v2364, 4
    %v2380 = vunpack.c.l.b16 %v2370
    %v2381 = vunpack.c.l.b16 %v2371
    %v2382 = vunpack.c.l.b16 %v2372
    %v2383 = vunpack.c.l.b16 %v2373
    %v2384 = vpack.c.b16 %v2381, %v2380
    %v2385 = vpack.c.b16 %v2383, %v2382
    %v2389 = vsel %vm76, %v2375, 0
    %2391 = vmatprep.subr.bf16.mxu0 0
    %2392 = vmatpush1.bf16.msra.mxu0 0
    %2393 = vmatprep.subr.bf16.mxu0 0
    %2394 = vmatpush1.bf16.msra.mxu0 0
    %2395 = vmatprep.subr.bf16.mxu0 0
    %2396 = vmatpush1.bf16.msra.mxu0 0
    %2397 = vmatprep.subr.bf16.mxu0 0
    %2398 = vmatpush1.bf16.msra.mxu0 0
    %2399 = vmatprep.subr.bf16.mxu0 0
    %2400 = vmatpush1.bf16.msra.mxu0 0
    %2401 = vmatprep.subr.bf16.mxu0 0
    %2402 = vmatpush1.bf16.msra.mxu0 0
    %2403 = vmatprep.subr.bf16.mxu0 0
    %2404 = vmatpush1.bf16.msra.mxu0 %v2385
    %2405 = vmatprep.subr.bf16.mxu0 0
    %2406 = vmatpush1.bf16.msra.mxu0 %v2384
    %2407 = vmatprep.subr.bf16.mxu0 0
    %2408 = vmatpush2.bf16.msra.mxu0 0
    %2409 = vmatprep.subr.bf16.mxu0 0
    %2410 = vmatpush2.bf16.msra.mxu0 0
    %2411 = vmatprep.subr.bf16.mxu0 0
    %2412 = vmatpush2.bf16.msra.mxu0 0
    %2413 = vmatprep.subr.bf16.mxu0 0
    %2414 = vmatpush2.bf16.msra.mxu0 0
    %2415 = vmatprep.subr.bf16.mxu0 0
    %2416 = vmatpush2.bf16.msra.mxu0 0
    %2417 = vmatprep.subr.bf16.mxu0 0
    %2418 = vmatpush2.bf16.msra.mxu0 0
    %2419 = vmatprep.subr.bf16.mxu0 0
    %2420 = vmatpush2.bf16.msra.mxu0 0
    %2421 = vmatprep.subr.bf16.mxu0 0
    %2422 = vmatpush2.bf16.msra.mxu0 0
    %2423 = vmatprep.mubr.bf16.mxu0 0
    %2424 = vmatmul.mubr.bf16.gmra.mxu0 %v2389
    %v2425 = vpop.f32.mrf.mxu0
    %v2426 = vadd.f32 0.0, %v2425
    %v2427 = vpop.f32.mrf.mxu0
    %v2428 = vpop.f32.mrf.mxu0
    %v2429 = vpop.f32.mrf.mxu0
    %2430 = vdwg.mxu0
    %v2435 = vunpack.c.l.b16 %v2366
    %v2436 = vunpack.c.l.b16 %v2367
    %v2437 = vunpack.c.l.b16 %v2368
    %v2438 = vunpack.c.l.b16 %v2369
    %v2439 = vpack.c.b16 %v2436, %v2435
    %v2440 = vpack.c.b16 %v2438, %v2437
    %v2444 = vsel %vm76, %v2364, 0
    %2446 = vmatprep.subr.bf16.mxu0 0
    %2447 = vmatpush1.bf16.msra.mxu0 0
    %2448 = vmatprep.subr.bf16.mxu0 0
    %2449 = vmatpush1.bf16.msra.mxu0 0
    %2450 = vmatprep.subr.bf16.mxu0 0
    %2451 = vmatpush1.bf16.msra.mxu0 0
    %2452 = vmatprep.subr.bf16.mxu0 0
    %2453 = vmatpush1.bf16.msra.mxu0 0
    %2454 = vmatprep.subr.bf16.mxu0 0
    %2455 = vmatpush1.bf16.msra.mxu0 0
    %2456 = vmatprep.subr.bf16.mxu0 0
    %2457 = vmatpush1.bf16.msra.mxu0 0
    %2458 = vmatprep.subr.bf16.mxu0 0
    %2459 = vmatpush1.bf16.msra.mxu0 %v2440
    %2460 = vmatprep.subr.bf16.mxu0 0
    %2461 = vmatpush1.bf16.msra.mxu0 %v2439
    %2462 = vmatprep.subr.bf16.mxu0 0
    %2463 = vmatpush2.bf16.msra.mxu0 0
    %2464 = vmatprep.subr.bf16.mxu0 0
    %2465 = vmatpush2.bf16.msra.mxu0 0
    %2466 = vmatprep.subr.bf16.mxu0 0
    %2467 = vmatpush2.bf16.msra.mxu0 0
    %2468 = vmatprep.subr.bf16.mxu0 0
    %2469 = vmatpush2.bf16.msra.mxu0 0
    %2470 = vmatprep.subr.bf16.mxu0 0
    %2471 = vmatpush2.bf16.msra.mxu0 0
    %2472 = vmatprep.subr.bf16.mxu0 0
    %2473 = vmatpush2.bf16.msra.mxu0 0
    %2474 = vmatprep.subr.bf16.mxu0 0
    %2475 = vmatpush2.bf16.msra.mxu0 0
    %2476 = vmatprep.subr.bf16.mxu0 0
    %2477 = vmatpush2.bf16.msra.mxu0 0
    %2478 = vmatprep.mubr.bf16.mxu0 0
    %2479 = vmatmul.mubr.bf16.gmra.mxu0 %v2444
    %v2480 = vpop.f32.mrf.mxu0
    %v2481 = vadd.f32 %v2426, %v2480
    %v2482 = vpop.f32.mrf.mxu0
    %v2483 = vpop.f32.mrf.mxu0
    %v2484 = vpop.f32.mrf.mxu0
    %2485 = vdwg.mxu0
    %v2486 = vld [vmem:[#allocation2 + $0x1e0] sm:$0xf]
    %v2487 = vld [vmem:[#allocation2 + $0x1e4] sm:$0xf]
    %v2488 = vld [vmem:[#allocation2 + $0x1e8] sm:$0xf]
    %v2489 = vld [vmem:[#allocation2 + $0x1ec] sm:$0xf]
    %v2494 = vunpack.c.l.b16 %v2486
    %v2495 = vunpack.c.l.b16 %v2487
    %v2496 = vunpack.c.l.b16 %v2488
    %v2497 = vunpack.c.l.b16 %v2489
    %v2498 = vpack.c.b16 %v2495, %v2494
    %v2499 = vpack.c.b16 %v2497, %v2496
    %v2503 = vsel %vm76, %v2365, 0
    %2505 = vmatprep.subr.bf16.mxu0 0
    %2506 = vmatpush1.bf16.msra.mxu0 0
    %2507 = vmatprep.subr.bf16.mxu0 0
    %2508 = vmatpush1.bf16.msra.mxu0 0
    %2509 = vmatprep.subr.bf16.mxu0 0
    %2510 = vmatpush1.bf16.msra.mxu0 0
    %2511 = vmatprep.subr.bf16.mxu0 0
    %2512 = vmatpush1.bf16.msra.mxu0 0
    %2513 = vmatprep.subr.bf16.mxu0 0
    %2514 = vmatpush1.bf16.msra.mxu0 0
    %2515 = vmatprep.subr.bf16.mxu0 0
    %2516 = vmatpush1.bf16.msra.mxu0 0
    %2517 = vmatprep.subr.bf16.mxu0 0
    %2518 = vmatpush1.bf16.msra.mxu0 %v2499
    %2519 = vmatprep.subr.bf16.mxu0 0
    %2520 = vmatpush1.bf16.msra.mxu0 %v2498
    %2521 = vmatprep.subr.bf16.mxu0 0
    %2522 = vmatpush2.bf16.msra.mxu0 0
    %2523 = vmatprep.subr.bf16.mxu0 0
    %2524 = vmatpush2.bf16.msra.mxu0 0
    %2525 = vmatprep.subr.bf16.mxu0 0
    %2526 = vmatpush2.bf16.msra.mxu0 0
    %2527 = vmatprep.subr.bf16.mxu0 0
    %2528 = vmatpush2.bf16.msra.mxu0 0
    %2529 = vmatprep.subr.bf16.mxu0 0
    %2530 = vmatpush2.bf16.msra.mxu0 0
    %2531 = vmatprep.subr.bf16.mxu0 0
    %2532 = vmatpush2.bf16.msra.mxu0 0
    %2533 = vmatprep.subr.bf16.mxu0 0
    %2534 = vmatpush2.bf16.msra.mxu0 0
    %2535 = vmatprep.subr.bf16.mxu0 0
    %2536 = vmatpush2.bf16.msra.mxu0 0
    %2537 = vmatprep.mubr.bf16.mxu0 0
    %2538 = vmatmul.mubr.bf16.gmra.mxu0 %v2503
    %v2539 = vpop.f32.mrf.mxu0
    %v2540 = vadd.f32 0.0, %v2539
    %v2541 = vpop.f32.mrf.mxu0
    %v2542 = vpop.f32.mrf.mxu0
    %v2543 = vpop.f32.mrf.mxu0
    %2544 = vdwg.mxu0
    %v2545 = vadd.f32 %v2481, %v2540
    %v2546 = vld [vmem:[#allocation5 + $0x40] sm:$0x1]
    %v2547 = vlaneseq
    %v2548 = vshrl.u32 %v2547, 7
    %v2549 = vsub.s32 0, %v2548
    %v2550 = vrot.slane %v2546, %v2549
    %v2551 = vadd.f32 %v2545, %v2550
    %v2552 = vld [vmem:[#allocation2 + $0x1f0] sm:$0xf]
    %v2553 = vld [vmem:[#allocation2 + $0x1f4] sm:$0xf]
    %v2554 = vld [vmem:[#allocation2 + $0x1f8] sm:$0xf]
    %v2555 = vld [vmem:[#allocation2 + $0x1fc] sm:$0xf]
    %v2556 = vld [vmem:[#allocation2 + $0x200] sm:$0xf]
    %v2557 = vld [vmem:[#allocation2 + $0x204] sm:$0xf]
    %v2558 = vld [vmem:[#allocation2 + $0x208] sm:$0xf]
    %v2559 = vld [vmem:[#allocation2 + $0x20c] sm:$0xf]
    %v2560 = vunpack.c.l.bf16 %v2552
    %v2561 = vunpack.c.l.bf16 %v2553
    %v2562 = vunpack.c.l.bf16 %v2554
    %v2563 = vunpack.c.l.bf16 %v2555
    %v2564 = vunpack.c.l.bf16 %v2556
    %v2565 = vunpack.c.l.bf16 %v2557
    %v2566 = vunpack.c.l.bf16 %v2558
    %v2567 = vunpack.c.l.bf16 %v2559
    %v2568 = vld [vmem:[#allocation2 + $0x210] sm:$0xf]
    %v2569 = vld [vmem:[#allocation2 + $0x214] sm:$0xf]
    %v2570 = vunpack.c.l.bf16 %v2568
    %v2571 = vunpack.c.l.bf16 %v2569
    %v2572 = vld [vmem:[#allocation5 + $0x48] sm:$0x1]
    %v2573 = vsel %vm331, %v2551, 0.0
    %v2574 = vrot.slane %v2573, 4
    %v2575 = vadd.f32 %v2573, %v2574
    %v2576 = vrot.slane %v2575, 2
    %v2577 = vadd.f32 %v2575, %v2576
    %v2578 = vrot.slane %v2577, 1
    %v2579 = vadd.f32 %v2577, %v2578
    %v2580 = vmul.f32 %v2551, %v2551
    %v2581 = vsel %vm331, %v2580, 0.0
    %v2582 = vrot.slane %v2581, 4
    %v2583 = vadd.f32 %v2581, %v2582
    %v2584 = vrot.slane %v2583, 2
    %v2585 = vadd.f32 %v2583, %v2584
    %v2586 = vrot.slane %v2585, 1
    %v2587 = vadd.f32 %v2585, %v2586
    %v2589 = vsel %vm331, %v2579, 0
    %2591 = vmatprep.subr.mxu0 0.0
    %2592 = vmatpush1.msra.mxu0 0.0
    %2593 = vmatprep.subr.mxu0 0.0
    %2594 = vmatpush1.msra.mxu0 0.0
    %2595 = vmatprep.subr.mxu0 0.0
    %2596 = vmatpush1.msra.mxu0 0.0
    %2597 = vmatprep.subr.mxu0 0.0
    %2598 = vmatpush1.msra.mxu0 0.0
    %2599 = vmatprep.subr.mxu0 0.0
    %2600 = vmatpush1.msra.mxu0 0.0
    %2601 = vmatprep.subr.mxu0 0.0
    %2602 = vmatpush1.msra.mxu0 0.0
    %2603 = vmatprep.subr.mxu0 0.0
    %2604 = vmatpush1.msra.mxu0 0.0
    %2605 = vmatprep.subr.mxu0 0.0
    %2606 = vmatpush1.msra.mxu0 0.0
    %2607 = vmatprep.subr.mxu0 0.0
    %2608 = vmatpush1.msra.mxu0 %v2567
    %2609 = vmatprep.subr.mxu0 0.0
    %2610 = vmatpush1.msra.mxu0 %v2566
    %2611 = vmatprep.subr.mxu0 0.0
    %2612 = vmatpush1.msra.mxu0 %v2565
    %2613 = vmatprep.subr.mxu0 0.0
    %2614 = vmatpush1.msra.mxu0 %v2564
    %2615 = vmatprep.subr.mxu0 0.0
    %2616 = vmatpush1.msra.mxu0 %v2563
    %2617 = vmatprep.subr.mxu0 0.0
    %2618 = vmatpush1.msra.mxu0 %v2562
    %2619 = vmatprep.subr.mxu0 0.0
    %2620 = vmatpush1.msra.mxu0 %v2561
    %2621 = vmatprep.subr.mxu0 0.0
    %2622 = vmatpush1.msra.mxu0 %v2560
    %2623 = vmatprep.subr.mxu0 0.0
    %2624 = vmatpush2.msra.mxu0 0.0
    %2625 = vmatprep.subr.mxu0 0.0
    %2626 = vmatpush2.msra.mxu0 0.0
    %2627 = vmatprep.subr.mxu0 0.0
    %2628 = vmatpush2.msra.mxu0 0.0
    %2629 = vmatprep.subr.mxu0 0.0
    %2630 = vmatpush2.msra.mxu0 0.0
    %2631 = vmatprep.subr.mxu0 0.0
    %2632 = vmatpush2.msra.mxu0 0.0
    %2633 = vmatprep.subr.mxu0 0.0
    %2634 = vmatpush2.msra.mxu0 0.0
    %2635 = vmatprep.subr.mxu0 0.0
    %2636 = vmatpush2.msra.mxu0 0.0
    %2637 = vmatprep.subr.mxu0 0.0
    %2638 = vmatpush2.msra.mxu0 0.0
    %2639 = vmatprep.subr.mxu0 0.0
    %2640 = vmatpush2.msra.mxu0 0.0
    %2641 = vmatprep.subr.mxu0 0.0
    %2642 = vmatpush2.msra.mxu0 0.0
    %2643 = vmatprep.subr.mxu0 0.0
    %2644 = vmatpush2.msra.mxu0 0.0
    %2645 = vmatprep.subr.mxu0 0.0
    %2646 = vmatpush2.msra.mxu0 0.0
    %2647 = vmatprep.subr.mxu0 0.0
    %2648 = vmatpush2.msra.mxu0 0.0
    %2649 = vmatprep.subr.mxu0 0.0
    %2650 = vmatpush2.msra.mxu0 0.0
    %2651 = vmatprep.subr.mxu0 0.0
    %2652 = vmatpush2.msra.mxu0 0.0
    %2653 = vmatprep.subr.mxu0 0.0
    %2654 = vmatpush2.msra.mxu0 0.0
    %2655 = vmatprep.mubr.f32.mxu0 0.0
    %2656 = vmatmul.mubr.f32.gmra.mxu0 %v2589
    %v2657 = vpop.f32.mrf.mxu0
    %v2658 = vadd.f32 0.0, %v2657
    %v2659 = vpop.f32.mrf.mxu0
    %2660 = vdwg.mxu0
    %v2661 = vmul.f32 %v2658, %v1082
    %v2663 = vsel %vm331, %v2587, 0
    %2665 = vmatprep.subr.mxu0 0.0
    %2666 = vmatpush1.msra.mxu0 0.0
    %2667 = vmatprep.subr.mxu0 0.0
    %2668 = vmatpush1.msra.mxu0 0.0
    %2669 = vmatprep.subr.mxu0 0.0
    %2670 = vmatpush1.msra.mxu0 0.0
    %2671 = vmatprep.subr.mxu0 0.0
    %2672 = vmatpush1.msra.mxu0 0.0
    %2673 = vmatprep.subr.mxu0 0.0
    %2674 = vmatpush1.msra.mxu0 0.0
    %2675 = vmatprep.subr.mxu0 0.0
    %2676 = vmatpush1.msra.mxu0 0.0
    %2677 = vmatprep.subr.mxu0 0.0
    %2678 = vmatpush1.msra.mxu0 0.0
    %2679 = vmatprep.subr.mxu0 0.0
    %2680 = vmatpush1.msra.mxu0 0.0
    %2681 = vmatprep.subr.mxu0 0.0
    %2682 = vmatpush1.msra.mxu0 %v2567
    %2683 = vmatprep.subr.mxu0 0.0
    %2684 = vmatpush1.msra.mxu0 %v2566
    %2685 = vmatprep.subr.mxu0 0.0
    %2686 = vmatpush1.msra.mxu0 %v2565
    %2687 = vmatprep.subr.mxu0 0.0
    %2688 = vmatpush1.msra.mxu0 %v2564
    %2689 = vmatprep.subr.mxu0 0.0
    %2690 = vmatpush1.msra.mxu0 %v2563
    %2691 = vmatprep.subr.mxu0 0.0
    %2692 = vmatpush1.msra.mxu0 %v2562
    %2693 = vmatprep.subr.mxu0 0.0
    %2694 = vmatpush1.msra.mxu0 %v2561
    %2695 = vmatprep.subr.mxu0 0.0
    %2696 = vmatpush1.msra.mxu0 %v2560
    %2697 = vmatprep.subr.mxu0 0.0
    %2698 = vmatpush2.msra.mxu0 0.0
    %2699 = vmatprep.subr.mxu0 0.0
    %2700 = vmatpush2.msra.mxu0 0.0
    %2701 = vmatprep.subr.mxu0 0.0
    %2702 = vmatpush2.msra.mxu0 0.0
    %2703 = vmatprep.subr.mxu0 0.0
    %2704 = vmatpush2.msra.mxu0 0.0
    %2705 = vmatprep.subr.mxu0 0.0
    %2706 = vmatpush2.msra.mxu0 0.0
    %2707 = vmatprep.subr.mxu0 0.0
    %2708 = vmatpush2.msra.mxu0 0.0
    %2709 = vmatprep.subr.mxu0 0.0
    %2710 = vmatpush2.msra.mxu0 0.0
    %2711 = vmatprep.subr.mxu0 0.0
    %2712 = vmatpush2.msra.mxu0 0.0
    %2713 = vmatprep.subr.mxu0 0.0
    %2714 = vmatpush2.msra.mxu0 0.0
    %2715 = vmatprep.subr.mxu0 0.0
    %2716 = vmatpush2.msra.mxu0 0.0
    %2717 = vmatprep.subr.mxu0 0.0
    %2718 = vmatpush2.msra.mxu0 0.0
    %2719 = vmatprep.subr.mxu0 0.0
    %2720 = vmatpush2.msra.mxu0 0.0
    %2721 = vmatprep.subr.mxu0 0.0
    %2722 = vmatpush2.msra.mxu0 0.0
    %2723 = vmatprep.subr.mxu0 0.0
    %2724 = vmatpush2.msra.mxu0 0.0
    %2725 = vmatprep.subr.mxu0 0.0
    %2726 = vmatpush2.msra.mxu0 0.0
    %2727 = vmatprep.subr.mxu0 0.0
    %2728 = vmatpush2.msra.mxu0 0.0
    %2729 = vmatprep.mubr.f32.mxu0 0.0
    %2730 = vmatmul.mubr.f32.gmra.mxu0 %v2663
    %v2731 = vpop.f32.mrf.mxu0
    %v2732 = vadd.f32 0.0, %v2731
    %v2733 = vpop.f32.mrf.mxu0
    %2734 = vdwg.mxu0
    %v2735 = vmul.f32 %v2732, %v1082
    %v2736 = vmul.f32 %v2661, %v2661
    %v2737 = vsub.f32 %v2735, %v2736
    %v2738 = vmax.f32 %v2737, 0.0
    %v2739 = vadd.f32 %v2738, 1e-05
    %v2740 = vrsqrt.pop %v2739
    %v2742 = vsel %vm156, %v2740, 0
    %2744 = vmatprep.subr.mxu0 0.0
    %2745 = vmatpush1.msra.mxu0 0.0
    %2746 = vmatprep.subr.mxu0 0.0
    %2747 = vmatpush1.msra.mxu0 0.0
    %2748 = vmatprep.subr.mxu0 0.0
    %2749 = vmatpush1.msra.mxu0 0.0
    %2750 = vmatprep.subr.mxu0 0.0
    %2751 = vmatpush1.msra.mxu0 0.0
    %2752 = vmatprep.subr.mxu0 0.0
    %2753 = vmatpush1.msra.mxu0 0.0
    %2754 = vmatprep.subr.mxu0 0.0
    %2755 = vmatpush1.msra.mxu0 0.0
    %2756 = vmatprep.subr.mxu0 0.0
    %2757 = vmatpush1.msra.mxu0 0.0
    %2758 = vmatprep.subr.mxu0 0.0
    %2759 = vmatpush1.msra.mxu0 0.0
    %2760 = vmatprep.subr.mxu0 0.0
    %2761 = vmatpush1.msra.mxu0 0.0
    %2762 = vmatprep.subr.mxu0 0.0
    %2763 = vmatpush1.msra.mxu0 0.0
    %2764 = vmatprep.subr.mxu0 0.0
    %2765 = vmatpush1.msra.mxu0 0.0
    %2766 = vmatprep.subr.mxu0 0.0
    %2767 = vmatpush1.msra.mxu0 0.0
    %2768 = vmatprep.subr.mxu0 0.0
    %2769 = vmatpush1.msra.mxu0 0.0
    %2770 = vmatprep.subr.mxu0 0.0
    %2771 = vmatpush1.msra.mxu0 0.0
    %2772 = vmatprep.subr.mxu0 0.0
    %2773 = vmatpush1.msra.mxu0 %v2571
    %2774 = vmatprep.subr.mxu0 0.0
    %2775 = vmatpush1.msra.mxu0 %v2570
    %2776 = vmatprep.subr.mxu0 0.0
    %2777 = vmatpush2.msra.mxu0 0.0
    %2778 = vmatprep.subr.mxu0 0.0
    %2779 = vmatpush2.msra.mxu0 0.0
    %2780 = vmatprep.subr.mxu0 0.0
    %2781 = vmatpush2.msra.mxu0 0.0
    %2782 = vmatprep.subr.mxu0 0.0
    %2783 = vmatpush2.msra.mxu0 0.0
    %2784 = vmatprep.subr.mxu0 0.0
    %2785 = vmatpush2.msra.mxu0 0.0
    %2786 = vmatprep.subr.mxu0 0.0
    %2787 = vmatpush2.msra.mxu0 0.0
    %2788 = vmatprep.subr.mxu0 0.0
    %2789 = vmatpush2.msra.mxu0 0.0
    %2790 = vmatprep.subr.mxu0 0.0
    %2791 = vmatpush2.msra.mxu0 0.0
    %2792 = vmatprep.subr.mxu0 0.0
    %2793 = vmatpush2.msra.mxu0 0.0
    %2794 = vmatprep.subr.mxu0 0.0
    %2795 = vmatpush2.msra.mxu0 0.0
    %2796 = vmatprep.subr.mxu0 0.0
    %2797 = vmatpush2.msra.mxu0 0.0
    %2798 = vmatprep.subr.mxu0 0.0
    %2799 = vmatpush2.msra.mxu0 0.0
    %2800 = vmatprep.subr.mxu0 0.0
    %2801 = vmatpush2.msra.mxu0 0.0
    %2802 = vmatprep.subr.mxu0 0.0
    %2803 = vmatpush2.msra.mxu0 0.0
    %2804 = vmatprep.subr.mxu0 0.0
    %2805 = vmatpush2.msra.mxu0 0.0
    %2806 = vmatprep.subr.mxu0 0.0
    %2807 = vmatpush2.msra.mxu0 0.0
    %2808 = vmatprep.mubr.f32.mxu0 0.0
    %2809 = vmatmul.mubr.f32.gmra.mxu0 %v2742
    %v2810 = vpop.f32.mrf.mxu0
    %v2811 = vadd.f32 0.0, %v2810
    %v2812 = vpop.f32.mrf.mxu0
    %2813 = vdwg.mxu0
    %v2814 = vmul.f32 %v2661, %v2740
    %v2816 = vsel %vm156, %v2814, 0
    %2818 = vmatprep.subr.mxu0 0.0
    %2819 = vmatpush1.msra.mxu0 0.0
    %2820 = vmatprep.subr.mxu0 0.0
    %2821 = vmatpush1.msra.mxu0 0.0
    %2822 = vmatprep.subr.mxu0 0.0
    %2823 = vmatpush1.msra.mxu0 0.0
    %2824 = vmatprep.subr.mxu0 0.0
    %2825 = vmatpush1.msra.mxu0 0.0
    %2826 = vmatprep.subr.mxu0 0.0
    %2827 = vmatpush1.msra.mxu0 0.0
    %2828 = vmatprep.subr.mxu0 0.0
    %2829 = vmatpush1.msra.mxu0 0.0
    %2830 = vmatprep.subr.mxu0 0.0
    %2831 = vmatpush1.msra.mxu0 0.0
    %2832 = vmatprep.subr.mxu0 0.0
    %2833 = vmatpush1.msra.mxu0 0.0
    %2834 = vmatprep.subr.mxu0 0.0
    %2835 = vmatpush1.msra.mxu0 0.0
    %2836 = vmatprep.subr.mxu0 0.0
    %2837 = vmatpush1.msra.mxu0 0.0
    %2838 = vmatprep.subr.mxu0 0.0
    %2839 = vmatpush1.msra.mxu0 0.0
    %2840 = vmatprep.subr.mxu0 0.0
    %2841 = vmatpush1.msra.mxu0 0.0
    %2842 = vmatprep.subr.mxu0 0.0
    %2843 = vmatpush1.msra.mxu0 0.0
    %2844 = vmatprep.subr.mxu0 0.0
    %2845 = vmatpush1.msra.mxu0 0.0
    %2846 = vmatprep.subr.mxu0 0.0
    %2847 = vmatpush1.msra.mxu0 %v2571
    %2848 = vmatprep.subr.mxu0 0.0
    %2849 = vmatpush1.msra.mxu0 %v2570
    %2850 = vmatprep.subr.mxu0 0.0
    %2851 = vmatpush2.msra.mxu0 0.0
    %2852 = vmatprep.subr.mxu0 0.0
    %2853 = vmatpush2.msra.mxu0 0.0
    %2854 = vmatprep.subr.mxu0 0.0
    %2855 = vmatpush2.msra.mxu0 0.0
    %2856 = vmatprep.subr.mxu0 0.0
    %2857 = vmatpush2.msra.mxu0 0.0
    %2858 = vmatprep.subr.mxu0 0.0
    %2859 = vmatpush2.msra.mxu0 0.0
    %2860 = vmatprep.subr.mxu0 0.0
    %2861 = vmatpush2.msra.mxu0 0.0
    %2862 = vmatprep.subr.mxu0 0.0
    %2863 = vmatpush2.msra.mxu0 0.0
    %2864 = vmatprep.subr.mxu0 0.0
    %2865 = vmatpush2.msra.mxu0 0.0
    %2866 = vmatprep.subr.mxu0 0.0
    %2867 = vmatpush2.msra.mxu0 0.0
    %2868 = vmatprep.subr.mxu0 0.0
    %2869 = vmatpush2.msra.mxu0 0.0
    %2870 = vmatprep.subr.mxu0 0.0
    %2871 = vmatpush2.msra.mxu0 0.0
    %2872 = vmatprep.subr.mxu0 0.0
    %2873 = vmatpush2.msra.mxu0 0.0
    %2874 = vmatprep.subr.mxu0 0.0
    %2875 = vmatpush2.msra.mxu0 0.0
    %2876 = vmatprep.subr.mxu0 0.0
    %2877 = vmatpush2.msra.mxu0 0.0
    %2878 = vmatprep.subr.mxu0 0.0
    %2879 = vmatpush2.msra.mxu0 0.0
    %2880 = vmatprep.subr.mxu0 0.0
    %2881 = vmatpush2.msra.mxu0 0.0
    %2882 = vmatprep.mubr.f32.mxu0 0.0
    %2883 = vmatmul.mubr.f32.gmra.mxu0 %v2816
    %v2884 = vpop.f32.mrf.mxu0
    %v2885 = vadd.f32 0.0, %v2884
    %v2886 = vpop.f32.mrf.mxu0
    %2887 = vdwg.mxu0
    %v2888 = vsub.f32 %v2572, %v2885
    %v2889 = vlaneseq
    %v2890 = vshrl.u32 %v2889, 7
    %v2891 = vsub.s32 0, %v2890
    %v2892 = vrot.slane %v2811, %v2891
    %v2893 = vmul.f32 %v2551, %v2892
    %v2894 = vlaneseq
    %v2895 = vshrl.u32 %v2894, 7
    %v2896 = vsub.s32 0, %v2895
    %v2897 = vrot.slane %v2888, %v2896
    %v2898 = vadd.f32 %v2893, %v2897
    %v2899 = vmul.f32 %v2898, 0.01
    %v2900 = vmax.f32 %v2898, %v2899
    %v2901 = vpack.c.bf16 %v2900, %v2900
    %v2902 = vld [vmem:[#allocation2 + $0x218] sm:$0xf]
    %v2903 = vld [vmem:[#allocation2 + $0x21c] sm:$0xf]
    %v2904 = vld [vmem:[#allocation2 + $0x220] sm:$0xf]
    %v2905 = vld [vmem:[#allocation2 + $0x224] sm:$0xf]
    %v2906 = vld [vmem:[#allocation2 + $0x228] sm:$0xf]
    %v2907 = vld [vmem:[#allocation2 + $0x22c] sm:$0xf]
    %v2914 = vunpack.c.l.b16 %v2902
    %v2915 = vunpack.c.l.b16 %v2903
    %v2916 = vunpack.c.l.b16 %v2904
    %v2917 = vunpack.c.l.b16 %v2905
    %v2918 = vunpack.c.l.b16 %v2906
    %v2919 = vunpack.c.l.b16 %v2907
    %v2920 = vpack.c.b16 %v2915, %v2914
    %v2921 = vpack.c.b16 %v2917, %v2916
    %v2922 = vpack.c.b16 %v2919, %v2918
    %v2924 = vsel %vm506, %v2920, 0
    %v2927 = vsel %vm506, %v2921, 0
    %v2930 = vsel %vm506, %v2922, 0
    %v2933 = vsel %vm1334, %v2901, 0
    %2935 = vmatprep.subr.bf16.mxu0 0
    %2936 = vmatpush1.bf16.msra.mxu0 0
    %2937 = vmatprep.subr.bf16.mxu0 0
    %2938 = vmatpush1.bf16.msra.mxu0 0
    %2939 = vmatprep.subr.bf16.mxu0 0
    %2940 = vmatpush1.bf16.msra.mxu0 0
    %2941 = vmatprep.subr.bf16.mxu0 0
    %2942 = vmatpush1.bf16.msra.mxu0 0
    %2943 = vmatprep.subr.bf16.mxu0 0
    %2944 = vmatpush1.bf16.msra.mxu0 0
    %2945 = vmatprep.subr.bf16.mxu0 0
    %2946 = vmatpush1.bf16.msra.mxu0 0
    %2947 = vmatprep.subr.bf16.mxu0 0
    %2948 = vmatpush1.bf16.msra.mxu0 0
    %2949 = vmatprep.subr.bf16.mxu0 0
    %2950 = vmatpush1.bf16.msra.mxu0 %v2933
    %2951 = vmatprep.subr.bf16.mxu0 0
    %2952 = vmatpush2.bf16.msra.mxu0 0
    %2953 = vmatprep.subr.bf16.mxu0 0
    %2954 = vmatpush2.bf16.msra.mxu0 0
    %2955 = vmatprep.subr.bf16.mxu0 0
    %2956 = vmatpush2.bf16.msra.mxu0 0
    %2957 = vmatprep.subr.bf16.mxu0 0
    %2958 = vmatpush2.bf16.msra.mxu0 0
    %2959 = vmatprep.subr.bf16.mxu0 0
    %2960 = vmatpush2.bf16.msra.mxu0 0
    %2961 = vmatprep.subr.bf16.mxu0 0
    %2962 = vmatpush2.bf16.msra.mxu0 0
    %2963 = vmatprep.subr.bf16.mxu0 0
    %2964 = vmatpush2.bf16.msra.mxu0 0
    %2965 = vmatprep.subr.bf16.mxu0 0
    %2966 = vmatpush2.bf16.msra.mxu0 0
    %2967 = vmatprep.mubr.bf16.mxu0 0
    %2968 = vmatmul.mubr.bf16.gmra.mxu0 %v2924
    %v2969 = vpop.f32.mrf.mxu0
    %v2970 = vadd.f32 0.0, %v2969
    %v2971 = vpop.f32.mrf.mxu0
    %v2972 = vpop.f32.mrf.mxu0
    %v2973 = vadd.f32 0.0, %v2972
    %v2974 = vpop.f32.mrf.mxu0
    %2975 = vmatprep.mubr.bf16.mxu0 0
    %2976 = vmatmul.mubr.bf16.gmra.mxu0 %v2927
    %v2977 = vpop.f32.mrf.mxu0
    %v2978 = vadd.f32 0.0, %v2977
    %v2979 = vpop.f32.mrf.mxu0
    %v2980 = vpop.f32.mrf.mxu0
    %v2981 = vadd.f32 0.0, %v2980
    %v2982 = vpop.f32.mrf.mxu0
    %2983 = vmatprep.mubr.bf16.mxu0 0
    %2984 = vmatmul.mubr.bf16.gmra.mxu0 %v2930
    %v2985 = vpop.f32.mrf.mxu0
    %v2986 = vadd.f32 0.0, %v2985
    %v2987 = vpop.f32.mrf.mxu0
    %v2988 = vpop.f32.mrf.mxu0
    %v2989 = vadd.f32 0.0, %v2988
    %v2990 = vpop.f32.mrf.mxu0
    %2991 = vdwg.mxu0
    %v2992 = vpack.c.bf16 %v2973, %v2970
    %v2993 = vpack.c.bf16 %v2981, %v2978
    %v2994 = vpack.c.bf16 %v2989, %v2986
    %v2995 = vld [vmem:[#allocation2 + $0x230] sm:$0xf]
    %v2996 = vld [vmem:[#allocation2 + $0x234] sm:$0xf]
    %v2997 = vld [vmem:[#allocation2 + $0x238] sm:$0xf]
    %v2998 = vld [vmem:[#allocation2 + $0x23c] sm:$0xf]
    %v2999 = vld [vmem:[#allocation2 + $0x240] sm:$0xf]
    %v3000 = vld [vmem:[#allocation2 + $0x244] sm:$0xf]
    %v3001 = vld [vmem:[#allocation2 + $0x248] sm:$0xf]
    %v3002 = vld [vmem:[#allocation2 + $0x24c] sm:$0xf]
    %v3003 = vld [vmem:[#allocation2 + $0x250] sm:$0xf]
    %v3004 = vld [vmem:[#allocation2 + $0x254] sm:$0xf]
    %v3005 = vld [vmem:[#allocation2 + $0x258] sm:$0xf]
    %v3006 = vld [vmem:[#allocation2 + $0x25c] sm:$0xf]
    %v3007 = vld [vmem:[#allocation2 + $0x260] sm:$0xf]
    %v3008 = vld [vmem:[#allocation2 + $0x264] sm:$0xf]
    %v3009 = vld [vmem:[#allocation2 + $0x268] sm:$0xf]
    %v3010 = vld [vmem:[#allocation2 + $0x26c] sm:$0xf]
    %v3019 = vunpack.c.l.b16 %v3003
    %v3020 = vunpack.c.l.b16 %v3004
    %v3021 = vunpack.c.l.b16 %v3005
    %v3022 = vunpack.c.l.b16 %v3006
    %v3023 = vunpack.c.l.b16 %v3007
    %v3024 = vunpack.c.l.b16 %v3008
    %v3025 = vunpack.c.l.b16 %v3009
    %v3026 = vunpack.c.l.b16 %v3010
    %v3027 = vpack.c.b16 %v3020, %v3019
    %v3028 = vpack.c.b16 %v3022, %v3021
    %v3029 = vpack.c.b16 %v3024, %v3023
    %v3030 = vpack.c.b16 %v3026, %v3025
    %v3036 = vsel %vm331, %v2993, 0
    %3038 = vmatprep.subr.bf16.mxu0 0
    %3039 = vmatpush1.bf16.msra.mxu0 0
    %3040 = vmatprep.subr.bf16.mxu0 0
    %3041 = vmatpush1.bf16.msra.mxu0 0
    %3042 = vmatprep.subr.bf16.mxu0 0
    %3043 = vmatpush1.bf16.msra.mxu0 0
    %3044 = vmatprep.subr.bf16.mxu0 0
    %3045 = vmatpush1.bf16.msra.mxu0 0
    %3046 = vmatprep.subr.bf16.mxu0 0
    %3047 = vmatpush1.bf16.msra.mxu0 %v3030
    %3048 = vmatprep.subr.bf16.mxu0 0
    %3049 = vmatpush1.bf16.msra.mxu0 %v3029
    %3050 = vmatprep.subr.bf16.mxu0 0
    %3051 = vmatpush1.bf16.msra.mxu0 %v3028
    %3052 = vmatprep.subr.bf16.mxu0 0
    %3053 = vmatpush1.bf16.msra.mxu0 %v3027
    %3054 = vmatprep.subr.bf16.mxu0 0
    %3055 = vmatpush2.bf16.msra.mxu0 0
    %3056 = vmatprep.subr.bf16.mxu0 0
    %3057 = vmatpush2.bf16.msra.mxu0 0
    %3058 = vmatprep.subr.bf16.mxu0 0
    %3059 = vmatpush2.bf16.msra.mxu0 0
    %3060 = vmatprep.subr.bf16.mxu0 0
    %3061 = vmatpush2.bf16.msra.mxu0 0
    %3062 = vmatprep.subr.bf16.mxu0 0
    %3063 = vmatpush2.bf16.msra.mxu0 0
    %3064 = vmatprep.subr.bf16.mxu0 0
    %3065 = vmatpush2.bf16.msra.mxu0 0
    %3066 = vmatprep.subr.bf16.mxu0 0
    %3067 = vmatpush2.bf16.msra.mxu0 0
    %3068 = vmatprep.subr.bf16.mxu0 0
    %3069 = vmatpush2.bf16.msra.mxu0 0
    %3070 = vmatprep.mubr.bf16.mxu0 0
    %3071 = vmatmul.mubr.bf16.gmra.mxu0 %v3036
    %v3072 = vpop.f32.mrf.mxu0
    %v3073 = vadd.f32 0.0, %v3072
    %v3074 = vpop.f32.mrf.mxu0
    %v3075 = vpop.f32.mrf.mxu0
    %v3076 = vadd.f32 0.0, %v3075
    %v3077 = vpop.f32.mrf.mxu0
    %3078 = vdwg.mxu0
    %v3087 = vunpack.c.l.b16 %v2995
    %v3088 = vunpack.c.l.b16 %v2996
    %v3089 = vunpack.c.l.b16 %v2997
    %v3090 = vunpack.c.l.b16 %v2998
    %v3091 = vunpack.c.l.b16 %v2999
    %v3092 = vunpack.c.l.b16 %v3000
    %v3093 = vunpack.c.l.b16 %v3001
    %v3094 = vunpack.c.l.b16 %v3002
    %v3095 = vpack.c.b16 %v3088, %v3087
    %v3096 = vpack.c.b16 %v3090, %v3089
    %v3097 = vpack.c.b16 %v3092, %v3091
    %v3098 = vpack.c.b16 %v3094, %v3093
    %v3104 = vsel %vm331, %v2992, 0
    %3106 = vmatprep.subr.bf16.mxu0 0
    %3107 = vmatpush1.bf16.msra.mxu0 0
    %3108 = vmatprep.subr.bf16.mxu0 0
    %3109 = vmatpush1.bf16.msra.mxu0 0
    %3110 = vmatprep.subr.bf16.mxu0 0
    %3111 = vmatpush1.bf16.msra.mxu0 0
    %3112 = vmatprep.subr.bf16.mxu0 0
    %3113 = vmatpush1.bf16.msra.mxu0 0
    %3114 = vmatprep.subr.bf16.mxu0 0
    %3115 = vmatpush1.bf16.msra.mxu0 %v3098
    %3116 = vmatprep.subr.bf16.mxu0 0
    %3117 = vmatpush1.bf16.msra.mxu0 %v3097
    %3118 = vmatprep.subr.bf16.mxu0 0
    %3119 = vmatpush1.bf16.msra.mxu0 %v3096
    %3120 = vmatprep.subr.bf16.mxu0 0
    %3121 = vmatpush1.bf16.msra.mxu0 %v3095
    %3122 = vmatprep.subr.bf16.mxu0 0
    %3123 = vmatpush2.bf16.msra.mxu0 0
    %3124 = vmatprep.subr.bf16.mxu0 0
    %3125 = vmatpush2.bf16.msra.mxu0 0
    %3126 = vmatprep.subr.bf16.mxu0 0
    %3127 = vmatpush2.bf16.msra.mxu0 0
    %3128 = vmatprep.subr.bf16.mxu0 0
    %3129 = vmatpush2.bf16.msra.mxu0 0
    %3130 = vmatprep.subr.bf16.mxu0 0
    %3131 = vmatpush2.bf16.msra.mxu0 0
    %3132 = vmatprep.subr.bf16.mxu0 0
    %3133 = vmatpush2.bf16.msra.mxu0 0
    %3134 = vmatprep.subr.bf16.mxu0 0
    %3135 = vmatpush2.bf16.msra.mxu0 0
    %3136 = vmatprep.subr.bf16.mxu0 0
    %3137 = vmatpush2.bf16.msra.mxu0 0
    %3138 = vmatprep.mubr.bf16.mxu0 0
    %3139 = vmatmul.mubr.bf16.gmra.mxu0 %v3104
    %v3140 = vpop.f32.mrf.mxu0
    %v3141 = vadd.f32 %v3073, %v3140
    %v3142 = vpop.f32.mrf.mxu0
    %v3143 = vpop.f32.mrf.mxu0
    %v3144 = vadd.f32 %v3076, %v3143
    %v3145 = vpop.f32.mrf.mxu0
    %3146 = vdwg.mxu0
    %v3147 = vld [vmem:[#allocation2 + $0x270] sm:$0xf]
    %v3148 = vld [vmem:[#allocation2 + $0x274] sm:$0xf]
    %v3149 = vld [vmem:[#allocation2 + $0x278] sm:$0xf]
    %v3150 = vld [vmem:[#allocation2 + $0x27c] sm:$0xf]
    %v3151 = vld [vmem:[#allocation2 + $0x280] sm:$0xf]
    %v3152 = vld [vmem:[#allocation2 + $0x284] sm:$0xf]
    %v3153 = vld [vmem:[#allocation2 + $0x288] sm:$0xf]
    %v3154 = vld [vmem:[#allocation2 + $0x28c] sm:$0xf]
    %v3163 = vunpack.c.l.b16 %v3147
    %v3164 = vunpack.c.l.b16 %v3148
    %v3165 = vunpack.c.l.b16 %v3149
    %v3166 = vunpack.c.l.b16 %v3150
    %v3167 = vunpack.c.l.b16 %v3151
    %v3168 = vunpack.c.l.b16 %v3152
    %v3169 = vunpack.c.l.b16 %v3153
    %v3170 = vunpack.c.l.b16 %v3154
    %v3171 = vpack.c.b16 %v3164, %v3163
    %v3172 = vpack.c.b16 %v3166, %v3165
    %v3173 = vpack.c.b16 %v3168, %v3167
    %v3174 = vpack.c.b16 %v3170, %v3169
    %v3180 = vsel %vm331, %v2994, 0
    %3182 = vmatprep.subr.bf16.mxu0 0
    %3183 = vmatpush1.bf16.msra.mxu0 0
    %3184 = vmatprep.subr.bf16.mxu0 0
    %3185 = vmatpush1.bf16.msra.mxu0 0
    %3186 = vmatprep.subr.bf16.mxu0 0
    %3187 = vmatpush1.bf16.msra.mxu0 0
    %3188 = vmatprep.subr.bf16.mxu0 0
    %3189 = vmatpush1.bf16.msra.mxu0 0
    %3190 = vmatprep.subr.bf16.mxu0 0
    %3191 = vmatpush1.bf16.msra.mxu0 %v3174
    %3192 = vmatprep.subr.bf16.mxu0 0
    %3193 = vmatpush1.bf16.msra.mxu0 %v3173
    %3194 = vmatprep.subr.bf16.mxu0 0
    %3195 = vmatpush1.bf16.msra.mxu0 %v3172
    %3196 = vmatprep.subr.bf16.mxu0 0
    %3197 = vmatpush1.bf16.msra.mxu0 %v3171
    %3198 = vmatprep.subr.bf16.mxu0 0
    %3199 = vmatpush2.bf16.msra.mxu0 0
    %3200 = vmatprep.subr.bf16.mxu0 0
    %3201 = vmatpush2.bf16.msra.mxu0 0
    %3202 = vmatprep.subr.bf16.mxu0 0
    %3203 = vmatpush2.bf16.msra.mxu0 0
    %3204 = vmatprep.subr.bf16.mxu0 0
    %3205 = vmatpush2.bf16.msra.mxu0 0
    %3206 = vmatprep.subr.bf16.mxu0 0
    %3207 = vmatpush2.bf16.msra.mxu0 0
    %3208 = vmatprep.subr.bf16.mxu0 0
    %3209 = vmatpush2.bf16.msra.mxu0 0
    %3210 = vmatprep.subr.bf16.mxu0 0
    %3211 = vmatpush2.bf16.msra.mxu0 0
    %3212 = vmatprep.subr.bf16.mxu0 0
    %3213 = vmatpush2.bf16.msra.mxu0 0
    %3214 = vmatprep.mubr.bf16.mxu0 0
    %3215 = vmatmul.mubr.bf16.gmra.mxu0 %v3180
    %v3216 = vpop.f32.mrf.mxu0
    %v3217 = vadd.f32 0.0, %v3216
    %v3218 = vpop.f32.mrf.mxu0
    %v3219 = vpop.f32.mrf.mxu0
    %v3220 = vadd.f32 0.0, %v3219
    %v3221 = vpop.f32.mrf.mxu0
    %3222 = vdwg.mxu0
    %v3223 = vadd.f32 %v3141, %v3217
    %v3224 = vadd.f32 %v3144, %v3220
    %v3225 = vld [vmem:[#allocation5 + $0x50] sm:$0x1]
    %v3226 = vlaneseq
    %v3227 = vshrl.u32 %v3226, 7
    %v3228 = vsub.s32 0, %v3227
    %v3229 = vrot.slane %v3225, %v3228
    %v3230 = vadd.f32 %v3223, %v3229
    %v3231 = vadd.f32 %v3224, %v3229
    %v3232 = vld [vmem:[#allocation2 + $0x290] sm:$0xf]
    %v3233 = vld [vmem:[#allocation2 + $0x294] sm:$0xf]
    %v3234 = vld [vmem:[#allocation2 + $0x298] sm:$0xf]
    %v3235 = vld [vmem:[#allocation2 + $0x29c] sm:$0xf]
    %v3236 = vld [vmem:[#allocation2 + $0x2a0] sm:$0xf]
    %v3237 = vld [vmem:[#allocation2 + $0x2a4] sm:$0xf]
    %v3238 = vld [vmem:[#allocation2 + $0x2a8] sm:$0xf]
    %v3239 = vld [vmem:[#allocation2 + $0x2ac] sm:$0xf]
    %v3240 = vunpack.c.l.bf16 %v3232
    %v3241 = vunpack.c.l.bf16 %v3233
    %v3242 = vunpack.c.l.bf16 %v3234
    %v3243 = vunpack.c.l.bf16 %v3235
    %v3244 = vunpack.c.l.bf16 %v3236
    %v3245 = vunpack.c.l.bf16 %v3237
    %v3246 = vunpack.c.l.bf16 %v3238
    %v3247 = vunpack.c.l.bf16 %v3239
    %v3248 = vld [vmem:[#allocation2 + $0x2b0] sm:$0xf]
    %v3249 = vunpack.c.l.bf16 %v3248
    %v3250 = vld [vmem:[#allocation5 + $0x58] sm:$0x1]
    %v3251 = vsel %vm331, %v3230, 0.0
    %v3252 = vsel %vm331, %v3231, 0.0
    %v3253 = vadd.f32 %v3251, %v3252
    %v3254 = vrot.slane %v3253, 4
    %v3255 = vadd.f32 %v3253, %v3254
    %v3256 = vrot.slane %v3255, 2
    %v3257 = vadd.f32 %v3255, %v3256
    %v3258 = vrot.slane %v3257, 1
    %v3259 = vadd.f32 %v3257, %v3258
    %v3260 = vmul.f32 %v3230, %v3230
    %v3261 = vmul.f32 %v3231, %v3231
    %v3262 = vsel %vm331, %v3260, 0.0
    %v3263 = vsel %vm331, %v3261, 0.0
    %v3264 = vadd.f32 %v3262, %v3263
    %v3265 = vrot.slane %v3264, 4
    %v3266 = vadd.f32 %v3264, %v3265
    %v3267 = vrot.slane %v3266, 2
    %v3268 = vadd.f32 %v3266, %v3267
    %v3269 = vrot.slane %v3268, 1
    %v3270 = vadd.f32 %v3268, %v3269
    %v3272 = vsel %vm331, %v3259, 0
    %3274 = vmatprep.subr.mxu0 0.0
    %3275 = vmatpush1.msra.mxu0 0.0
    %3276 = vmatprep.subr.mxu0 0.0
    %3277 = vmatpush1.msra.mxu0 0.0
    %3278 = vmatprep.subr.mxu0 0.0
    %3279 = vmatpush1.msra.mxu0 0.0
    %3280 = vmatprep.subr.mxu0 0.0
    %3281 = vmatpush1.msra.mxu0 0.0
    %3282 = vmatprep.subr.mxu0 0.0
    %3283 = vmatpush1.msra.mxu0 0.0
    %3284 = vmatprep.subr.mxu0 0.0
    %3285 = vmatpush1.msra.mxu0 0.0
    %3286 = vmatprep.subr.mxu0 0.0
    %3287 = vmatpush1.msra.mxu0 0.0
    %3288 = vmatprep.subr.mxu0 0.0
    %3289 = vmatpush1.msra.mxu0 0.0
    %3290 = vmatprep.subr.mxu0 0.0
    %3291 = vmatpush1.msra.mxu0 %v3247
    %3292 = vmatprep.subr.mxu0 0.0
    %3293 = vmatpush1.msra.mxu0 %v3246
    %3294 = vmatprep.subr.mxu0 0.0
    %3295 = vmatpush1.msra.mxu0 %v3245
    %3296 = vmatprep.subr.mxu0 0.0
    %3297 = vmatpush1.msra.mxu0 %v3244
    %3298 = vmatprep.subr.mxu0 0.0
    %3299 = vmatpush1.msra.mxu0 %v3243
    %3300 = vmatprep.subr.mxu0 0.0
    %3301 = vmatpush1.msra.mxu0 %v3242
    %3302 = vmatprep.subr.mxu0 0.0
    %3303 = vmatpush1.msra.mxu0 %v3241
    %3304 = vmatprep.subr.mxu0 0.0
    %3305 = vmatpush1.msra.mxu0 %v3240
    %3306 = vmatprep.subr.mxu0 0.0
    %3307 = vmatpush2.msra.mxu0 0.0
    %3308 = vmatprep.subr.mxu0 0.0
    %3309 = vmatpush2.msra.mxu0 0.0
    %3310 = vmatprep.subr.mxu0 0.0
    %3311 = vmatpush2.msra.mxu0 0.0
    %3312 = vmatprep.subr.mxu0 0.0
    %3313 = vmatpush2.msra.mxu0 0.0
    %3314 = vmatprep.subr.mxu0 0.0
    %3315 = vmatpush2.msra.mxu0 0.0
    %3316 = vmatprep.subr.mxu0 0.0
    %3317 = vmatpush2.msra.mxu0 0.0
    %3318 = vmatprep.subr.mxu0 0.0
    %3319 = vmatpush2.msra.mxu0 0.0
    %3320 = vmatprep.subr.mxu0 0.0
    %3321 = vmatpush2.msra.mxu0 0.0
    %3322 = vmatprep.subr.mxu0 0.0
    %3323 = vmatpush2.msra.mxu0 0.0
    %3324 = vmatprep.subr.mxu0 0.0
    %3325 = vmatpush2.msra.mxu0 0.0
    %3326 = vmatprep.subr.mxu0 0.0
    %3327 = vmatpush2.msra.mxu0 0.0
    %3328 = vmatprep.subr.mxu0 0.0
    %3329 = vmatpush2.msra.mxu0 0.0
    %3330 = vmatprep.subr.mxu0 0.0
    %3331 = vmatpush2.msra.mxu0 0.0
    %3332 = vmatprep.subr.mxu0 0.0
    %3333 = vmatpush2.msra.mxu0 0.0
    %3334 = vmatprep.subr.mxu0 0.0
    %3335 = vmatpush2.msra.mxu0 0.0
    %3336 = vmatprep.subr.mxu0 0.0
    %3337 = vmatpush2.msra.mxu0 0.0
    %3338 = vmatprep.mubr.f32.mxu0 0.0
    %3339 = vmatmul.mubr.f32.gmra.mxu0 %v3272
    %v3340 = vpop.f32.mrf.mxu0
    %v3341 = vadd.f32 0.0, %v3340
    %v3342 = vpop.f32.mrf.mxu0
    %3343 = vdwg.mxu0
    %v3344 = vmul.f32 %v3341, %v425
    %v3346 = vsel %vm331, %v3270, 0
    %3348 = vmatprep.subr.mxu0 0.0
    %3349 = vmatpush1.msra.mxu0 0.0
    %3350 = vmatprep.subr.mxu0 0.0
    %3351 = vmatpush1.msra.mxu0 0.0
    %3352 = vmatprep.subr.mxu0 0.0
    %3353 = vmatpush1.msra.mxu0 0.0
    %3354 = vmatprep.subr.mxu0 0.0
    %3355 = vmatpush1.msra.mxu0 0.0
    %3356 = vmatprep.subr.mxu0 0.0
    %3357 = vmatpush1.msra.mxu0 0.0
    %3358 = vmatprep.subr.mxu0 0.0
    %3359 = vmatpush1.msra.mxu0 0.0
    %3360 = vmatprep.subr.mxu0 0.0
    %3361 = vmatpush1.msra.mxu0 0.0
    %3362 = vmatprep.subr.mxu0 0.0
    %3363 = vmatpush1.msra.mxu0 0.0
    %3364 = vmatprep.subr.mxu0 0.0
    %3365 = vmatpush1.msra.mxu0 %v3247
    %3366 = vmatprep.subr.mxu0 0.0
    %3367 = vmatpush1.msra.mxu0 %v3246
    %3368 = vmatprep.subr.mxu0 0.0
    %3369 = vmatpush1.msra.mxu0 %v3245
    %3370 = vmatprep.subr.mxu0 0.0
    %3371 = vmatpush1.msra.mxu0 %v3244
    %3372 = vmatprep.subr.mxu0 0.0
    %3373 = vmatpush1.msra.mxu0 %v3243
    %3374 = vmatprep.subr.mxu0 0.0
    %3375 = vmatpush1.msra.mxu0 %v3242
    %3376 = vmatprep.subr.mxu0 0.0
    %3377 = vmatpush1.msra.mxu0 %v3241
    %3378 = vmatprep.subr.mxu0 0.0
    %3379 = vmatpush1.msra.mxu0 %v3240
    %3380 = vmatprep.subr.mxu0 0.0
    %3381 = vmatpush2.msra.mxu0 0.0
    %3382 = vmatprep.subr.mxu0 0.0
    %3383 = vmatpush2.msra.mxu0 0.0
    %3384 = vmatprep.subr.mxu0 0.0
    %3385 = vmatpush2.msra.mxu0 0.0
    %3386 = vmatprep.subr.mxu0 0.0
    %3387 = vmatpush2.msra.mxu0 0.0
    %3388 = vmatprep.subr.mxu0 0.0
    %3389 = vmatpush2.msra.mxu0 0.0
    %3390 = vmatprep.subr.mxu0 0.0
    %3391 = vmatpush2.msra.mxu0 0.0
    %3392 = vmatprep.subr.mxu0 0.0
    %3393 = vmatpush2.msra.mxu0 0.0
    %3394 = vmatprep.subr.mxu0 0.0
    %3395 = vmatpush2.msra.mxu0 0.0
    %3396 = vmatprep.subr.mxu0 0.0
    %3397 = vmatpush2.msra.mxu0 0.0
    %3398 = vmatprep.subr.mxu0 0.0
    %3399 = vmatpush2.msra.mxu0 0.0
    %3400 = vmatprep.subr.mxu0 0.0
    %3401 = vmatpush2.msra.mxu0 0.0
    %3402 = vmatprep.subr.mxu0 0.0
    %3403 = vmatpush2.msra.mxu0 0.0
    %3404 = vmatprep.subr.mxu0 0.0
    %3405 = vmatpush2.msra.mxu0 0.0
    %3406 = vmatprep.subr.mxu0 0.0
    %3407 = vmatpush2.msra.mxu0 0.0
    %3408 = vmatprep.subr.mxu0 0.0
    %3409 = vmatpush2.msra.mxu0 0.0
    %3410 = vmatprep.subr.mxu0 0.0
    %3411 = vmatpush2.msra.mxu0 0.0
    %3412 = vmatprep.mubr.f32.mxu0 0.0
    %3413 = vmatmul.mubr.f32.gmra.mxu0 %v3346
    %v3414 = vpop.f32.mrf.mxu0
    %v3415 = vadd.f32 0.0, %v3414
    %v3416 = vpop.f32.mrf.mxu0
    %3417 = vdwg.mxu0
    %v3418 = vmul.f32 %v3415, %v425
    %v3419 = vmul.f32 %v3344, %v3344
    %v3420 = vsub.f32 %v3418, %v3419
    %v3421 = vmax.f32 %v3420, 0.0
    %v3422 = vadd.f32 %v3421, 1e-05
    %v3423 = vrsqrt.pop %v3422
    %v3425 = vsel %vm506, %v3423, 0
    %3427 = vmatprep.subr.mxu0 0.0
    %3428 = vmatpush1.msra.mxu0 0.0
    %3429 = vmatprep.subr.mxu0 0.0
    %3430 = vmatpush1.msra.mxu0 0.0
    %3431 = vmatprep.subr.mxu0 0.0
    %3432 = vmatpush1.msra.mxu0 0.0
    %3433 = vmatprep.subr.mxu0 0.0
    %3434 = vmatpush1.msra.mxu0 0.0
    %3435 = vmatprep.subr.mxu0 0.0
    %3436 = vmatpush1.msra.mxu0 0.0
    %3437 = vmatprep.subr.mxu0 0.0
    %3438 = vmatpush1.msra.mxu0 0.0
    %3439 = vmatprep.subr.mxu0 0.0
    %3440 = vmatpush1.msra.mxu0 0.0
    %3441 = vmatprep.subr.mxu0 0.0
    %3442 = vmatpush1.msra.mxu0 0.0
    %3443 = vmatprep.subr.mxu0 0.0
    %3444 = vmatpush1.msra.mxu0 0.0
    %3445 = vmatprep.subr.mxu0 0.0
    %3446 = vmatpush1.msra.mxu0 0.0
    %3447 = vmatprep.subr.mxu0 0.0
    %3448 = vmatpush1.msra.mxu0 0.0
    %3449 = vmatprep.subr.mxu0 0.0
    %3450 = vmatpush1.msra.mxu0 0.0
    %3451 = vmatprep.subr.mxu0 0.0
    %3452 = vmatpush1.msra.mxu0 0.0
    %3453 = vmatprep.subr.mxu0 0.0
    %3454 = vmatpush1.msra.mxu0 0.0
    %3455 = vmatprep.subr.mxu0 0.0
    %3456 = vmatpush1.msra.mxu0 0.0
    %3457 = vmatprep.subr.mxu0 0.0
    %3458 = vmatpush1.msra.mxu0 %v3249
    %3459 = vmatprep.subr.mxu0 0.0
    %3460 = vmatpush2.msra.mxu0 0.0
    %3461 = vmatprep.subr.mxu0 0.0
    %3462 = vmatpush2.msra.mxu0 0.0
    %3463 = vmatprep.subr.mxu0 0.0
    %3464 = vmatpush2.msra.mxu0 0.0
    %3465 = vmatprep.subr.mxu0 0.0
    %3466 = vmatpush2.msra.mxu0 0.0
    %3467 = vmatprep.subr.mxu0 0.0
    %3468 = vmatpush2.msra.mxu0 0.0
    %3469 = vmatprep.subr.mxu0 0.0
    %3470 = vmatpush2.msra.mxu0 0.0
    %3471 = vmatprep.subr.mxu0 0.0
    %3472 = vmatpush2.msra.mxu0 0.0
    %3473 = vmatprep.subr.mxu0 0.0
    %3474 = vmatpush2.msra.mxu0 0.0
    %3475 = vmatprep.subr.mxu0 0.0
    %3476 = vmatpush2.msra.mxu0 0.0
    %3477 = vmatprep.subr.mxu0 0.0
    %3478 = vmatpush2.msra.mxu0 0.0
    %3479 = vmatprep.subr.mxu0 0.0
    %3480 = vmatpush2.msra.mxu0 0.0
    %3481 = vmatprep.subr.mxu0 0.0
    %3482 = vmatpush2.msra.mxu0 0.0
    %3483 = vmatprep.subr.mxu0 0.0
    %3484 = vmatpush2.msra.mxu0 0.0
    %3485 = vmatprep.subr.mxu0 0.0
    %3486 = vmatpush2.msra.mxu0 0.0
    %3487 = vmatprep.subr.mxu0 0.0
    %3488 = vmatpush2.msra.mxu0 0.0
    %3489 = vmatprep.subr.mxu0 0.0
    %3490 = vmatpush2.msra.mxu0 0.0
    %3491 = vmatprep.mubr.f32.mxu0 0.0
    %3492 = vmatmul.mubr.f32.gmra.mxu0 %v3425
    %v3493 = vpop.f32.mrf.mxu0
    %v3494 = vadd.f32 0.0, %v3493
    %v3495 = vpop.f32.mrf.mxu0
    %3496 = vdwg.mxu0
    %v3497 = vmul.f32 %v3344, %v3423
    %v3499 = vsel %vm506, %v3497, 0
    %3501 = vmatprep.subr.mxu0 0.0
    %3502 = vmatpush1.msra.mxu0 0.0
    %3503 = vmatprep.subr.mxu0 0.0
    %3504 = vmatpush1.msra.mxu0 0.0
    %3505 = vmatprep.subr.mxu0 0.0
    %3506 = vmatpush1.msra.mxu0 0.0
    %3507 = vmatprep.subr.mxu0 0.0
    %3508 = vmatpush1.msra.mxu0 0.0
    %3509 = vmatprep.subr.mxu0 0.0
    %3510 = vmatpush1.msra.mxu0 0.0
    %3511 = vmatprep.subr.mxu0 0.0
    %3512 = vmatpush1.msra.mxu0 0.0
    %3513 = vmatprep.subr.mxu0 0.0
    %3514 = vmatpush1.msra.mxu0 0.0
    %3515 = vmatprep.subr.mxu0 0.0
    %3516 = vmatpush1.msra.mxu0 0.0
    %3517 = vmatprep.subr.mxu0 0.0
    %3518 = vmatpush1.msra.mxu0 0.0
    %3519 = vmatprep.subr.mxu0 0.0
    %3520 = vmatpush1.msra.mxu0 0.0
    %3521 = vmatprep.subr.mxu0 0.0
    %3522 = vmatpush1.msra.mxu0 0.0
    %3523 = vmatprep.subr.mxu0 0.0
    %3524 = vmatpush1.msra.mxu0 0.0
    %3525 = vmatprep.subr.mxu0 0.0
    %3526 = vmatpush1.msra.mxu0 0.0
    %3527 = vmatprep.subr.mxu0 0.0
    %3528 = vmatpush1.msra.mxu0 0.0
    %3529 = vmatprep.subr.mxu0 0.0
    %3530 = vmatpush1.msra.mxu0 0.0
    %3531 = vmatprep.subr.mxu0 0.0
    %3532 = vmatpush1.msra.mxu0 %v3249
    %3533 = vmatprep.subr.mxu0 0.0
    %3534 = vmatpush2.msra.mxu0 0.0
    %3535 = vmatprep.subr.mxu0 0.0
    %3536 = vmatpush2.msra.mxu0 0.0
    %3537 = vmatprep.subr.mxu0 0.0
    %3538 = vmatpush2.msra.mxu0 0.0
    %3539 = vmatprep.subr.mxu0 0.0
    %3540 = vmatpush2.msra.mxu0 0.0
    %3541 = vmatprep.subr.mxu0 0.0
    %3542 = vmatpush2.msra.mxu0 0.0
    %3543 = vmatprep.subr.mxu0 0.0
    %3544 = vmatpush2.msra.mxu0 0.0
    %3545 = vmatprep.subr.mxu0 0.0
    %3546 = vmatpush2.msra.mxu0 0.0
    %3547 = vmatprep.subr.mxu0 0.0
    %3548 = vmatpush2.msra.mxu0 0.0
    %3549 = vmatprep.subr.mxu0 0.0
    %3550 = vmatpush2.msra.mxu0 0.0
    %3551 = vmatprep.subr.mxu0 0.0
    %3552 = vmatpush2.msra.mxu0 0.0
    %3553 = vmatprep.subr.mxu0 0.0
    %3554 = vmatpush2.msra.mxu0 0.0
    %3555 = vmatprep.subr.mxu0 0.0
    %3556 = vmatpush2.msra.mxu0 0.0
    %3557 = vmatprep.subr.mxu0 0.0
    %3558 = vmatpush2.msra.mxu0 0.0
    %3559 = vmatprep.subr.mxu0 0.0
    %3560 = vmatpush2.msra.mxu0 0.0
    %3561 = vmatprep.subr.mxu0 0.0
    %3562 = vmatpush2.msra.mxu0 0.0
    %3563 = vmatprep.subr.mxu0 0.0
    %3564 = vmatpush2.msra.mxu0 0.0
    %3565 = vmatprep.mubr.f32.mxu0 0.0
    %3566 = vmatmul.mubr.f32.gmra.mxu0 %v3499
    %v3567 = vpop.f32.mrf.mxu0
    %v3568 = vadd.f32 0.0, %v3567
    %v3569 = vpop.f32.mrf.mxu0
    %3570 = vdwg.mxu0
    %v3571 = vsub.f32 %v3250, %v3568
    %v3572 = vlaneseq
    %v3573 = vshrl.u32 %v3572, 7
    %v3574 = vsub.s32 0, %v3573
    %v3575 = vrot.slane %v3494, %v3574
    %v3576 = vmul.f32 %v3230, %v3575
    %v3577 = vmul.f32 %v3231, %v3575
    %v3578 = vlaneseq
    %v3579 = vshrl.u32 %v3578, 7
    %v3580 = vsub.s32 0, %v3579
    %v3581 = vrot.slane %v3571, %v3580
    %v3582 = vadd.f32 %v3576, %v3581
    %v3583 = vadd.f32 %v3577, %v3581
    %v3584 = vmul.f32 %v3582, 0.01
    %v3585 = vmul.f32 %v3583, 0.01
    %v3586 = vmax.f32 %v3582, %v3584
    %v3587 = vmax.f32 %v3583, %v3585
    %v3588 = vpack.c.bf16 %v3587, %v3586
    %v3589 = vld [vmem:[#allocation2 + $0x2b8] sm:$0xf]
    %v3590 = vld [vmem:[#allocation2 + $0x2bc] sm:$0xf]
    %v3591 = vld [vmem:[#allocation2 + $0x2c0] sm:$0xf]
    %v3592 = vld [vmem:[#allocation2 + $0x2c4] sm:$0xf]
    %v3593 = vld [vmem:[#allocation2 + $0x2c8] sm:$0xf]
    %v3594 = vld [vmem:[#allocation2 + $0x2cc] sm:$0xf]
    %v3595 = vld [vmem:[#allocation2 + $0x2d0] sm:$0xf]
    %v3596 = vld [vmem:[#allocation2 + $0x2d4] sm:$0xf]
    %v3597 = vld [vmem:[#allocation2 + $0x2d8] sm:$0xf]
    %v3598 = vld [vmem:[#allocation2 + $0x2dc] sm:$0xf]
    %v3599 = vld [vmem:[#allocation2 + $0x2e0] sm:$0xf]
    %v3600 = vld [vmem:[#allocation2 + $0x2e4] sm:$0xf]
    %v3613 = vunpack.c.l.b16 %v3589
    %v3614 = vunpack.c.l.b16 %v3590
    %v3615 = vunpack.c.l.b16 %v3591
    %v3616 = vunpack.c.l.b16 %v3592
    %v3617 = vunpack.c.l.b16 %v3593
    %v3618 = vunpack.c.l.b16 %v3594
    %v3619 = vunpack.c.l.b16 %v3595
    %v3620 = vunpack.c.l.b16 %v3596
    %v3621 = vunpack.c.l.b16 %v3597
    %v3622 = vunpack.c.l.b16 %v3598
    %v3623 = vunpack.c.l.b16 %v3599
    %v3624 = vunpack.c.l.b16 %v3600
    %v3625 = vpack.c.b16 %v3614, %v3613
    %v3626 = vpack.c.b16 %v3616, %v3615
    %v3627 = vpack.c.b16 %v3618, %v3617
    %v3628 = vpack.c.b16 %v3620, %v3619
    %v3629 = vpack.c.b16 %v3622, %v3621
    %v3630 = vpack.c.b16 %v3624, %v3623
    %v3632 = vsel %vm156, %v3625, 0
    %v3635 = vsel %vm156, %v3626, 0
    %v3638 = vsel %vm156, %v3627, 0
    %v3641 = vsel %vm156, %v3628, 0
    %v3644 = vsel %vm156, %v3629, 0
    %v3647 = vsel %vm156, %v3630, 0
    %3649 = vmatprep.subr.bf16.mxu0 0
    %3650 = vmatpush1.bf16.msra.mxu0 0
    %3651 = vmatprep.subr.bf16.mxu0 0
    %3652 = vmatpush1.bf16.msra.mxu0 0
    %3653 = vmatprep.subr.bf16.mxu0 0
    %3654 = vmatpush1.bf16.msra.mxu0 0
    %3655 = vmatprep.subr.bf16.mxu0 0
    %3656 = vmatpush1.bf16.msra.mxu0 0
    %3657 = vmatprep.subr.bf16.mxu0 0
    %3658 = vmatpush1.bf16.msra.mxu0 0
    %3659 = vmatprep.subr.bf16.mxu0 0
    %3660 = vmatpush1.bf16.msra.mxu0 0
    %3661 = vmatprep.subr.bf16.mxu0 0
    %3662 = vmatpush1.bf16.msra.mxu0 0
    %3663 = vmatprep.subr.bf16.mxu0 0
    %3664 = vmatpush1.bf16.msra.mxu0 %v3588
    %3665 = vmatprep.subr.bf16.mxu0 0
    %3666 = vmatpush2.bf16.msra.mxu0 0
    %3667 = vmatprep.subr.bf16.mxu0 0
    %3668 = vmatpush2.bf16.msra.mxu0 0
    %3669 = vmatprep.subr.bf16.mxu0 0
    %3670 = vmatpush2.bf16.msra.mxu0 0
    %3671 = vmatprep.subr.bf16.mxu0 0
    %3672 = vmatpush2.bf16.msra.mxu0 0
    %3673 = vmatprep.subr.bf16.mxu0 0
    %3674 = vmatpush2.bf16.msra.mxu0 0
    %3675 = vmatprep.subr.bf16.mxu0 0
    %3676 = vmatpush2.bf16.msra.mxu0 0
    %3677 = vmatprep.subr.bf16.mxu0 0
    %3678 = vmatpush2.bf16.msra.mxu0 0
    %3679 = vmatprep.subr.bf16.mxu0 0
    %3680 = vmatpush2.bf16.msra.mxu0 0
    %3681 = vmatprep.mubr.bf16.mxu0 0
    %3682 = vmatmul.mubr.bf16.gmra.mxu0 %v3632
    %v3683 = vpop.f32.mrf.mxu0
    %v3684 = vadd.f32 0.0, %v3683
    %v3685 = vpop.f32.mrf.mxu0
    %v3686 = vpop.f32.mrf.mxu0
    %v3687 = vadd.f32 0.0, %v3686
    %v3688 = vpop.f32.mrf.mxu0
    %3689 = vmatprep.mubr.bf16.mxu0 0
    %3690 = vmatmul.mubr.bf16.gmra.mxu0 %v3635
    %v3691 = vpop.f32.mrf.mxu0
    %v3692 = vadd.f32 0.0, %v3691
    %v3693 = vpop.f32.mrf.mxu0
    %v3694 = vpop.f32.mrf.mxu0
    %v3695 = vadd.f32 0.0, %v3694
    %v3696 = vpop.f32.mrf.mxu0
    %3697 = vmatprep.mubr.bf16.mxu0 0
    %3698 = vmatmul.mubr.bf16.gmra.mxu0 %v3638
    %v3699 = vpop.f32.mrf.mxu0
    %v3700 = vadd.f32 0.0, %v3699
    %v3701 = vpop.f32.mrf.mxu0
    %v3702 = vpop.f32.mrf.mxu0
    %v3703 = vadd.f32 0.0, %v3702
    %v3704 = vpop.f32.mrf.mxu0
    %3705 = vmatprep.mubr.bf16.mxu0 0
    %3706 = vmatmul.mubr.bf16.gmra.mxu0 %v3641
    %v3707 = vpop.f32.mrf.mxu0
    %v3708 = vadd.f32 0.0, %v3707
    %v3709 = vpop.f32.mrf.mxu0
    %v3710 = vpop.f32.mrf.mxu0
    %v3711 = vadd.f32 0.0, %v3710
    %v3712 = vpop.f32.mrf.mxu0
    %3713 = vmatprep.mubr.bf16.mxu0 0
    %3714 = vmatmul.mubr.bf16.gmra.mxu0 %v3644
    %v3715 = vpop.f32.mrf.mxu0
    %v3716 = vadd.f32 0.0, %v3715
    %v3717 = vpop.f32.mrf.mxu0
    %v3718 = vpop.f32.mrf.mxu0
    %v3719 = vadd.f32 0.0, %v3718
    %v3720 = vpop.f32.mrf.mxu0
    %3721 = vmatprep.mubr.bf16.mxu0 0
    %3722 = vmatmul.mubr.bf16.gmra.mxu0 %v3647
    %v3723 = vpop.f32.mrf.mxu0
    %v3724 = vadd.f32 0.0, %v3723
    %v3725 = vpop.f32.mrf.mxu0
    %v3726 = vpop.f32.mrf.mxu0
    %v3727 = vadd.f32 0.0, %v3726
    %v3728 = vpop.f32.mrf.mxu0
    %3729 = vdwg.mxu0
    %v3730 = vpack.c.bf16 %v3687, %v3684
    %v3731 = vpack.c.bf16 %v3695, %v3692
    %v3732 = vpack.c.bf16 %v3703, %v3700
    %v3733 = vpack.c.bf16 %v3711, %v3708
    %v3734 = vpack.c.bf16 %v3719, %v3716
    %v3735 = vpack.c.bf16 %v3727, %v3724
    %v3736 = vld [vmem:[#allocation2 + $0x2e8] sm:$0xf]
    %v3737 = vld [vmem:[#allocation2 + $0x2ec] sm:$0xf]
    %v3738 = vld [vmem:[#allocation2 + $0x2f0] sm:$0xf]
    %v3739 = vld [vmem:[#allocation2 + $0x2f4] sm:$0xf]
    %v3740 = vld [vmem:[#allocation2 + $0x2f8] sm:$0xf]
    %v3741 = vld [vmem:[#allocation2 + $0x2fc] sm:$0xf]
    %v3742 = vld [vmem:[#allocation2 + $0x300] sm:$0xf]
    %v3743 = vld [vmem:[#allocation2 + $0x304] sm:$0xf]
    %v3744 = vld [vmem:[#allocation2 + $0x308] sm:$0xf]
    %v3745 = vld [vmem:[#allocation2 + $0x30c] sm:$0xf]
    %v3746 = vld [vmem:[#allocation2 + $0x310] sm:$0xf]
    %v3747 = vld [vmem:[#allocation2 + $0x314] sm:$0xf]
    %v3748 = vld [vmem:[#allocation2 + $0x318] sm:$0xf]
    %v3749 = vld [vmem:[#allocation2 + $0x31c] sm:$0xf]
    %v3750 = vld [vmem:[#allocation2 + $0x320] sm:$0xf]
    %v3751 = vld [vmem:[#allocation2 + $0x324] sm:$0xf]
    %v3760 = vunpack.c.l.b16 %v3744
    %v3761 = vunpack.c.l.b16 %v3745
    %v3762 = vunpack.c.l.b16 %v3746
    %v3763 = vunpack.c.l.b16 %v3747
    %v3764 = vunpack.c.l.b16 %v3748
    %v3765 = vunpack.c.l.b16 %v3749
    %v3766 = vunpack.c.l.b16 %v3750
    %v3767 = vunpack.c.l.b16 %v3751
    %v3768 = vpack.c.b16 %v3761, %v3760
    %v3769 = vpack.c.b16 %v3763, %v3762
    %v3770 = vpack.c.b16 %v3765, %v3764
    %v3771 = vpack.c.b16 %v3767, %v3766
    %v3777 = vsel %vm331, %v3732, 0
    %v3780 = vsel %vm331, %v3733, 0
    %3782 = vmatprep.subr.bf16.mxu0 0
    %3783 = vmatpush1.bf16.msra.mxu0 0
    %3784 = vmatprep.subr.bf16.mxu0 0
    %3785 = vmatpush1.bf16.msra.mxu0 0
    %3786 = vmatprep.subr.bf16.mxu0 0
    %3787 = vmatpush1.bf16.msra.mxu0 0
    %3788 = vmatprep.subr.bf16.mxu0 0
    %3789 = vmatpush1.bf16.msra.mxu0 0
    %3790 = vmatprep.subr.bf16.mxu0 0
    %3791 = vmatpush1.bf16.msra.mxu0 %v3771
    %3792 = vmatprep.subr.bf16.mxu0 0
    %3793 = vmatpush1.bf16.msra.mxu0 %v3770
    %3794 = vmatprep.subr.bf16.mxu0 0
    %3795 = vmatpush1.bf16.msra.mxu0 %v3769
    %3796 = vmatprep.subr.bf16.mxu0 0
    %3797 = vmatpush1.bf16.msra.mxu0 %v3768
    %3798 = vmatprep.subr.bf16.mxu0 0
    %3799 = vmatpush2.bf16.msra.mxu0 0
    %3800 = vmatprep.subr.bf16.mxu0 0
    %3801 = vmatpush2.bf16.msra.mxu0 0
    %3802 = vmatprep.subr.bf16.mxu0 0
    %3803 = vmatpush2.bf16.msra.mxu0 0
    %3804 = vmatprep.subr.bf16.mxu0 0
    %3805 = vmatpush2.bf16.msra.mxu0 0
    %3806 = vmatprep.subr.bf16.mxu0 0
    %3807 = vmatpush2.bf16.msra.mxu0 0
    %3808 = vmatprep.subr.bf16.mxu0 0
    %3809 = vmatpush2.bf16.msra.mxu0 0
    %3810 = vmatprep.subr.bf16.mxu0 0
    %3811 = vmatpush2.bf16.msra.mxu0 0
    %3812 = vmatprep.subr.bf16.mxu0 0
    %3813 = vmatpush2.bf16.msra.mxu0 0
    %3814 = vmatprep.mubr.bf16.mxu0 0
    %3815 = vmatmul.mubr.bf16.gmra.mxu0 %v3777
    %v3816 = vpop.f32.mrf.mxu0
    %v3817 = vadd.f32 0.0, %v3816
    %v3818 = vpop.f32.mrf.mxu0
    %v3819 = vpop.f32.mrf.mxu0
    %v3820 = vadd.f32 0.0, %v3819
    %v3821 = vpop.f32.mrf.mxu0
    %3822 = vmatprep.mubr.bf16.mxu0 0
    %3823 = vmatmul.mubr.bf16.gmra.mxu0 %v3780
    %v3824 = vpop.f32.mrf.mxu0
    %v3825 = vadd.f32 0.0, %v3824
    %v3826 = vpop.f32.mrf.mxu0
    %v3827 = vpop.f32.mrf.mxu0
    %v3828 = vadd.f32 0.0, %v3827
    %v3829 = vpop.f32.mrf.mxu0
    %3830 = vdwg.mxu0
    %v3839 = vunpack.c.l.b16 %v3736
    %v3840 = vunpack.c.l.b16 %v3737
    %v3841 = vunpack.c.l.b16 %v3738
    %v3842 = vunpack.c.l.b16 %v3739
    %v3843 = vunpack.c.l.b16 %v3740
    %v3844 = vunpack.c.l.b16 %v3741
    %v3845 = vunpack.c.l.b16 %v3742
    %v3846 = vunpack.c.l.b16 %v3743
    %v3847 = vpack.c.b16 %v3840, %v3839
    %v3848 = vpack.c.b16 %v3842, %v3841
    %v3849 = vpack.c.b16 %v3844, %v3843
    %v3850 = vpack.c.b16 %v3846, %v3845
    %v3856 = vsel %vm331, %v3730, 0
    %v3859 = vsel %vm331, %v3731, 0
    %3861 = vmatprep.subr.bf16.mxu0 0
    %3862 = vmatpush1.bf16.msra.mxu0 0
    %3863 = vmatprep.subr.bf16.mxu0 0
    %3864 = vmatpush1.bf16.msra.mxu0 0
    %3865 = vmatprep.subr.bf16.mxu0 0
    %3866 = vmatpush1.bf16.msra.mxu0 0
    %3867 = vmatprep.subr.bf16.mxu0 0
    %3868 = vmatpush1.bf16.msra.mxu0 0
    %3869 = vmatprep.subr.bf16.mxu0 0
    %3870 = vmatpush1.bf16.msra.mxu0 %v3850
    %3871 = vmatprep.subr.bf16.mxu0 0
    %3872 = vmatpush1.bf16.msra.mxu0 %v3849
    %3873 = vmatprep.subr.bf16.mxu0 0
    %3874 = vmatpush1.bf16.msra.mxu0 %v3848
    %3875 = vmatprep.subr.bf16.mxu0 0
    %3876 = vmatpush1.bf16.msra.mxu0 %v3847
    %3877 = vmatprep.subr.bf16.mxu0 0
    %3878 = vmatpush2.bf16.msra.mxu0 0
    %3879 = vmatprep.subr.bf16.mxu0 0
    %3880 = vmatpush2.bf16.msra.mxu0 0
    %3881 = vmatprep.subr.bf16.mxu0 0
    %3882 = vmatpush2.bf16.msra.mxu0 0
    %3883 = vmatprep.subr.bf16.mxu0 0
    %3884 = vmatpush2.bf16.msra.mxu0 0
    %3885 = vmatprep.subr.bf16.mxu0 0
    %3886 = vmatpush2.bf16.msra.mxu0 0
    %3887 = vmatprep.subr.bf16.mxu0 0
    %3888 = vmatpush2.bf16.msra.mxu0 0
    %3889 = vmatprep.subr.bf16.mxu0 0
    %3890 = vmatpush2.bf16.msra.mxu0 0
    %3891 = vmatprep.subr.bf16.mxu0 0
    %3892 = vmatpush2.bf16.msra.mxu0 0
    %3893 = vmatprep.mubr.bf16.mxu0 0
    %3894 = vmatmul.mubr.bf16.gmra.mxu0 %v3856
    %v3895 = vpop.f32.mrf.mxu0
    %v3896 = vadd.f32 %v3817, %v3895
    %v3897 = vpop.f32.mrf.mxu0
    %v3898 = vpop.f32.mrf.mxu0
    %v3899 = vadd.f32 %v3820, %v3898
    %v3900 = vpop.f32.mrf.mxu0
    %3901 = vmatprep.mubr.bf16.mxu0 0
    %3902 = vmatmul.mubr.bf16.gmra.mxu0 %v3859
    %v3903 = vpop.f32.mrf.mxu0
    %v3904 = vadd.f32 %v3825, %v3903
    %v3905 = vpop.f32.mrf.mxu0
    %v3906 = vpop.f32.mrf.mxu0
    %v3907 = vadd.f32 %v3828, %v3906
    %v3908 = vpop.f32.mrf.mxu0
    %3909 = vdwg.mxu0
    %v3910 = vld [vmem:[#allocation2 + $0x328] sm:$0xf]
    %v3911 = vld [vmem:[#allocation2 + $0x32c] sm:$0xf]
    %v3912 = vld [vmem:[#allocation2 + $0x330] sm:$0xf]
    %v3913 = vld [vmem:[#allocation2 + $0x334] sm:$0xf]
    %v3914 = vld [vmem:[#allocation2 + $0x338] sm:$0xf]
    %v3915 = vld [vmem:[#allocation2 + $0x33c] sm:$0xf]
    %v3916 = vld [vmem:[#allocation2 + $0x340] sm:$0xf]
    %v3917 = vld [vmem:[#allocation2 + $0x344] sm:$0xf]
    %v3926 = vunpack.c.l.b16 %v3910
    %v3927 = vunpack.c.l.b16 %v3911
    %v3928 = vunpack.c.l.b16 %v3912
    %v3929 = vunpack.c.l.b16 %v3913
    %v3930 = vunpack.c.l.b16 %v3914
    %v3931 = vunpack.c.l.b16 %v3915
    %v3932 = vunpack.c.l.b16 %v3916
    %v3933 = vunpack.c.l.b16 %v3917
    %v3934 = vpack.c.b16 %v3927, %v3926
    %v3935 = vpack.c.b16 %v3929, %v3928
    %v3936 = vpack.c.b16 %v3931, %v3930
    %v3937 = vpack.c.b16 %v3933, %v3932
    %v3943 = vsel %vm331, %v3734, 0
    %v3946 = vsel %vm331, %v3735, 0
    %3948 = vmatprep.subr.bf16.mxu0 0
    %3949 = vmatpush1.bf16.msra.mxu0 0
    %3950 = vmatprep.subr.bf16.mxu0 0
    %3951 = vmatpush1.bf16.msra.mxu0 0
    %3952 = vmatprep.subr.bf16.mxu0 0
    %3953 = vmatpush1.bf16.msra.mxu0 0
    %3954 = vmatprep.subr.bf16.mxu0 0
    %3955 = vmatpush1.bf16.msra.mxu0 0
    %3956 = vmatprep.subr.bf16.mxu0 0
    %3957 = vmatpush1.bf16.msra.mxu0 %v3937
    %3958 = vmatprep.subr.bf16.mxu0 0
    %3959 = vmatpush1.bf16.msra.mxu0 %v3936
    %3960 = vmatprep.subr.bf16.mxu0 0
    %3961 = vmatpush1.bf16.msra.mxu0 %v3935
    %3962 = vmatprep.subr.bf16.mxu0 0
    %3963 = vmatpush1.bf16.msra.mxu0 %v3934
    %3964 = vmatprep.subr.bf16.mxu0 0
    %3965 = vmatpush2.bf16.msra.mxu0 0
    %3966 = vmatprep.subr.bf16.mxu0 0
    %3967 = vmatpush2.bf16.msra.mxu0 0
    %3968 = vmatprep.subr.bf16.mxu0 0
    %3969 = vmatpush2.bf16.msra.mxu0 0
    %3970 = vmatprep.subr.bf16.mxu0 0
    %3971 = vmatpush2.bf16.msra.mxu0 0
    %3972 = vmatprep.subr.bf16.mxu0 0
    %3973 = vmatpush2.bf16.msra.mxu0 0
    %3974 = vmatprep.subr.bf16.mxu0 0
    %3975 = vmatpush2.bf16.msra.mxu0 0
    %3976 = vmatprep.subr.bf16.mxu0 0
    %3977 = vmatpush2.bf16.msra.mxu0 0
    %3978 = vmatprep.subr.bf16.mxu0 0
    %3979 = vmatpush2.bf16.msra.mxu0 0
    %3980 = vmatprep.mubr.bf16.mxu0 0
    %3981 = vmatmul.mubr.bf16.gmra.mxu0 %v3943
    %v3982 = vpop.f32.mrf.mxu0
    %v3983 = vadd.f32 0.0, %v3982
    %v3984 = vpop.f32.mrf.mxu0
    %v3985 = vpop.f32.mrf.mxu0
    %v3986 = vadd.f32 0.0, %v3985
    %v3987 = vpop.f32.mrf.mxu0
    %3988 = vmatprep.mubr.bf16.mxu0 0
    %3989 = vmatmul.mubr.bf16.gmra.mxu0 %v3946
    %v3990 = vpop.f32.mrf.mxu0
    %v3991 = vadd.f32 0.0, %v3990
    %v3992 = vpop.f32.mrf.mxu0
    %v3993 = vpop.f32.mrf.mxu0
    %v3994 = vadd.f32 0.0, %v3993
    %v3995 = vpop.f32.mrf.mxu0
    %3996 = vdwg.mxu0
    %v3997 = vadd.f32 %v3896, %v3983
    %v3998 = vadd.f32 %v3899, %v3986
    %v3999 = vadd.f32 %v3904, %v3991
    %v4000 = vadd.f32 %v3907, %v3994
    %v4001 = vld [vmem:[#allocation5 + $0x60] sm:$0x1]
    %v4002 = vlaneseq
    %v4003 = vshrl.u32 %v4002, 7
    %v4004 = vsub.s32 0, %v4003
    %v4005 = vrot.slane %v4001, %v4004
    %v4006 = vadd.f32 %v3997, %v4005
    %v4007 = vadd.f32 %v3998, %v4005
    %v4008 = vadd.f32 %v3999, %v4005
    %v4009 = vadd.f32 %v4000, %v4005
    %v4010 = vld [vmem:[#allocation2 + $0x348] sm:$0xf]
    %v4011 = vld [vmem:[#allocation2 + $0x34c] sm:$0xf]
    %v4012 = vld [vmem:[#allocation2 + $0x350] sm:$0xf]
    %v4013 = vld [vmem:[#allocation2 + $0x354] sm:$0xf]
    %v4014 = vld [vmem:[#allocation2 + $0x358] sm:$0xf]
    %v4015 = vld [vmem:[#allocation2 + $0x35c] sm:$0xf]
    %v4016 = vld [vmem:[#allocation2 + $0x360] sm:$0xf]
    %v4017 = vld [vmem:[#allocation2 + $0x364] sm:$0xf]
    %v4018 = vld [vmem:[#allocation2 + $0x368] sm:$0xf]
    %v4019 = vld [vmem:[#allocation2 + $0x36c] sm:$0xf]
    %v4020 = vld [vmem:[#allocation2 + $0x370] sm:$0xf]
    %v4021 = vld [vmem:[#allocation2 + $0x374] sm:$0xf]
    %v4022 = vld [vmem:[#allocation2 + $0x378] sm:$0xf]
    %v4023 = vld [vmem:[#allocation2 + $0x37c] sm:$0xf]
    %v4024 = vld [vmem:[#allocation2 + $0x380] sm:$0xf]
    %v4025 = vld [vmem:[#allocation2 + $0x384] sm:$0xf]
    %v4026 = vunpack.c.l.bf16 %v4010
    %v4027 = vunpack.c.l.bf16 %v4011
    %v4028 = vunpack.c.l.bf16 %v4012
    %v4029 = vunpack.c.l.bf16 %v4013
    %v4030 = vunpack.c.l.bf16 %v4014
    %v4031 = vunpack.c.l.bf16 %v4015
    %v4032 = vunpack.c.l.bf16 %v4016
    %v4033 = vunpack.c.l.bf16 %v4017
    %v4034 = vunpack.c.l.bf16 %v4018
    %v4035 = vunpack.c.l.bf16 %v4019
    %v4036 = vunpack.c.l.bf16 %v4020
    %v4037 = vunpack.c.l.bf16 %v4021
    %v4038 = vunpack.c.l.bf16 %v4022
    %v4039 = vunpack.c.l.bf16 %v4023
    %v4040 = vunpack.c.l.bf16 %v4024
    %v4041 = vunpack.c.l.bf16 %v4025
    %v4042 = vld [vmem:[#allocation2 + $0x388] sm:$0xf]
    %v4043 = vunpack.c.l.bf16 %v4042
    %v4044 = vld [vmem:[#allocation5 + $0x68] sm:$0x1]
    %v4045 = vadd.f32 %v4006, %v4007
    %v4046 = vadd.f32 %v4045, %v4008
    %v4047 = vadd.f32 %v4046, %v4009
    %v4048 = vrot.slane %v4047, 4
    %v4049 = vadd.f32 %v4047, %v4048
    %v4050 = vrot.slane %v4049, 2
    %v4051 = vadd.f32 %v4049, %v4050
    %v4052 = vrot.slane %v4051, 1
    %v4053 = vadd.f32 %v4051, %v4052
    %v4054 = vmul.f32 %v4006, %v4006
    %v4055 = vmul.f32 %v4007, %v4007
    %v4056 = vmul.f32 %v4008, %v4008
    %v4057 = vmul.f32 %v4009, %v4009
    %v4058 = vadd.f32 %v4054, %v4055
    %v4059 = vadd.f32 %v4058, %v4056
    %v4060 = vadd.f32 %v4059, %v4057
    %v4061 = vrot.slane %v4060, 4
    %v4062 = vadd.f32 %v4060, %v4061
    %v4063 = vrot.slane %v4062, 2
    %v4064 = vadd.f32 %v4062, %v4063
    %v4065 = vrot.slane %v4064, 1
    %v4066 = vadd.f32 %v4064, %v4065
    %4067 = vmatprep.subr.mxu0 0.0
    %4068 = vmatpush1.msra.mxu0 %v4041
    %4069 = vmatprep.subr.mxu0 0.0
    %4070 = vmatpush1.msra.mxu0 %v4040
    %4071 = vmatprep.subr.mxu0 0.0
    %4072 = vmatpush1.msra.mxu0 %v4039
    %4073 = vmatprep.subr.mxu0 0.0
    %4074 = vmatpush1.msra.mxu0 %v4038
    %4075 = vmatprep.subr.mxu0 0.0
    %4076 = vmatpush1.msra.mxu0 %v4037
    %4077 = vmatprep.subr.mxu0 0.0
    %4078 = vmatpush1.msra.mxu0 %v4036
    %4079 = vmatprep.subr.mxu0 0.0
    %4080 = vmatpush1.msra.mxu0 %v4035
    %4081 = vmatprep.subr.mxu0 0.0
    %4082 = vmatpush1.msra.mxu0 %v4034
    %4083 = vmatprep.subr.mxu0 0.0
    %4084 = vmatpush1.msra.mxu0 %v4033
    %4085 = vmatprep.subr.mxu0 0.0
    %4086 = vmatpush1.msra.mxu0 %v4032
    %4087 = vmatprep.subr.mxu0 0.0
    %4088 = vmatpush1.msra.mxu0 %v4031
    %4089 = vmatprep.subr.mxu0 0.0
    %4090 = vmatpush1.msra.mxu0 %v4030
    %4091 = vmatprep.subr.mxu0 0.0
    %4092 = vmatpush1.msra.mxu0 %v4029
    %4093 = vmatprep.subr.mxu0 0.0
    %4094 = vmatpush1.msra.mxu0 %v4028
    %4095 = vmatprep.subr.mxu0 0.0
    %4096 = vmatpush1.msra.mxu0 %v4027
    %4097 = vmatprep.subr.mxu0 0.0
    %4098 = vmatpush1.msra.mxu0 %v4026
    %4099 = vmatprep.subr.mxu0 0.0
    %4100 = vmatpush2.msra.mxu0 0.0
    %4101 = vmatprep.subr.mxu0 0.0
    %4102 = vmatpush2.msra.mxu0 0.0
    %4103 = vmatprep.subr.mxu0 0.0
    %4104 = vmatpush2.msra.mxu0 0.0
    %4105 = vmatprep.subr.mxu0 0.0
    %4106 = vmatpush2.msra.mxu0 0.0
    %4107 = vmatprep.subr.mxu0 0.0
    %4108 = vmatpush2.msra.mxu0 0.0
    %4109 = vmatprep.subr.mxu0 0.0
    %4110 = vmatpush2.msra.mxu0 0.0
    %4111 = vmatprep.subr.mxu0 0.0
    %4112 = vmatpush2.msra.mxu0 0.0
    %4113 = vmatprep.subr.mxu0 0.0
    %4114 = vmatpush2.msra.mxu0 0.0
    %4115 = vmatprep.subr.mxu0 0.0
    %4116 = vmatpush2.msra.mxu0 0.0
    %4117 = vmatprep.subr.mxu0 0.0
    %4118 = vmatpush2.msra.mxu0 0.0
    %4119 = vmatprep.subr.mxu0 0.0
    %4120 = vmatpush2.msra.mxu0 0.0
    %4121 = vmatprep.subr.mxu0 0.0
    %4122 = vmatpush2.msra.mxu0 0.0
    %4123 = vmatprep.subr.mxu0 0.0
    %4124 = vmatpush2.msra.mxu0 0.0
    %4125 = vmatprep.subr.mxu0 0.0
    %4126 = vmatpush2.msra.mxu0 0.0
    %4127 = vmatprep.subr.mxu0 0.0
    %4128 = vmatpush2.msra.mxu0 0.0
    %4129 = vmatprep.subr.mxu0 0.0
    %4130 = vmatpush2.msra.mxu0 0.0
    %4131 = vmatprep.mubr.f32.mxu0 0.0
    %4132 = vmatmul.mubr.f32.gmra.mxu0 %v4053
    %v4133 = vpop.f32.mrf.mxu0
    %v4134 = vadd.f32 0.0, %v4133
    %v4135 = vpop.f32.mrf.mxu0
    %4136 = vdwg.mxu0
    %v4137 = vrcp.pop 512.0
    %v4138 = vmul.f32 %v4134, %v4137
    %4139 = vmatprep.subr.mxu0 0.0
    %4140 = vmatpush1.msra.mxu0 %v4041
    %4141 = vmatprep.subr.mxu0 0.0
    %4142 = vmatpush1.msra.mxu0 %v4040
    %4143 = vmatprep.subr.mxu0 0.0
    %4144 = vmatpush1.msra.mxu0 %v4039
    %4145 = vmatprep.subr.mxu0 0.0
    %4146 = vmatpush1.msra.mxu0 %v4038
    %4147 = vmatprep.subr.mxu0 0.0
    %4148 = vmatpush1.msra.mxu0 %v4037
    %4149 = vmatprep.subr.mxu0 0.0
    %4150 = vmatpush1.msra.mxu0 %v4036
    %4151 = vmatprep.subr.mxu0 0.0
    %4152 = vmatpush1.msra.mxu0 %v4035
    %4153 = vmatprep.subr.mxu0 0.0
    %4154 = vmatpush1.msra.mxu0 %v4034
    %4155 = vmatprep.subr.mxu0 0.0
    %4156 = vmatpush1.msra.mxu0 %v4033
    %4157 = vmatprep.subr.mxu0 0.0
    %4158 = vmatpush1.msra.mxu0 %v4032
    %4159 = vmatprep.subr.mxu0 0.0
    %4160 = vmatpush1.msra.mxu0 %v4031
    %4161 = vmatprep.subr.mxu0 0.0
    %4162 = vmatpush1.msra.mxu0 %v4030
    %4163 = vmatprep.subr.mxu0 0.0
    %4164 = vmatpush1.msra.mxu0 %v4029
    %4165 = vmatprep.subr.mxu0 0.0
    %4166 = vmatpush1.msra.mxu0 %v4028
    %4167 = vmatprep.subr.mxu0 0.0
    %4168 = vmatpush1.msra.mxu0 %v4027
    %4169 = vmatprep.subr.mxu0 0.0
    %4170 = vmatpush1.msra.mxu0 %v4026
    %4171 = vmatprep.subr.mxu0 0.0
    %4172 = vmatpush2.msra.mxu0 0.0
    %4173 = vmatprep.subr.mxu0 0.0
    %4174 = vmatpush2.msra.mxu0 0.0
    %4175 = vmatprep.subr.mxu0 0.0
    %4176 = vmatpush2.msra.mxu0 0.0
    %4177 = vmatprep.subr.mxu0 0.0
    %4178 = vmatpush2.msra.mxu0 0.0
    %4179 = vmatprep.subr.mxu0 0.0
    %4180 = vmatpush2.msra.mxu0 0.0
    %4181 = vmatprep.subr.mxu0 0.0
    %4182 = vmatpush2.msra.mxu0 0.0
    %4183 = vmatprep.subr.mxu0 0.0
    %4184 = vmatpush2.msra.mxu0 0.0
    %4185 = vmatprep.subr.mxu0 0.0
    %4186 = vmatpush2.msra.mxu0 0.0
    %4187 = vmatprep.subr.mxu0 0.0
    %4188 = vmatpush2.msra.mxu0 0.0
    %4189 = vmatprep.subr.mxu0 0.0
    %4190 = vmatpush2.msra.mxu0 0.0
    %4191 = vmatprep.subr.mxu0 0.0
    %4192 = vmatpush2.msra.mxu0 0.0
    %4193 = vmatprep.subr.mxu0 0.0
    %4194 = vmatpush2.msra.mxu0 0.0
    %4195 = vmatprep.subr.mxu0 0.0
    %4196 = vmatpush2.msra.mxu0 0.0
    %4197 = vmatprep.subr.mxu0 0.0
    %4198 = vmatpush2.msra.mxu0 0.0
    %4199 = vmatprep.subr.mxu0 0.0
    %4200 = vmatpush2.msra.mxu0 0.0
    %4201 = vmatprep.subr.mxu0 0.0
    %4202 = vmatpush2.msra.mxu0 0.0
    %4203 = vmatprep.mubr.f32.mxu0 0.0
    %4204 = vmatmul.mubr.f32.gmra.mxu0 %v4066
    %v4205 = vpop.f32.mrf.mxu0
    %v4206 = vadd.f32 0.0, %v4205
    %v4207 = vpop.f32.mrf.mxu0
    %4208 = vdwg.mxu0
    %v4209 = vmul.f32 %v4206, %v4137
    %v4210 = vmul.f32 %v4138, %v4138
    %v4211 = vsub.f32 %v4209, %v4210
    %v4212 = vmax.f32 %v4211, 0.0
    %v4213 = vadd.f32 %v4212, 1e-05
    %v4214 = vrsqrt.pop %v4213
    %v4216 = vsel %vm506, %v4214, 0
    %4218 = vmatprep.subr.mxu0 0.0
    %4219 = vmatpush1.msra.mxu0 0.0
    %4220 = vmatprep.subr.mxu0 0.0
    %4221 = vmatpush1.msra.mxu0 0.0
    %4222 = vmatprep.subr.mxu0 0.0
    %4223 = vmatpush1.msra.mxu0 0.0
    %4224 = vmatprep.subr.mxu0 0.0
    %4225 = vmatpush1.msra.mxu0 0.0
    %4226 = vmatprep.subr.mxu0 0.0
    %4227 = vmatpush1.msra.mxu0 0.0
    %4228 = vmatprep.subr.mxu0 0.0
    %4229 = vmatpush1.msra.mxu0 0.0
    %4230 = vmatprep.subr.mxu0 0.0
    %4231 = vmatpush1.msra.mxu0 0.0
    %4232 = vmatprep.subr.mxu0 0.0
    %4233 = vmatpush1.msra.mxu0 0.0
    %4234 = vmatprep.subr.mxu0 0.0
    %4235 = vmatpush1.msra.mxu0 0.0
    %4236 = vmatprep.subr.mxu0 0.0
    %4237 = vmatpush1.msra.mxu0 0.0
    %4238 = vmatprep.subr.mxu0 0.0
    %4239 = vmatpush1.msra.mxu0 0.0
    %4240 = vmatprep.subr.mxu0 0.0
    %4241 = vmatpush1.msra.mxu0 0.0
    %4242 = vmatprep.subr.mxu0 0.0
    %4243 = vmatpush1.msra.mxu0 0.0
    %4244 = vmatprep.subr.mxu0 0.0
    %4245 = vmatpush1.msra.mxu0 0.0
    %4246 = vmatprep.subr.mxu0 0.0
    %4247 = vmatpush1.msra.mxu0 0.0
    %4248 = vmatprep.subr.mxu0 0.0
    %4249 = vmatpush1.msra.mxu0 %v4043
    %4250 = vmatprep.subr.mxu0 0.0
    %4251 = vmatpush2.msra.mxu0 0.0
    %4252 = vmatprep.subr.mxu0 0.0
    %4253 = vmatpush2.msra.mxu0 0.0
    %4254 = vmatprep.subr.mxu0 0.0
    %4255 = vmatpush2.msra.mxu0 0.0
    %4256 = vmatprep.subr.mxu0 0.0
    %4257 = vmatpush2.msra.mxu0 0.0
    %4258 = vmatprep.subr.mxu0 0.0
    %4259 = vmatpush2.msra.mxu0 0.0
    %4260 = vmatprep.subr.mxu0 0.0
    %4261 = vmatpush2.msra.mxu0 0.0
    %4262 = vmatprep.subr.mxu0 0.0
    %4263 = vmatpush2.msra.mxu0 0.0
    %4264 = vmatprep.subr.mxu0 0.0
    %4265 = vmatpush2.msra.mxu0 0.0
    %4266 = vmatprep.subr.mxu0 0.0
    %4267 = vmatpush2.msra.mxu0 0.0
    %4268 = vmatprep.subr.mxu0 0.0
    %4269 = vmatpush2.msra.mxu0 0.0
    %4270 = vmatprep.subr.mxu0 0.0
    %4271 = vmatpush2.msra.mxu0 0.0
    %4272 = vmatprep.subr.mxu0 0.0
    %4273 = vmatpush2.msra.mxu0 0.0
    %4274 = vmatprep.subr.mxu0 0.0
    %4275 = vmatpush2.msra.mxu0 0.0
    %4276 = vmatprep.subr.mxu0 0.0
    %4277 = vmatpush2.msra.mxu0 0.0
    %4278 = vmatprep.subr.mxu0 0.0
    %4279 = vmatpush2.msra.mxu0 0.0
    %4280 = vmatprep.subr.mxu0 0.0
    %4281 = vmatpush2.msra.mxu0 0.0
    %4282 = vmatprep.mubr.f32.mxu0 0.0
    %4283 = vmatmul.mubr.f32.gmra.mxu0 %v4216
    %v4284 = vpop.f32.mrf.mxu0
    %v4285 = vadd.f32 0.0, %v4284
    %v4286 = vpop.f32.mrf.mxu0
    %4287 = vdwg.mxu0
    %v4288 = vmul.f32 %v4138, %v4214
    %v4290 = vsel %vm506, %v4288, 0
    %4292 = vmatprep.subr.mxu0 0.0
    %4293 = vmatpush1.msra.mxu0 0.0
    %4294 = vmatprep.subr.mxu0 0.0
    %4295 = vmatpush1.msra.mxu0 0.0
    %4296 = vmatprep.subr.mxu0 0.0
    %4297 = vmatpush1.msra.mxu0 0.0
    %4298 = vmatprep.subr.mxu0 0.0
    %4299 = vmatpush1.msra.mxu0 0.0
    %4300 = vmatprep.subr.mxu0 0.0
    %4301 = vmatpush1.msra.mxu0 0.0
    %4302 = vmatprep.subr.mxu0 0.0
    %4303 = vmatpush1.msra.mxu0 0.0
    %4304 = vmatprep.subr.mxu0 0.0
    %4305 = vmatpush1.msra.mxu0 0.0
    %4306 = vmatprep.subr.mxu0 0.0
    %4307 = vmatpush1.msra.mxu0 0.0
    %4308 = vmatprep.subr.mxu0 0.0
    %4309 = vmatpush1.msra.mxu0 0.0
    %4310 = vmatprep.subr.mxu0 0.0
    %4311 = vmatpush1.msra.mxu0 0.0
    %4312 = vmatprep.subr.mxu0 0.0
    %4313 = vmatpush1.msra.mxu0 0.0
    %4314 = vmatprep.subr.mxu0 0.0
    %4315 = vmatpush1.msra.mxu0 0.0
    %4316 = vmatprep.subr.mxu0 0.0
    %4317 = vmatpush1.msra.mxu0 0.0
    %4318 = vmatprep.subr.mxu0 0.0
    %4319 = vmatpush1.msra.mxu0 0.0
    %4320 = vmatprep.subr.mxu0 0.0
    %4321 = vmatpush1.msra.mxu0 0.0
    %4322 = vmatprep.subr.mxu0 0.0
    %4323 = vmatpush1.msra.mxu0 %v4043
    %4324 = vmatprep.subr.mxu0 0.0
    %4325 = vmatpush2.msra.mxu0 0.0
    %4326 = vmatprep.subr.mxu0 0.0
    %4327 = vmatpush2.msra.mxu0 0.0
    %4328 = vmatprep.subr.mxu0 0.0
    %4329 = vmatpush2.msra.mxu0 0.0
    %4330 = vmatprep.subr.mxu0 0.0
    %4331 = vmatpush2.msra.mxu0 0.0
    %4332 = vmatprep.subr.mxu0 0.0
    %4333 = vmatpush2.msra.mxu0 0.0
    %4334 = vmatprep.subr.mxu0 0.0
    %4335 = vmatpush2.msra.mxu0 0.0
    %4336 = vmatprep.subr.mxu0 0.0
    %4337 = vmatpush2.msra.mxu0 0.0
    %4338 = vmatprep.subr.mxu0 0.0
    %4339 = vmatpush2.msra.mxu0 0.0
    %4340 = vmatprep.subr.mxu0 0.0
    %4341 = vmatpush2.msra.mxu0 0.0
    %4342 = vmatprep.subr.mxu0 0.0
    %4343 = vmatpush2.msra.mxu0 0.0
    %4344 = vmatprep.subr.mxu0 0.0
    %4345 = vmatpush2.msra.mxu0 0.0
    %4346 = vmatprep.subr.mxu0 0.0
    %4347 = vmatpush2.msra.mxu0 0.0
    %4348 = vmatprep.subr.mxu0 0.0
    %4349 = vmatpush2.msra.mxu0 0.0
    %4350 = vmatprep.subr.mxu0 0.0
    %4351 = vmatpush2.msra.mxu0 0.0
    %4352 = vmatprep.subr.mxu0 0.0
    %4353 = vmatpush2.msra.mxu0 0.0
    %4354 = vmatprep.subr.mxu0 0.0
    %4355 = vmatpush2.msra.mxu0 0.0
    %4356 = vmatprep.mubr.f32.mxu0 0.0
    %4357 = vmatmul.mubr.f32.gmra.mxu0 %v4290
    %v4358 = vpop.f32.mrf.mxu0
    %v4359 = vadd.f32 0.0, %v4358
    %v4360 = vpop.f32.mrf.mxu0
    %4361 = vdwg.mxu0
    %v4362 = vsub.f32 %v4044, %v4359
    %v4363 = vlaneseq
    %v4364 = vshrl.u32 %v4363, 7
    %v4365 = vsub.s32 0, %v4364
    %v4366 = vrot.slane %v4285, %v4365
    %v4367 = vmul.f32 %v4006, %v4366
    %v4368 = vmul.f32 %v4007, %v4366
    %v4369 = vmul.f32 %v4008, %v4366
    %v4370 = vmul.f32 %v4009, %v4366
    %v4371 = vlaneseq
    %v4372 = vshrl.u32 %v4371, 7
    %v4373 = vsub.s32 0, %v4372
    %v4374 = vrot.slane %v4362, %v4373
    %v4375 = vadd.f32 %v4367, %v4374
    %v4376 = vadd.f32 %v4368, %v4374
    %v4377 = vadd.f32 %v4369, %v4374
    %v4378 = vadd.f32 %v4370, %v4374
    %v4379 = vmul.f32 %v4375, 0.01
    %v4380 = vmul.f32 %v4376, 0.01
    %v4381 = vmul.f32 %v4377, 0.01
    %v4382 = vmul.f32 %v4378, 0.01
    %v4383 = vmax.f32 %v4375, %v4379
    %v4384 = vmax.f32 %v4376, %v4380
    %v4385 = vmax.f32 %v4377, %v4381
    %v4386 = vmax.f32 %v4378, %v4382
    %v4387 = vpack.c.bf16 %v4384, %v4383
    %v4388 = vpack.c.bf16 %v4386, %v4385
    %v4389 = vld [vmem:[#allocation2 + $0x390] sm:$0xf]
    %v4390 = vld [vmem:[#allocation2 + $0x394] sm:$0xf]
    %v4391 = vld [vmem:[#allocation2 + $0x398] sm:$0xf]
    %v4392 = vld [vmem:[#allocation2 + $0x39c] sm:$0xf]
    %v4393 = vld [vmem:[#allocation2 + $0x3a0] sm:$0xf]
    %v4394 = vld [vmem:[#allocation2 + $0x3a4] sm:$0xf]
    %v4395 = vld [vmem:[#allocation2 + $0x3a8] sm:$0xf]
    %v4396 = vld [vmem:[#allocation2 + $0x3ac] sm:$0xf]
    %v4397 = vld [vmem:[#allocation2 + $0x3b0] sm:$0xf]
    %v4398 = vld [vmem:[#allocation2 + $0x3b4] sm:$0xf]
    %v4399 = vld [vmem:[#allocation2 + $0x3b8] sm:$0xf]
    %v4400 = vld [vmem:[#allocation2 + $0x3bc] sm:$0xf]
    %v4413 = vunpack.c.l.b16 %v4389
    %v4414 = vunpack.c.l.b16 %v4390
    %v4415 = vunpack.c.l.b16 %v4391
    %v4416 = vunpack.c.l.b16 %v4392
    %v4417 = vunpack.c.l.b16 %v4393
    %v4418 = vunpack.c.l.b16 %v4394
    %v4419 = vunpack.c.l.b16 %v4395
    %v4420 = vunpack.c.l.b16 %v4396
    %v4421 = vunpack.c.l.b16 %v4397
    %v4422 = vunpack.c.l.b16 %v4398
    %v4423 = vunpack.c.l.b16 %v4399
    %v4424 = vunpack.c.l.b16 %v4400
    %v4425 = vpack.c.b16 %v4414, %v4413
    %v4426 = vpack.c.b16 %v4416, %v4415
    %v4427 = vpack.c.b16 %v4418, %v4417
    %v4428 = vpack.c.b16 %v4420, %v4419
    %v4429 = vpack.c.b16 %v4422, %v4421
    %v4430 = vpack.c.b16 %v4424, %v4423
    %v4432 = vsel %vm76, %v4425, 0
    %v4435 = vsel %vm76, %v4426, 0
    %v4438 = vsel %vm76, %v4427, 0
    %v4441 = vsel %vm76, %v4428, 0
    %v4444 = vsel %vm76, %v4429, 0
    %v4447 = vsel %vm76, %v4430, 0
    %4449 = vmatprep.subr.bf16.mxu0 0
    %4450 = vmatpush1.bf16.msra.mxu0 0
    %4451 = vmatprep.subr.bf16.mxu0 0
    %4452 = vmatpush1.bf16.msra.mxu0 0
    %4453 = vmatprep.subr.bf16.mxu0 0
    %4454 = vmatpush1.bf16.msra.mxu0 0
    %4455 = vmatprep.subr.bf16.mxu0 0
    %4456 = vmatpush1.bf16.msra.mxu0 0
    %4457 = vmatprep.subr.bf16.mxu0 0
    %4458 = vmatpush1.bf16.msra.mxu0 0
    %4459 = vmatprep.subr.bf16.mxu0 0
    %4460 = vmatpush1.bf16.msra.mxu0 0
    %4461 = vmatprep.subr.bf16.mxu0 0
    %4462 = vmatpush1.bf16.msra.mxu0 %v4388
    %4463 = vmatprep.subr.bf16.mxu0 0
    %4464 = vmatpush1.bf16.msra.mxu0 %v4387
    %4465 = vmatprep.subr.bf16.mxu0 0
    %4466 = vmatpush2.bf16.msra.mxu0 0
    %4467 = vmatprep.subr.bf16.mxu0 0
    %4468 = vmatpush2.bf16.msra.mxu0 0
    %4469 = vmatprep.subr.bf16.mxu0 0
    %4470 = vmatpush2.bf16.msra.mxu0 0
    %4471 = vmatprep.subr.bf16.mxu0 0
    %4472 = vmatpush2.bf16.msra.mxu0 0
    %4473 = vmatprep.subr.bf16.mxu0 0
    %4474 = vmatpush2.bf16.msra.mxu0 0
    %4475 = vmatprep.subr.bf16.mxu0 0
    %4476 = vmatpush2.bf16.msra.mxu0 0
    %4477 = vmatprep.subr.bf16.mxu0 0
    %4478 = vmatpush2.bf16.msra.mxu0 0
    %4479 = vmatprep.subr.bf16.mxu0 0
    %4480 = vmatpush2.bf16.msra.mxu0 0
    %4481 = vmatprep.mubr.bf16.mxu0 0
    %4482 = vmatmul.mubr.bf16.gmra.mxu0 %v4432
    %v4483 = vpop.f32.mrf.mxu0
    %v4484 = vadd.f32 0.0, %v4483
    %v4485 = vpop.f32.mrf.mxu0
    %v4486 = vpop.f32.mrf.mxu0
    %v4487 = vadd.f32 0.0, %v4486
    %v4488 = vpop.f32.mrf.mxu0
    %4489 = vmatprep.mubr.bf16.mxu0 0
    %4490 = vmatmul.mubr.bf16.gmra.mxu0 %v4435
    %v4491 = vpop.f32.mrf.mxu0
    %v4492 = vadd.f32 0.0, %v4491
    %v4493 = vpop.f32.mrf.mxu0
    %v4494 = vpop.f32.mrf.mxu0
    %v4495 = vadd.f32 0.0, %v4494
    %v4496 = vpop.f32.mrf.mxu0
    %4497 = vmatprep.mubr.bf16.mxu0 0
    %4498 = vmatmul.mubr.bf16.gmra.mxu0 %v4438
    %v4499 = vpop.f32.mrf.mxu0
    %v4500 = vadd.f32 0.0, %v4499
    %v4501 = vpop.f32.mrf.mxu0
    %v4502 = vpop.f32.mrf.mxu0
    %v4503 = vadd.f32 0.0, %v4502
    %v4504 = vpop.f32.mrf.mxu0
    %4505 = vmatprep.mubr.bf16.mxu0 0
    %4506 = vmatmul.mubr.bf16.gmra.mxu0 %v4441
    %v4507 = vpop.f32.mrf.mxu0
    %v4508 = vadd.f32 0.0, %v4507
    %v4509 = vpop.f32.mrf.mxu0
    %v4510 = vpop.f32.mrf.mxu0
    %v4511 = vadd.f32 0.0, %v4510
    %v4512 = vpop.f32.mrf.mxu0
    %4513 = vmatprep.mubr.bf16.mxu0 0
    %4514 = vmatmul.mubr.bf16.gmra.mxu0 %v4444
    %v4515 = vpop.f32.mrf.mxu0
    %v4516 = vadd.f32 0.0, %v4515
    %v4517 = vpop.f32.mrf.mxu0
    %v4518 = vpop.f32.mrf.mxu0
    %v4519 = vadd.f32 0.0, %v4518
    %v4520 = vpop.f32.mrf.mxu0
    %4521 = vmatprep.mubr.bf16.mxu0 0
    %4522 = vmatmul.mubr.bf16.gmra.mxu0 %v4447
    %v4523 = vpop.f32.mrf.mxu0
    %v4524 = vadd.f32 0.0, %v4523
    %v4525 = vpop.f32.mrf.mxu0
    %v4526 = vpop.f32.mrf.mxu0
    %v4527 = vadd.f32 0.0, %v4526
    %v4528 = vpop.f32.mrf.mxu0
    %4529 = vdwg.mxu0
    %v4530 = vpack.c.bf16 %v4487, %v4484
    %v4531 = vpack.c.bf16 %v4495, %v4492
    %v4532 = vpack.c.bf16 %v4503, %v4500
    %v4533 = vpack.c.bf16 %v4511, %v4508
    %v4534 = vpack.c.bf16 %v4519, %v4516
    %v4535 = vpack.c.bf16 %v4527, %v4524
    %v4536 = vld [vmem:[#allocation2 + $0x3c0] sm:$0xf]
    %v4537 = vld [vmem:[#allocation2 + $0x3c4] sm:$0xf]
    %v4538 = vld [vmem:[#allocation2 + $0x3c8] sm:$0xf]
    %v4539 = vld [vmem:[#allocation2 + $0x3cc] sm:$0xf]
    %v4540 = vld [vmem:[#allocation2 + $0x3d0] sm:$0xf]
    %v4541 = vld [vmem:[#allocation2 + $0x3d4] sm:$0xf]
    %v4542 = vld [vmem:[#allocation2 + $0x3d8] sm:$0xf]
    %v4543 = vld [vmem:[#allocation2 + $0x3dc] sm:$0xf]
    %v4544 = vld [vmem:[#allocation2 + $0x3e0] sm:$0xf]
    %v4545 = vld [vmem:[#allocation2 + $0x3e4] sm:$0xf]
    %v4546 = vld [vmem:[#allocation2 + $0x3e8] sm:$0xf]
    %v4547 = vld [vmem:[#allocation2 + $0x3ec] sm:$0xf]
    %v4548 = vld [vmem:[#allocation2 + $0x3f0] sm:$0xf]
    %v4549 = vld [vmem:[#allocation2 + $0x3f4] sm:$0xf]
    %v4550 = vld [vmem:[#allocation2 + $0x3f8] sm:$0xf]
    %v4551 = vld [vmem:[#allocation2 + $0x3fc] sm:$0xf]
    %v4552 = vld [vmem:[#allocation2 + $0x400] sm:$0xf]
    %v4553 = vld [vmem:[#allocation2 + $0x404] sm:$0xf]
    %v4554 = vld [vmem:[#allocation2 + $0x408] sm:$0xf]
    %v4555 = vld [vmem:[#allocation2 + $0x40c] sm:$0xf]
    %v4556 = vld [vmem:[#allocation2 + $0x410] sm:$0xf]
    %v4557 = vld [vmem:[#allocation2 + $0x414] sm:$0xf]
    %v4558 = vld [vmem:[#allocation2 + $0x418] sm:$0xf]
    %v4559 = vld [vmem:[#allocation2 + $0x41c] sm:$0xf]
    %v4560 = vld [vmem:[#allocation2 + $0x420] sm:$0xf]
    %v4561 = vld [vmem:[#allocation2 + $0x424] sm:$0xf]
    %v4562 = vld [vmem:[#allocation2 + $0x428] sm:$0xf]
    %v4563 = vld [vmem:[#allocation2 + $0x42c] sm:$0xf]
    %v4564 = vld [vmem:[#allocation2 + $0x430] sm:$0xf]
    %v4565 = vld [vmem:[#allocation2 + $0x434] sm:$0xf]
    %v4566 = vld [vmem:[#allocation2 + $0x438] sm:$0xf]
    %v4567 = vld [vmem:[#allocation2 + $0x43c] sm:$0xf]
    %v4584 = vunpack.c.l.b16 %v4552
    %v4585 = vunpack.c.l.b16 %v4553
    %v4586 = vunpack.c.l.b16 %v4554
    %v4587 = vunpack.c.l.b16 %v4555
    %v4588 = vunpack.c.l.b16 %v4556
    %v4589 = vunpack.c.l.b16 %v4557
    %v4590 = vunpack.c.l.b16 %v4558
    %v4591 = vunpack.c.l.b16 %v4559
    %v4592 = vunpack.c.l.b16 %v4560
    %v4593 = vunpack.c.l.b16 %v4561
    %v4594 = vunpack.c.l.b16 %v4562
    %v4595 = vunpack.c.l.b16 %v4563
    %v4596 = vunpack.c.l.b16 %v4564
    %v4597 = vunpack.c.l.b16 %v4565
    %v4598 = vunpack.c.l.b16 %v4566
    %v4599 = vunpack.c.l.b16 %v4567
    %v4600 = vpack.c.b16 %v4585, %v4584
    %v4601 = vpack.c.b16 %v4587, %v4586
    %v4602 = vpack.c.b16 %v4589, %v4588
    %v4603 = vpack.c.b16 %v4591, %v4590
    %v4604 = vpack.c.b16 %v4593, %v4592
    %v4605 = vpack.c.b16 %v4595, %v4594
    %v4606 = vpack.c.b16 %v4597, %v4596
    %v4607 = vpack.c.b16 %v4599, %v4598
    %4616 = vmatprep.subr.bf16.mxu0 0
    %4617 = vmatpush1.bf16.msra.mxu0 %v4607
    %4618 = vmatprep.subr.bf16.mxu0 0
    %4619 = vmatpush1.bf16.msra.mxu0 %v4606
    %4620 = vmatprep.subr.bf16.mxu0 0
    %4621 = vmatpush1.bf16.msra.mxu0 %v4605
    %4622 = vmatprep.subr.bf16.mxu0 0
    %4623 = vmatpush1.bf16.msra.mxu0 %v4604
    %4624 = vmatprep.subr.bf16.mxu0 0
    %4625 = vmatpush1.bf16.msra.mxu0 %v4603
    %4626 = vmatprep.subr.bf16.mxu0 0
    %4627 = vmatpush1.bf16.msra.mxu0 %v4602
    %4628 = vmatprep.subr.bf16.mxu0 0
    %4629 = vmatpush1.bf16.msra.mxu0 %v4601
    %4630 = vmatprep.subr.bf16.mxu0 0
    %4631 = vmatpush1.bf16.msra.mxu0 %v4600
    %4632 = vmatprep.subr.bf16.mxu0 0
    %4633 = vmatpush2.bf16.msra.mxu0 0
    %4634 = vmatprep.subr.bf16.mxu0 0
    %4635 = vmatpush2.bf16.msra.mxu0 0
    %4636 = vmatprep.subr.bf16.mxu0 0
    %4637 = vmatpush2.bf16.msra.mxu0 0
    %4638 = vmatprep.subr.bf16.mxu0 0
    %4639 = vmatpush2.bf16.msra.mxu0 0
    %4640 = vmatprep.subr.bf16.mxu0 0
    %4641 = vmatpush2.bf16.msra.mxu0 0
    %4642 = vmatprep.subr.bf16.mxu0 0
    %4643 = vmatpush2.bf16.msra.mxu0 0
    %4644 = vmatprep.subr.bf16.mxu0 0
    %4645 = vmatpush2.bf16.msra.mxu0 0
    %4646 = vmatprep.subr.bf16.mxu0 0
    %4647 = vmatpush2.bf16.msra.mxu0 0
    %4648 = vmatprep.mubr.bf16.mxu0 0
    %4649 = vmatmul.mubr.bf16.gmra.mxu0 %v4532
    %v4650 = vpop.f32.mrf.mxu0
    %v4651 = vadd.f32 0.0, %v4650
    %v4652 = vpop.f32.mrf.mxu0
    %v4653 = vpop.f32.mrf.mxu0
    %v4654 = vadd.f32 0.0, %v4653
    %v4655 = vpop.f32.mrf.mxu0
    %4656 = vmatprep.mubr.bf16.mxu0 0
    %4657 = vmatmul.mubr.bf16.gmra.mxu0 %v4533
    %v4658 = vpop.f32.mrf.mxu0
    %v4659 = vadd.f32 0.0, %v4658
    %v4660 = vpop.f32.mrf.mxu0
    %v4661 = vpop.f32.mrf.mxu0
    %v4662 = vadd.f32 0.0, %v4661
    %v4663 = vpop.f32.mrf.mxu0
    %4664 = vdwg.mxu0
    %v4681 = vunpack.c.l.b16 %v4536
    %v4682 = vunpack.c.l.b16 %v4537
    %v4683 = vunpack.c.l.b16 %v4538
    %v4684 = vunpack.c.l.b16 %v4539
    %v4685 = vunpack.c.l.b16 %v4540
    %v4686 = vunpack.c.l.b16 %v4541
    %v4687 = vunpack.c.l.b16 %v4542
    %v4688 = vunpack.c.l.b16 %v4543
    %v4689 = vunpack.c.l.b16 %v4544
    %v4690 = vunpack.c.l.b16 %v4545
    %v4691 = vunpack.c.l.b16 %v4546
    %v4692 = vunpack.c.l.b16 %v4547
    %v4693 = vunpack.c.l.b16 %v4548
    %v4694 = vunpack.c.l.b16 %v4549
    %v4695 = vunpack.c.l.b16 %v4550
    %v4696 = vunpack.c.l.b16 %v4551
    %v4697 = vpack.c.b16 %v4682, %v4681
    %v4698 = vpack.c.b16 %v4684, %v4683
    %v4699 = vpack.c.b16 %v4686, %v4685
    %v4700 = vpack.c.b16 %v4688, %v4687
    %v4701 = vpack.c.b16 %v4690, %v4689
    %v4702 = vpack.c.b16 %v4692, %v4691
    %v4703 = vpack.c.b16 %v4694, %v4693
    %v4704 = vpack.c.b16 %v4696, %v4695
    %4713 = vmatprep.subr.bf16.mxu0 0
    %4714 = vmatpush1.bf16.msra.mxu0 %v4704
    %4715 = vmatprep.subr.bf16.mxu0 0
    %4716 = vmatpush1.bf16.msra.mxu0 %v4703
    %4717 = vmatprep.subr.bf16.mxu0 0
    %4718 = vmatpush1.bf16.msra.mxu0 %v4702
    %4719 = vmatprep.subr.bf16.mxu0 0
    %4720 = vmatpush1.bf16.msra.mxu0 %v4701
    %4721 = vmatprep.subr.bf16.mxu0 0
    %4722 = vmatpush1.bf16.msra.mxu0 %v4700
    %4723 = vmatprep.subr.bf16.mxu0 0
    %4724 = vmatpush1.bf16.msra.mxu0 %v4699
    %4725 = vmatprep.subr.bf16.mxu0 0
    %4726 = vmatpush1.bf16.msra.mxu0 %v4698
    %4727 = vmatprep.subr.bf16.mxu0 0
    %4728 = vmatpush1.bf16.msra.mxu0 %v4697
    %4729 = vmatprep.subr.bf16.mxu0 0
    %4730 = vmatpush2.bf16.msra.mxu0 0
    %4731 = vmatprep.subr.bf16.mxu0 0
    %4732 = vmatpush2.bf16.msra.mxu0 0
    %4733 = vmatprep.subr.bf16.mxu0 0
    %4734 = vmatpush2.bf16.msra.mxu0 0
    %4735 = vmatprep.subr.bf16.mxu0 0
    %4736 = vmatpush2.bf16.msra.mxu0 0
    %4737 = vmatprep.subr.bf16.mxu0 0
    %4738 = vmatpush2.bf16.msra.mxu0 0
    %4739 = vmatprep.subr.bf16.mxu0 0
    %4740 = vmatpush2.bf16.msra.mxu0 0
    %4741 = vmatprep.subr.bf16.mxu0 0
    %4742 = vmatpush2.bf16.msra.mxu0 0
    %4743 = vmatprep.subr.bf16.mxu0 0
    %4744 = vmatpush2.bf16.msra.mxu0 0
    %4745 = vmatprep.mubr.bf16.mxu0 0
    %4746 = vmatmul.mubr.bf16.gmra.mxu0 %v4530
    %v4747 = vpop.f32.mrf.mxu0
    %v4748 = vadd.f32 %v4651, %v4747
    %v4749 = vpop.f32.mrf.mxu0
    %v4750 = vpop.f32.mrf.mxu0
    %v4751 = vadd.f32 %v4654, %v4750
    %v4752 = vpop.f32.mrf.mxu0
    %4753 = vmatprep.mubr.bf16.mxu0 0
    %4754 = vmatmul.mubr.bf16.gmra.mxu0 %v4531
    %v4755 = vpop.f32.mrf.mxu0
    %v4756 = vadd.f32 %v4659, %v4755
    %v4757 = vpop.f32.mrf.mxu0
    %v4758 = vpop.f32.mrf.mxu0
    %v4759 = vadd.f32 %v4662, %v4758
    %v4760 = vpop.f32.mrf.mxu0
    %4761 = vdwg.mxu0
    %v4762 = vld [vmem:[#allocation2 + $0x440] sm:$0xf]
    %v4763 = vld [vmem:[#allocation2 + $0x444] sm:$0xf]
    %v4764 = vld [vmem:[#allocation2 + $0x448] sm:$0xf]
    %v4765 = vld [vmem:[#allocation2 + $0x44c] sm:$0xf]
    %v4766 = vld [vmem:[#allocation2 + $0x450] sm:$0xf]
    %v4767 = vld [vmem:[#allocation2 + $0x454] sm:$0xf]
    %v4768 = vld [vmem:[#allocation2 + $0x458] sm:$0xf]
    %v4769 = vld [vmem:[#allocation2 + $0x45c] sm:$0xf]
    %v4770 = vld [vmem:[#allocation2 + $0x460] sm:$0xf]
    %v4771 = vld [vmem:[#allocation2 + $0x464] sm:$0xf]
    %v4772 = vld [vmem:[#allocation2 + $0x468] sm:$0xf]
    %v4773 = vld [vmem:[#allocation2 + $0x46c] sm:$0xf]
    %v4774 = vld [vmem:[#allocation2 + $0x470] sm:$0xf]
    %v4775 = vld [vmem:[#allocation2 + $0x474] sm:$0xf]
    %v4776 = vld [vmem:[#allocation2 + $0x478] sm:$0xf]
    %v4777 = vld [vmem:[#allocation2 + $0x47c] sm:$0xf]
    %v4794 = vunpack.c.l.b16 %v4762
    %v4795 = vunpack.c.l.b16 %v4763
    %v4796 = vunpack.c.l.b16 %v4764
    %v4797 = vunpack.c.l.b16 %v4765
    %v4798 = vunpack.c.l.b16 %v4766
    %v4799 = vunpack.c.l.b16 %v4767
    %v4800 = vunpack.c.l.b16 %v4768
    %v4801 = vunpack.c.l.b16 %v4769
    %v4802 = vunpack.c.l.b16 %v4770
    %v4803 = vunpack.c.l.b16 %v4771
    %v4804 = vunpack.c.l.b16 %v4772
    %v4805 = vunpack.c.l.b16 %v4773
    %v4806 = vunpack.c.l.b16 %v4774
    %v4807 = vunpack.c.l.b16 %v4775
    %v4808 = vunpack.c.l.b16 %v4776
    %v4809 = vunpack.c.l.b16 %v4777
    %v4810 = vpack.c.b16 %v4795, %v4794
    %v4811 = vpack.c.b16 %v4797, %v4796
    %v4812 = vpack.c.b16 %v4799, %v4798
    %v4813 = vpack.c.b16 %v4801, %v4800
    %v4814 = vpack.c.b16 %v4803, %v4802
    %v4815 = vpack.c.b16 %v4805, %v4804
    %v4816 = vpack.c.b16 %v4807, %v4806
    %v4817 = vpack.c.b16 %v4809, %v4808
    %4826 = vmatprep.subr.bf16.mxu0 0
    %4827 = vmatpush1.bf16.msra.mxu0 %v4817
    %4828 = vmatprep.subr.bf16.mxu0 0
    %4829 = vmatpush1.bf16.msra.mxu0 %v4816
    %4830 = vmatprep.subr.bf16.mxu0 0
    %4831 = vmatpush1.bf16.msra.mxu0 %v4815
    %4832 = vmatprep.subr.bf16.mxu0 0
    %4833 = vmatpush1.bf16.msra.mxu0 %v4814
    %4834 = vmatprep.subr.bf16.mxu0 0
    %4835 = vmatpush1.bf16.msra.mxu0 %v4813
    %4836 = vmatprep.subr.bf16.mxu0 0
    %4837 = vmatpush1.bf16.msra.mxu0 %v4812
    %4838 = vmatprep.subr.bf16.mxu0 0
    %4839 = vmatpush1.bf16.msra.mxu0 %v4811
    %4840 = vmatprep.subr.bf16.mxu0 0
    %4841 = vmatpush1.bf16.msra.mxu0 %v4810
    %4842 = vmatprep.subr.bf16.mxu0 0
    %4843 = vmatpush2.bf16.msra.mxu0 0
    %4844 = vmatprep.subr.bf16.mxu0 0
    %4845 = vmatpush2.bf16.msra.mxu0 0
    %4846 = vmatprep.subr.bf16.mxu0 0
    %4847 = vmatpush2.bf16.msra.mxu0 0
    %4848 = vmatprep.subr.bf16.mxu0 0
    %4849 = vmatpush2.bf16.msra.mxu0 0
    %4850 = vmatprep.subr.bf16.mxu0 0
    %4851 = vmatpush2.bf16.msra.mxu0 0
    %4852 = vmatprep.subr.bf16.mxu0 0
    %4853 = vmatpush2.bf16.msra.mxu0 0
    %4854 = vmatprep.subr.bf16.mxu0 0
    %4855 = vmatpush2.bf16.msra.mxu0 0
    %4856 = vmatprep.subr.bf16.mxu0 0
    %4857 = vmatpush2.bf16.msra.mxu0 0
    %4858 = vmatprep.mubr.bf16.mxu0 0
    %4859 = vmatmul.mubr.bf16.gmra.mxu0 %v4534
    %v4860 = vpop.f32.mrf.mxu0
    %v4861 = vadd.f32 0.0, %v4860
    %v4862 = vpop.f32.mrf.mxu0
    %v4863 = vpop.f32.mrf.mxu0
    %v4864 = vadd.f32 0.0, %v4863
    %v4865 = vpop.f32.mrf.mxu0
    %4866 = vmatprep.mubr.bf16.mxu0 0
    %4867 = vmatmul.mubr.bf16.gmra.mxu0 %v4535
    %v4868 = vpop.f32.mrf.mxu0
    %v4869 = vadd.f32 0.0, %v4868
    %v4870 = vpop.f32.mrf.mxu0
    %v4871 = vpop.f32.mrf.mxu0
    %v4872 = vadd.f32 0.0, %v4871
    %v4873 = vpop.f32.mrf.mxu0
    %4874 = vdwg.mxu0
    %v4875 = vadd.f32 %v4748, %v4861
    %v4876 = vadd.f32 %v4751, %v4864
    %v4877 = vadd.f32 %v4756, %v4869
    %v4878 = vadd.f32 %v4759, %v4872
    %v4879 = vld [vmem:[#allocation5 + $0x70] sm:$0x1]
    %v4880 = vlaneseq
    %v4881 = vshrl.u32 %v4880, 7
    %v4882 = vsub.s32 0, %v4881
    %v4883 = vrot.slane %v4879, %v4882
    %v4884 = vadd.f32 %v4875, %v4883
    %v4885 = vadd.f32 %v4876, %v4883
    %v4886 = vadd.f32 %v4877, %v4883
    %v4887 = vadd.f32 %v4878, %v4883
    %v4888 = vtanh.pop %v4884
    %v4889 = vtanh.pop %v4885
    %v4890 = vtanh.pop %v4886
    %v4891 = vtanh.pop %v4887
    %4892 = vst [vmem:[#allocation7] sm:$0xff] %v4888
    %4893 = vst [vmem:[#allocation7 + $0x8] sm:$0xff] %v4889
    %4894 = vst [vmem:[#allocation7 + $0x10] sm:$0xff] %v4890
    %4895 = vst [vmem:[#allocation7 + $0x18] sm:$0xff] %v4891
    // Predicated region
    $region26: #{vae_forward.1} parent=1 // pred_check
      _
    $region27: #{vae_forward.1} parent=1 // pred_check_branch
      %4897 = sbr.rel (0) target = $region29
    $region28: #{vae_forward.1} parent=1 // pred_region
      _
    $region29: #{vae_forward.1} parent=1 // pred_fallthru
      _
    // Predicated region
    $region30: #{vae_forward.1} parent=1 // pred_check
      _
    $region31: #{vae_forward.1} parent=1 // pred_check_branch
      %4899 = sbr.rel (0) target = $region33
    $region32: #{vae_forward.1} parent=1 // pred_region
      %s4901 = ssub.s32 512, 512
      %4902 = vsyncadd [#allocation4], %s4901
      %s4903 = sshll.u32 [#allocation7], 4
      %s4904 = int_to_ptr.vmem [resolvable:$true] %s4903
      %4909 = dma.vmem_to_hbm [thread:$0]  %s4904, 512, %s5, [#allocation4], 128, 128, 8
    $region33: #{vae_forward.1} parent=1 // pred_fallthru
      _
    // Predicated region
    $region34: #{vae_forward.1} parent=1 // pred_check
      _
    $region35: #{vae_forward.1} parent=1 // pred_check_branch
      %4911 = sbr.rel (0) target = $region37
    $region36: #{vae_forward.1} parent=1 // pred_region
      _
    $region37: #{vae_forward.1} parent=1 // pred_fallthru
      _
    // Predicated region
    $region38: #{vae_forward.1} parent=1 // pred_check
      _
    $region39: #{vae_forward.1} parent=1 // pred_check_branch
      %4913 = sbr.rel (0) target = $region41
    $region40: #{vae_forward.1} parent=1 // pred_region
      %4914 = dma.done [#allocation4], 512
    $region41: #{vae_forward.1} parent=1 // pred_fallthru
      _
    %4915 = vsyncpa [#allocation3], 1
    %4916 = vsyncpa [#allocation6], 1
    %4917 = vsyncpa [#allocation4], 1

</llo_original>
